<compile_context>
chip_gen: v5e
topology: v5e:2x2
jax: 0.10.0
libtpu: 0.0.40
codegen_flags: <defaults>
</compile_context>

<pallas_src>
import jax
import jax.numpy as jnp
from jax.experimental import pallas as pl
from jax.experimental.pallas import tpu as pltpu

# ---------------- configuration (what the module's forward implies) ----------------
B = 2               # batch
IMG = 224           # image size (B, 3, 224, 224)
PATCH = 32          # 224 / 7
HF = WF = 7         # backbone feature map
IN_DIM = 1280       # backbone channels
HID = 128           # PredictionNetwork hidden dim
A = 9               # anchors
C = 20              # classes
NBOX = 4            # GT boxes per image
OUT_C = 5 * A + C   # 65 prediction channels
OUT_CP = 128        # lane-padded prediction channels
M_ROWS = B * HF * WF                # 98 spatial positions
MP = ((M_ROWS + 15) // 16) * 16     # 112 (bf16 sublane-aligned rows)
PATCH_DIM = 3 * PATCH * PATCH       # 3072
P_ANCH = A * HF * WF                # 441 anchors per image
PP = ((P_ANCH + 127) // 128) * 128  # 512 lane-padded anchors
BN = B * NBOX                       # 8 (= sublane-filled IoU rows)


# ------------- fused kernel: prefolded prediction head + lane-dense IoU -------------
def fused_pred_iou_kernel(x_ref, wc_ref, bc_ref, w2_ref, b2_ref, anc_ref, box_ref,
                          pred_ref, iou_ref):
    # --- prediction head: x @ W_comb + b_comb -> LeakyReLU -> @ W2p + b2p ---
    # TODO(synk): nn.Dropout2d(p=0.3) in training mode is stochastic; treated as identity
    # (this is also the precondition that makes the W_feat@W1 prefold exact).
    h = jnp.dot(x_ref[...], wc_ref[...], preferred_element_type=jnp.float32) + bc_ref[...]
    h = jnp.where(h > 0, h, 0.01 * h)                               # LeakyReLU(0.01)
    pred_ref[...] = jnp.dot(h.astype(jnp.bfloat16), w2_ref[...],
                            preferred_element_type=jnp.float32) + b2_ref[...]

    # --- IoU: anchors on lanes (PP=512), (B*N)=8 box-rows on sublanes (full vregs) ---
    xtl_p = anc_ref[0]                                              # (BN, PP)
    ytl_p = anc_ref[1]
    xbr_p = anc_ref[2]
    ybr_p = anc_ref[3]
    box = box_ref[...]                                              # (BN, 5)
    xtl_b = box[:, 0:1]
    ytl_b = box[:, 1:2]
    xbr_b = box[:, 2:3]
    ybr_b = box[:, 3:4]
    xi = jnp.maximum(xtl_p, xtl_b)
    yi = jnp.maximum(ytl_p, ytl_b)
    xa = jnp.minimum(xbr_p, xbr_b)
    ya = jnp.minimum(ybr_p, ybr_b)
    inter = jnp.maximum(xa - xi, 0.0) * jnp.maximum(ya - yi, 0.0)
    area_p = (xbr_p - xtl_p) * (ybr_p - ytl_p)
    area_b = (xbr_b - xtl_b) * (ybr_b - ytl_b)
    union = area_p + area_b - inter
    iou_ref[...] = inter / (union + 1e-8)                           # eps: no inf on degenerate boxes


def fused_pred_iou(xp, w_comb, b_comb, w2p, b2p, anc_exp, bbox_flat):
    # xp       : (MP, PATCH_DIM)  bf16
    # w_comb   : (PATCH_DIM, HID) bf16   (pre-folded W_feat @ W1)
    # b_comb   : (HID,)           f32    (pre-folded b_feat @ W1 + b1)
    # w2p/b2p  : (HID, OUT_CP) bf16 / (OUT_CP,) f32
    # anc_exp  : (4, BN, PP)      f32    anchor coords, lanes = anchors, rows = (b, n)
    # bbox_flat: (BN, 5)          f32
    vmem = pl.BlockSpec(memory_space=pltpu.MemorySpace.VMEM)
    return pl.pallas_call(
        fused_pred_iou_kernel,
        out_shape=(jax.ShapeDtypeStruct((MP, OUT_CP), jnp.float32),
                   jax.ShapeDtypeStruct((BN, PP), jnp.float32)),
        in_specs=[vmem] * 7,
        out_specs=(vmem, vmem),
    )(xp, w_comb, b_comb.reshape(1, HID), w2p, b2p.reshape(1, OUT_CP),
      anc_exp, bbox_flat)


# ---------------- plain-JAX glue (anchors, grid, matching, losses) ----------------
def generate_grid(batch_size, w_amap=7, h_amap=7):
    w_range = jnp.arange(w_amap, dtype=jnp.float32) + 0.5
    h_range = jnp.arange(h_amap, dtype=jnp.float32) + 0.5
    w_grid = jnp.tile(w_range[None, :], (h_amap, 1))
    h_grid = jnp.tile(h_range[:, None], (1, w_amap))
    grid = jnp.stack([w_grid, h_grid], axis=-1)
    return jnp.broadcast_to(grid[None], (batch_size, h_amap, w_amap, 2))


def generate_anchor(anc, grid):
    g = grid[:, None]               # (B,1,H,W,2)
    a = anc[None, :, None, None]    # (1,A,1,1,2)
    half_w = a[..., 0] / 2.0
    half_h = a[..., 1] / 2.0
    x_tl = g[..., 0] - half_w
    y_tl = g[..., 1] - half_h
    x_br = g[..., 0] + half_w
    y_br = g[..., 1] + half_h
    return jnp.stack([x_tl, y_tl, x_br, y_br], axis=-1)  # (B,A,H,W,4)


def reference_on_activated_anchors(anchors, bboxes, grid, iou_mat, neg_thresh=0.2):
    # TODO(synk): the assignment's ReferenceOnActivatedAnchors uses dynamic-shaped nonzero()
    # and random negative sampling; here we use the static YOLO assignment (exactly one
    # positive anchor per GT box) and deterministic lowest-IoU negatives.
    Bb, Aa, Hh, Ww, _ = anchors.shape
    Nb = bboxes.shape[1]
    HW = Hh * Ww
    P = Aa * HW
    centers = (bboxes[:, :, 2:4] - bboxes[:, :, :2]) / 2.0 + bboxes[:, :, :2]  # (B,N,2)
    grid_flat = grid.reshape(Bb, HW, 2)
    mah = jnp.abs(grid_flat[:, :, None, :] - centers[:, None, :, :]).sum(-1)   # (B,HW,N)
    cell_idx = jnp.argmin(mah, axis=1)                                         # (B,N)

    iou_r = iou_mat.reshape(Bb, Aa, HW, Nb)
    b_ix = jnp.arange(Bb)[:, None, None]
    a_ix = jnp.arange(Aa)[None, :, None]
    n_ix = jnp.arange(Nb)[None, None, :]
    iou_cell = iou_r[b_ix, a_ix, cell_idx[:, None, :], n_ix]                   # (B,A,N)
    best_a = jnp.argmax(iou_cell, axis=1)                                      # (B,N)

    pos_ind = (jnp.arange(Bb)[:, None] * P + best_a * HW + cell_idx).reshape(-1)
    GT_conf = jnp.take_along_axis(iou_cell, best_a[:, None, :], axis=1)[:, 0, :].reshape(-1)
    GT_class = bboxes[:, :, 4].reshape(-1).astype(jnp.int32)
    gt_boxes = bboxes[:, :, :4].reshape(-1, 4)

    anc_flat = anchors.reshape(-1, 4)
    act_coord = anc_flat[pos_ind]
    anc_wh = act_coord[:, 2:4] - act_coord[:, :2]
    box_wh = gt_boxes[:, 2:4] - gt_boxes[:, :2]
    xy_off = (gt_boxes[:, :2] + gt_boxes[:, 2:4]
              - act_coord[:, :2] - act_coord[:, 2:4]) / 2.0 / anc_wh
    wh_off = jnp.log(box_wh / anc_wh)
    GT_offsets = jnp.concatenate([xy_off, wh_off], axis=-1)

    max_iou_per_anc = iou_mat.max(axis=-1).reshape(-1)   # (B*P,)
    M = pos_ind.shape[0]
    neg_ind = jnp.argsort(max_iou_per_anc)[:M]
    return pos_ind, neg_ind, GT_conf, GT_offsets, GT_class


def extract_anchor_data(anchor_data, idx):
    # anchor_data: (B, A, D, H, W) -> (M, D)
    Bb, Aa, D, Hh, Ww = anchor_data.shape
    flat = jnp.transpose(anchor_data, (0, 1, 3, 4, 2)).reshape(-1, D)
    return flat[idx]


def extract_class_scores(all_scores, idx, num_anchors):
    # all_scores: (B, C, H, W) -> (M, C)
    Bb, Cc, Hh, Ww = all_scores.shape
    s = jnp.transpose(all_scores, (0, 2, 3, 1))
    s = jnp.broadcast_to(s[:, None], (Bb, num_anchors, Hh, Ww, Cc)).reshape(-1, Cc)
    return s[idx]


def object_classification(class_scores, GT_class, batch_size, anc_per_img, activated_anc_ind):
    m = jnp.max(class_scores, axis=-1, keepdims=True)
    lse = jnp.log(jnp.sum(jnp.exp(class_scores - m), axis=-1)) + m[:, 0]
    picked = jnp.take_along_axis(class_scores, GT_class[:, None], axis=-1)[:, 0]
    all_loss = lse - picked
    loss = 0.0
    for i in range(batch_size):
        mask = ((activated_anc_ind >= i * anc_per_img)
                & (activated_anc_ind < (i + 1) * anc_per_img)).astype(jnp.float32)
        loss = loss + jnp.sum(all_loss * mask) / jnp.maximum(jnp.sum(mask), 1.0)
    return loss / batch_size


# ---------------- full training-time forward ----------------
def single_stage_detector_forward(params, images, bboxes):
    anchor_list = jnp.array(
        [[1.0, 1], [2, 2], [3, 3], [4, 4], [5, 5], [2, 3], [3, 2], [3, 5], [5, 3]],
        dtype=jnp.float32)
    Bi = images.shape[0]
    Nb = bboxes.shape[1]

    # ---- backbone stand-in (patchify) ----
    # TODO(synk): torchvision MobileNetV2 FeatureExtractor is not reproducible in-script;
    # replaced with a deterministic 32x32 patchify + linear projection to (B, 1280, 7, 7).
    # The projection is pre-folded into the head's first 1x1 conv (see init_params).
    x = images.reshape(Bi, 3, HF, PATCH, WF, PATCH)
    x = jnp.transpose(x, (0, 2, 4, 1, 3, 5)).reshape(Bi * HF * WF, PATCH_DIM)
    xp = jnp.pad(x, ((0, MP - Bi * HF * WF), (0, 0))).astype(jnp.bfloat16)

    # ---- anchors, laid out lane-dense for the fused kernel ----
    grid = generate_grid(Bi)
    anchors = generate_anchor(anchor_list, grid)                      # (B,A,H,W,4)
    anc_t = jnp.transpose(anchors.reshape(Bi, P_ANCH, 4), (0, 2, 1))  # (B,4,P)
    anc_t = jnp.pad(anc_t, ((0, 0), (0, 0), (0, PP - P_ANCH)))        # (B,4,PP)
    # expand across the Nb GT-box rows: anc_exp[c, b*Nb+n, p] = anc_t[b, c, p]
    anc_exp = jnp.broadcast_to(anc_t[:, None], (Bi, Nb, 4, PP))
    anc_exp = jnp.transpose(anc_exp, (2, 0, 1, 3)).reshape(4, Bi * Nb, PP)
    bbox_flat = bboxes.reshape(Bi * Nb, 5).astype(jnp.float32)

    # ---- one fused Pallas call: prediction head + IoU ----
    outp, iou_raw = fused_pred_iou(xp, params["w_comb"], params["b_comb"],
                                   params["w2p"], params["b2p"], anc_exp, bbox_flat)

    out = outp[: Bi * HF * WF, :OUT_C].reshape(Bi, HF, WF, OUT_C)
    out = jnp.transpose(out, (0, 3, 1, 2))                                # (B, 65, 7, 7) NCHW
    class_scores_all = out[:, 5 * A:, :, :]                               # (B, C, H, W)
    anc_pred = out[:, : 5 * A, :, :].reshape(Bi, A, 5, HF, WF)
    offsets_all = jnp.concatenate(
        [jax.nn.sigmoid(anc_pred[:, :, 1:3]) - 0.5, anc_pred[:, :, 3:]], axis=2)  # (B,A,4,H,W)
    conf_all = jax.nn.sigmoid(anc_pred[:, :, 0:1])                        # (B,A,1,H,W)

    ious = jnp.transpose(iou_raw.reshape(Bi, Nb, PP)[:, :, :P_ANCH], (0, 2, 1))   # (B,P,N)

    # ---- anchor matching ----
    pos_ind, neg_ind, GT_conf, GT_offsets, GT_class = reference_on_activated_anchors(
        anchors, bboxes, grid, ious, neg_thresh=0.2)

    # ---- extract predictions for positive / negative anchors ----
    offsets = extract_anchor_data(offsets_all, pos_ind)                   # (M,4)
    class_scores = extract_class_scores(class_scores_all, pos_ind, A)     # (M,C)
    pos_conf = extract_anchor_data(conf_all, pos_ind)                     # (M,1)
    neg_conf = extract_anchor_data(conf_all, neg_ind)                     # (M,1)
    conf_scores = jnp.concatenate([pos_conf, neg_conf], axis=0)           # (2M,1)

    # ---- losses (tiny reductions: plain JAX, fused by XLA) ----
    M = GT_offsets.shape[0]
    gt_conf = jnp.concatenate(
        [jnp.ones_like(GT_conf), jnp.zeros_like(GT_conf)], axis=0).reshape(-1, 1)
    conf_loss = jnp.sum((conf_scores - gt_conf) ** 2) / gt_conf.shape[0]
    reg_loss = jnp.sum((offsets - GT_offsets) ** 2) / M
    cls_loss = object_classification(class_scores, GT_class, Bi, A * HF * WF, pos_ind)
    return conf_loss + reg_loss + cls_loss


def init_params(key):
    k = jax.random.split(key, 3)
    w_feat = 0.02 * jax.random.normal(k[0], (PATCH_DIM, IN_DIM), jnp.float32)
    b_feat = jnp.zeros((IN_DIM,), jnp.float32)
    w1 = 0.02 * jax.random.normal(k[1], (IN_DIM, HID), jnp.float32)
    b1 = jnp.zeros((HID,), jnp.float32)
    w2 = 0.02 * jax.random.normal(k[2], (HID, OUT_C), jnp.float32)
    b2 = jnp.zeros((OUT_C,), jnp.float32)
    w2p = jnp.pad(w2, ((0, 0), (0, OUT_CP - OUT_C)))
    b2p = jnp.pad(b2, ((0, OUT_CP - OUT_C),))
    # Exact prefold (Dropout2d == identity, no nonlinearity between the two matmuls):
    #   (x @ Wf + bf) @ W1 + b1  ==  x @ (Wf @ W1) + (bf @ W1 + b1)
    # Cuts streamed weight bytes ~10x and removes the K grid + f32 accumulator.
    w_comb = w_feat @ w1                  # (3072, 128) f32
    b_comb = b_feat @ w1 + b1             # (128,)      f32
    # matmul operands stored in bf16 (bf16 MXU path, f32 accumulate); biases stay f32.
    return dict(w_comb=w_comb.astype(jnp.bfloat16), b_comb=b_comb,
                w2p=w2p.astype(jnp.bfloat16), b2p=b2p)


if __name__ == "__main__":
    key = jax.random.PRNGKey(0)
    kp, ki, kb = jax.random.split(key, 3)
    params = init_params(kp)
    images = jax.random.normal(ki, (B, 3, IMG, IMG), jnp.float32)

    # deterministic valid GT boxes in feature-map coordinates (0..7), last col = class
    kc, ks, kk = jax.random.split(kb, 3)
    cxy = jax.random.uniform(kc, (B, NBOX, 2), minval=1.5, maxval=5.5)
    wh = jax.random.uniform(ks, (B, NBOX, 2), minval=1.0, maxval=2.5)
    cls = jax.random.randint(kk, (B, NBOX), 0, C).astype(jnp.float32)
    bboxes = jnp.concatenate([cxy - wh / 2.0, cxy + wh / 2.0, cls[..., None]], axis=-1)

    total_loss = jax.jit(single_stage_detector_forward)(params, images, bboxes)
    total_loss = jax.block_until_ready(total_loss)
    assert bool(jnp.isfinite(total_loss))
    print("KERNEL_OK")
</pallas_src>

<mosaic_0001>
module attributes {stable_mosaic.version = 11 : i64} {
  func.func @fused_pred_iou_kernel(%arg0: memref<112x3072xbf16, #tpu.memory_space<vmem>>, %arg1: memref<3072x128xbf16, #tpu.memory_space<vmem>>, %arg2: memref<1x128xf32, #tpu.memory_space<vmem>>, %arg3: memref<128x128xbf16, #tpu.memory_space<vmem>>, %arg4: memref<1x128xf32, #tpu.memory_space<vmem>>, %arg5: memref<4x8x512xf32, #tpu.memory_space<vmem>>, %arg6: memref<8x5xf32, #tpu.memory_space<vmem>>, %arg7: memref<112x128xf32, #tpu.memory_space<vmem>>, %arg8: memref<8x512xf32, #tpu.memory_space<vmem>>) attributes {dimension_semantics = [], scalar_prefetch = 0 : i64, scratch_operands = 0 : i64, tpu.core_type = #tpu.core_type<tc>} {
    %c0 = arith.constant 0 : index
    %c0_0 = arith.constant 0 : index
    %0 = vector.load %arg0[%c0, %c0_0] : memref<112x3072xbf16, #tpu.memory_space<vmem>>, vector<112x3072xbf16>
    %c0_1 = arith.constant 0 : index
    %c0_2 = arith.constant 0 : index
    %1 = vector.load %arg1[%c0_1, %c0_2] : memref<3072x128xbf16, #tpu.memory_space<vmem>>, vector<3072x128xbf16>
    %cst = arith.constant dense<0.000000e+00> : vector<112x128xf32>
    %2 = tpu.matmul %0, %1, %cst {dimension_numbers = #tpu.dot_dimension_numbers<[1], [0], [0], [1], [0, 0, 1, 1], [], []>} : vector<112x3072xbf16>, vector<3072x128xbf16>, vector<112x128xf32> -> vector<112x128xf32>
    %c0_3 = arith.constant 0 : index
    %c0_4 = arith.constant 0 : index
    %3 = vector.load %arg2[%c0_3, %c0_4] : memref<1x128xf32, #tpu.memory_space<vmem>>, vector<1x128xf32>
    %4 = vector.broadcast %3 : vector<1x128xf32> to vector<112x128xf32>
    %5 = arith.addf %2, %4 : vector<112x128xf32>
    %cst_5 = arith.constant 0.000000e+00 : f32
    %6 = vector.broadcast %cst_5 : f32 to vector<112x128xf32>
    %7 = arith.cmpf ogt, %5, %6 : vector<112x128xf32>
    %cst_6 = arith.constant 0.00999999977 : f32
    %8 = vector.broadcast %cst_6 : f32 to vector<112x128xf32>
    %9 = arith.mulf %8, %5 : vector<112x128xf32>
    %10 = arith.select %7, %5, %9 : vector<112x128xi1>, vector<112x128xf32>
    %11 = arith.truncf %10 : vector<112x128xf32> to vector<112x128xbf16>
    %c0_7 = arith.constant 0 : index
    %c0_8 = arith.constant 0 : index
    %12 = vector.load %arg3[%c0_7, %c0_8] : memref<128x128xbf16, #tpu.memory_space<vmem>>, vector<128x128xbf16>
    %cst_9 = arith.constant dense<0.000000e+00> : vector<112x128xf32>
    %13 = tpu.matmul %11, %12, %cst_9 {dimension_numbers = #tpu.dot_dimension_numbers<[1], [0], [0], [1], [0, 0, 1, 1], [], []>} : vector<112x128xbf16>, vector<128x128xbf16>, vector<112x128xf32> -> vector<112x128xf32>
    %c0_10 = arith.constant 0 : index
    %c0_11 = arith.constant 0 : index
    %14 = vector.load %arg4[%c0_10, %c0_11] : memref<1x128xf32, #tpu.memory_space<vmem>>, vector<1x128xf32>
    %15 = vector.broadcast %14 : vector<1x128xf32> to vector<112x128xf32>
    %16 = arith.addf %13, %15 : vector<112x128xf32>
    %c0_12 = arith.constant 0 : index
    %c0_13 = arith.constant 0 : index
    %17 = vector.load %arg7[%c0_12, %c0_13] : memref<112x128xf32, #tpu.memory_space<vmem>>, vector<112x128xf32>
    tpu.vector_store %arg7[%c0_12, %c0_13], %16 {strides = array<i32>} : memref<112x128xf32, #tpu.memory_space<vmem>>, vector<112x128xf32>,
    %c0_14 = arith.constant 0 : index
    %c0_15 = arith.constant 0 : index
    %c0_16 = arith.constant 0 : index
    %18 = vector.load %arg5[%c0_14, %c0_15, %c0_16] : memref<4x8x512xf32, #tpu.memory_space<vmem>>, vector<1x8x512xf32>
    %19 = vector.shape_cast %18 : vector<1x8x512xf32> to vector<8x512xf32>
    %c1 = arith.constant 1 : index
    %c0_17 = arith.constant 0 : index
    %c0_18 = arith.constant 0 : index
    %20 = vector.load %arg5[%c1, %c0_17, %c0_18] : memref<4x8x512xf32, #tpu.memory_space<vmem>>, vector<1x8x512xf32>
    %21 = vector.shape_cast %20 : vector<1x8x512xf32> to vector<8x512xf32>
    %c2 = arith.constant 2 : index
    %c0_19 = arith.constant 0 : index
    %c0_20 = arith.constant 0 : index
    %22 = vector.load %arg5[%c2, %c0_19, %c0_20] : memref<4x8x512xf32, #tpu.memory_space<vmem>>, vector<1x8x512xf32>
    %23 = vector.shape_cast %22 : vector<1x8x512xf32> to vector<8x512xf32>
    %c3 = arith.constant 3 : index
    %c0_21 = arith.constant 0 : index
    %c0_22 = arith.constant 0 : index
    %24 = vector.load %arg5[%c3, %c0_21, %c0_22] : memref<4x8x512xf32, #tpu.memory_space<vmem>>, vector<1x8x512xf32>
    %25 = vector.shape_cast %24 : vector<1x8x512xf32> to vector<8x512xf32>
    %c0_23 = arith.constant 0 : index
    %c0_24 = arith.constant 0 : index
    %26 = vector.load %arg6[%c0_23, %c0_24] : memref<8x5xf32, #tpu.memory_space<vmem>>, vector<8x5xf32>
    %27 = vector.extract_strided_slice %26 {offsets = [0, 0], sizes = [8, 1], strides = [1, 1]} : vector<8x5xf32> to vector<8x1xf32>
    %28 = vector.extract_strided_slice %26 {offsets = [0, 1], sizes = [8, 1], strides = [1, 1]} : vector<8x5xf32> to vector<8x1xf32>
    %29 = vector.extract_strided_slice %26 {offsets = [0, 2], sizes = [8, 1], strides = [1, 1]} : vector<8x5xf32> to vector<8x1xf32>
    %30 = vector.extract_strided_slice %26 {offsets = [0, 3], sizes = [8, 1], strides = [1, 1]} : vector<8x5xf32> to vector<8x1xf32>
    %31 = vector.broadcast %27 : vector<8x1xf32> to vector<8x512xf32>
    %32 = arith.maximumf %19, %31 : vector<8x512xf32>
    %33 = vector.broadcast %28 : vector<8x1xf32> to vector<8x512xf32>
    %34 = arith.maximumf %21, %33 : vector<8x512xf32>
    %35 = vector.broadcast %29 : vector<8x1xf32> to vector<8x512xf32>
    %36 = arith.minimumf %23, %35 : vector<8x512xf32>
    %37 = vector.broadcast %30 : vector<8x1xf32> to vector<8x512xf32>
    %38 = arith.minimumf %25, %37 : vector<8x512xf32>
    %39 = arith.subf %36, %32 : vector<8x512xf32>
    %cst_25 = arith.constant 0.000000e+00 : f32
    %40 = vector.broadcast %cst_25 : f32 to vector<8x512xf32>
    %41 = arith.maximumf %39, %40 : vector<8x512xf32>
    %42 = arith.subf %38, %34 : vector<8x512xf32>
    %cst_26 = arith.constant 0.000000e+00 : f32
    %43 = vector.broadcast %cst_26 : f32 to vector<8x512xf32>
    %44 = arith.maximumf %42, %43 : vector<8x512xf32>
    %45 = arith.mulf %41, %44 : vector<8x512xf32>
    %46 = arith.subf %23, %19 : vector<8x512xf32>
    %47 = arith.subf %25, %21 : vector<8x512xf32>
    %48 = arith.mulf %46, %47 : vector<8x512xf32>
    %49 = arith.subf %29, %27 : vector<8x1xf32>
    %50 = arith.subf %30, %28 : vector<8x1xf32>
    %51 = arith.mulf %49, %50 : vector<8x1xf32>
    %52 = vector.broadcast %51 : vector<8x1xf32> to vector<8x512xf32>
    %53 = arith.addf %48, %52 : vector<8x512xf32>
    %54 = arith.subf %53, %45 : vector<8x512xf32>
    %cst_27 = arith.constant 9.99999993E-9 : f32
    %55 = vector.broadcast %cst_27 : f32 to vector<8x512xf32>
    %56 = arith.addf %54, %55 : vector<8x512xf32>
    %57 = arith.divf %45, %56 : vector<8x512xf32>
    %c0_28 = arith.constant 0 : index
    %c0_29 = arith.constant 0 : index
    %58 = vector.load %arg8[%c0_28, %c0_29] : memref<8x512xf32, #tpu.memory_space<vmem>>, vector<8x512xf32>
    tpu.vector_store %arg8[%c0_28, %c0_29], %57 {strides = array<i32>} : memref<8x512xf32, #tpu.memory_space<vmem>>, vector<8x512xf32>,
    return
  }
}

</mosaic_0001>

<llo_original>
// kernel: single_stage_detector_forward.1
$region0: #{single_stage_detector_forward.1}
  #allocation0 [shape = 'u32[]', space=smem, size = 0x4, offset = 0x4, fixed_abs, tag = 'smem constant byte address 0x4 - core index']
  #allocation1 [shape = 'u32[72,128]{1,0:T(1,128)}', space=vmem, size = 0x9000, scoped, tag = 'internal scratch']
  %s0 = inlined_call_operand.vmem [shape: bf16[112,3072], index: 0, kind: input, shape index: {}]
  %s1 = inlined_call_operand.vmem [shape: bf16[3072,128], index: 1, kind: input, shape index: {}]
  %s2 = inlined_call_operand.vmem [shape: f32[1,128], index: 2, kind: input, shape index: {}]
  %s3 = inlined_call_operand.vmem [shape: bf16[128,128], index: 3, kind: input, shape index: {}]
  %s4 = inlined_call_operand.vmem [shape: f32[1,128], index: 4, kind: input, shape index: {}]
  %s5 = inlined_call_operand.vmem [shape: f32[4,8,512], index: 5, kind: input, shape index: {}]
  %s6 = inlined_call_operand.vmem [shape: f32[8,5], index: 6, kind: input, shape index: {}]
  %s7 = inlined_call_operand.vmem [shape: f32[112,128], index: 7, kind: output, shape index: {0}]
  %s8 = inlined_call_operand.vmem [shape: f32[8,512], index: 8, kind: output, shape index: {1}]
  %9 = xla_tuple %s7, %s8
  %s10 = sld [smem:[#allocation0]]
  $region46: #{single_stage_detector_forward.1} parent=0
    _
  %s12 = ssub.s32 1, %s10
  %s13 = scalar_select 0, %s12, %s10
  // Predicated region
  $region2: #{single_stage_detector_forward.1} parent=0 // pred_check
    _
  $region3: #{single_stage_detector_forward.1} parent=0 // pred_check_branch
    %15 = sbr.rel (0) target = $region5
  $region4: #{single_stage_detector_forward.1} parent=0 // pred_region
    _
  $region5: #{single_stage_detector_forward.1} parent=0 // pred_fallthru
    _
  // Predicated region
  $region6: #{single_stage_detector_forward.1} parent=0 // pred_check
    _
  $region7: #{single_stage_detector_forward.1} parent=0 // pred_check_branch
    %17 = sbr.rel (0) target = $region9
  $region8: #{single_stage_detector_forward.1} parent=0 // pred_region
    _
  $region9: #{single_stage_detector_forward.1} parent=0 // pred_fallthru
    _
  // Predicated region
  $region10: #{single_stage_detector_forward.1} parent=0 // pred_check
    _
  $region11: #{single_stage_detector_forward.1} parent=0 // pred_check_branch
    %19 = sbr.rel (0) target = $region13
  $region12: #{single_stage_detector_forward.1} parent=0 // pred_region
    _
  $region13: #{single_stage_detector_forward.1} parent=0 // pred_fallthru
    _
  // Predicated region
  $region14: #{single_stage_detector_forward.1} parent=0 // pred_check
    _
  $region15: #{single_stage_detector_forward.1} parent=0 // pred_check_branch
    %21 = sbr.rel (0) target = $region17
  $region16: #{single_stage_detector_forward.1} parent=0 // pred_region
    _
  $region17: #{single_stage_detector_forward.1} parent=0 // pred_fallthru
    _
  // Predicated region
  $region18: #{single_stage_detector_forward.1} parent=0 // pred_check
    _
  $region19: #{single_stage_detector_forward.1} parent=0 // pred_check_branch
    %23 = sbr.rel (0) target = $region21
  $region20: #{single_stage_detector_forward.1} parent=0 // pred_region
    _
  $region21: #{single_stage_detector_forward.1} parent=0 // pred_fallthru
    _
  // Predicated region
  $region22: #{single_stage_detector_forward.1} parent=0 // pred_check
    _
  $region23: #{single_stage_detector_forward.1} parent=0 // pred_check_branch
    %25 = sbr.rel (0) target = $region25
  $region24: #{single_stage_detector_forward.1} parent=0 // pred_region
    _
  $region25: #{single_stage_detector_forward.1} parent=0 // pred_fallthru
    _
  // Predicated region
  $region26: #{single_stage_detector_forward.1} parent=0 // pred_check
    _
  $region27: #{single_stage_detector_forward.1} parent=0 // pred_check_branch
    %27 = sbr.rel (0) target = $region29
  $region28: #{single_stage_detector_forward.1} parent=0 // pred_region
    _
  $region29: #{single_stage_detector_forward.1} parent=0 // pred_fallthru
    _
  %v28 = vld [vmem:[%s0] sm:$0xff]
  %v29 = vld [vmem:[%s0 + $0x8] sm:$0xff]
  %v30 = vld [vmem:[%s0 + $0x10] sm:$0xff]
  %v31 = vld [vmem:[%s0 + $0x18] sm:$0xff]
  %v32 = vld [vmem:[%s0 + $0x20] sm:$0xff]
  %v33 = vld [vmem:[%s0 + $0x28] sm:$0xff]
  %v34 = vld [vmem:[%s0 + $0x30] sm:$0xff]
  %v35 = vld [vmem:[%s0 + $0x38] sm:$0xff]
  %v36 = vld [vmem:[%s0 + $0x40] sm:$0xff]
  %v37 = vld [vmem:[%s0 + $0x48] sm:$0xff]
  %v38 = vld [vmem:[%s0 + $0x50] sm:$0xff]
  %v39 = vld [vmem:[%s0 + $0x58] sm:$0xff]
  %v40 = vld [vmem:[%s0 + $0x60] sm:$0xff]
  %v41 = vld [vmem:[%s0 + $0x68] sm:$0xff]
  %v42 = vld [vmem:[%s0 + $0x70] sm:$0xff]
  %v43 = vld [vmem:[%s0 + $0x78] sm:$0xff]
  %v44 = vld [vmem:[%s0 + $0x80] sm:$0xff]
  %v45 = vld [vmem:[%s0 + $0x88] sm:$0xff]
  %v46 = vld [vmem:[%s0 + $0x90] sm:$0xff]
  %v47 = vld [vmem:[%s0 + $0x98] sm:$0xff]
  %v48 = vld [vmem:[%s0 + $0xa0] sm:$0xff]
  %v49 = vld [vmem:[%s0 + $0xa8] sm:$0xff]
  %v50 = vld [vmem:[%s0 + $0xb0] sm:$0xff]
  %v51 = vld [vmem:[%s0 + $0xb8] sm:$0xff]
  %v52 = vld [vmem:[%s0 + $0xc0] sm:$0xff]
  %v53 = vld [vmem:[%s0 + $0xc8] sm:$0xff]
  %v54 = vld [vmem:[%s0 + $0xd0] sm:$0xff]
  %v55 = vld [vmem:[%s0 + $0xd8] sm:$0xff]
  %v56 = vld [vmem:[%s0 + $0xe0] sm:$0xff]
  %v57 = vld [vmem:[%s0 + $0xe8] sm:$0xff]
  %v58 = vld [vmem:[%s0 + $0xf0] sm:$0xff]
  %v59 = vld [vmem:[%s0 + $0xf8] sm:$0xff]
  %v60 = vld [vmem:[%s0 + $0x100] sm:$0xff]
  %v61 = vld [vmem:[%s0 + $0x108] sm:$0xff]
  %v62 = vld [vmem:[%s0 + $0x110] sm:$0xff]
  %v63 = vld [vmem:[%s0 + $0x118] sm:$0xff]
  %v64 = vld [vmem:[%s0 + $0x120] sm:$0xff]
  %v65 = vld [vmem:[%s0 + $0x128] sm:$0xff]
  %v66 = vld [vmem:[%s0 + $0x130] sm:$0xff]
  %v67 = vld [vmem:[%s0 + $0x138] sm:$0xff]
  %v68 = vld [vmem:[%s0 + $0x140] sm:$0xff]
  %v69 = vld [vmem:[%s0 + $0x148] sm:$0xff]
  %v70 = vld [vmem:[%s0 + $0x150] sm:$0xff]
  %v71 = vld [vmem:[%s0 + $0x158] sm:$0xff]
  %v72 = vld [vmem:[%s0 + $0x160] sm:$0xff]
  %v73 = vld [vmem:[%s0 + $0x168] sm:$0xff]
  %v74 = vld [vmem:[%s0 + $0x170] sm:$0xff]
  %v75 = vld [vmem:[%s0 + $0x178] sm:$0xff]
  %v76 = vld [vmem:[%s0 + $0x180] sm:$0xff]
  %v77 = vld [vmem:[%s0 + $0x188] sm:$0xff]
  %v78 = vld [vmem:[%s0 + $0x190] sm:$0xff]
  %v79 = vld [vmem:[%s0 + $0x198] sm:$0xff]
  %v80 = vld [vmem:[%s0 + $0x1a0] sm:$0xff]
  %v81 = vld [vmem:[%s0 + $0x1a8] sm:$0xff]
  %v82 = vld [vmem:[%s0 + $0x1b0] sm:$0xff]
  %v83 = vld [vmem:[%s0 + $0x1b8] sm:$0xff]
  %v84 = vld [vmem:[%s0 + $0x1c0] sm:$0xff]
  %v85 = vld [vmem:[%s0 + $0x1c8] sm:$0xff]
  %v86 = vld [vmem:[%s0 + $0x1d0] sm:$0xff]
  %v87 = vld [vmem:[%s0 + $0x1d8] sm:$0xff]
  %v88 = vld [vmem:[%s0 + $0x1e0] sm:$0xff]
  %v89 = vld [vmem:[%s0 + $0x1e8] sm:$0xff]
  %v90 = vld [vmem:[%s0 + $0x1f0] sm:$0xff]
  %v91 = vld [vmem:[%s0 + $0x1f8] sm:$0xff]
  %v92 = vld [vmem:[%s0 + $0x200] sm:$0xff]
  %v93 = vld [vmem:[%s0 + $0x208] sm:$0xff]
  %v94 = vld [vmem:[%s0 + $0x210] sm:$0xff]
  %v95 = vld [vmem:[%s0 + $0x218] sm:$0xff]
  %v96 = vld [vmem:[%s0 + $0x220] sm:$0xff]
  %v97 = vld [vmem:[%s0 + $0x228] sm:$0xff]
  %v98 = vld [vmem:[%s0 + $0x230] sm:$0xff]
  %v99 = vld [vmem:[%s0 + $0x238] sm:$0xff]
  %v100 = vld [vmem:[%s0 + $0x240] sm:$0xff]
  %v101 = vld [vmem:[%s0 + $0x248] sm:$0xff]
  %v102 = vld [vmem:[%s0 + $0x250] sm:$0xff]
  %v103 = vld [vmem:[%s0 + $0x258] sm:$0xff]
  %v104 = vld [vmem:[%s0 + $0x260] sm:$0xff]
  %v105 = vld [vmem:[%s0 + $0x268] sm:$0xff]
  %v106 = vld [vmem:[%s0 + $0x270] sm:$0xff]
  %v107 = vld [vmem:[%s0 + $0x278] sm:$0xff]
  %v108 = vld [vmem:[%s0 + $0x280] sm:$0xff]
  %v109 = vld [vmem:[%s0 + $0x288] sm:$0xff]
  %v110 = vld [vmem:[%s0 + $0x290] sm:$0xff]
  %v111 = vld [vmem:[%s0 + $0x298] sm:$0xff]
  %v112 = vld [vmem:[%s0 + $0x2a0] sm:$0xff]
  %v113 = vld [vmem:[%s0 + $0x2a8] sm:$0xff]
  %v114 = vld [vmem:[%s0 + $0x2b0] sm:$0xff]
  %v115 = vld [vmem:[%s0 + $0x2b8] sm:$0xff]
  %v116 = vld [vmem:[%s0 + $0x2c0] sm:$0xff]
  %v117 = vld [vmem:[%s0 + $0x2c8] sm:$0xff]
  %v118 = vld [vmem:[%s0 + $0x2d0] sm:$0xff]
  %v119 = vld [vmem:[%s0 + $0x2d8] sm:$0xff]
  %v120 = vld [vmem:[%s0 + $0x2e0] sm:$0xff]
  %v121 = vld [vmem:[%s0 + $0x2e8] sm:$0xff]
  %v122 = vld [vmem:[%s0 + $0x2f0] sm:$0xff]
  %v123 = vld [vmem:[%s0 + $0x2f8] sm:$0xff]
  %v124 = vld [vmem:[%s0 + $0x300] sm:$0xff]
  %v125 = vld [vmem:[%s0 + $0x308] sm:$0xff]
  %v126 = vld [vmem:[%s0 + $0x310] sm:$0xff]
  %v127 = vld [vmem:[%s0 + $0x318] sm:$0xff]
  %v128 = vld [vmem:[%s0 + $0x320] sm:$0xff]
  %v129 = vld [vmem:[%s0 + $0x328] sm:$0xff]
  %v130 = vld [vmem:[%s0 + $0x330] sm:$0xff]
  %v131 = vld [vmem:[%s0 + $0x338] sm:$0xff]
  %v132 = vld [vmem:[%s0 + $0x340] sm:$0xff]
  %v133 = vld [vmem:[%s0 + $0x348] sm:$0xff]
  %v134 = vld [vmem:[%s0 + $0x350] sm:$0xff]
  %v135 = vld [vmem:[%s0 + $0x358] sm:$0xff]
  %v136 = vld [vmem:[%s0 + $0x360] sm:$0xff]
  %v137 = vld [vmem:[%s0 + $0x368] sm:$0xff]
  %v138 = vld [vmem:[%s0 + $0x370] sm:$0xff]
  %v139 = vld [vmem:[%s0 + $0x378] sm:$0xff]
  %v140 = vld [vmem:[%s0 + $0x380] sm:$0xff]
  %v141 = vld [vmem:[%s0 + $0x388] sm:$0xff]
  %v142 = vld [vmem:[%s0 + $0x390] sm:$0xff]
  %v143 = vld [vmem:[%s0 + $0x398] sm:$0xff]
  %v144 = vld [vmem:[%s0 + $0x3a0] sm:$0xff]
  %v145 = vld [vmem:[%s0 + $0x3a8] sm:$0xff]
  %v146 = vld [vmem:[%s0 + $0x3b0] sm:$0xff]
  %v147 = vld [vmem:[%s0 + $0x3b8] sm:$0xff]
  %v148 = vld [vmem:[%s0 + $0x3c0] sm:$0xff]
  %v149 = vld [vmem:[%s0 + $0x3c8] sm:$0xff]
  %v150 = vld [vmem:[%s0 + $0x3d0] sm:$0xff]
  %v151 = vld [vmem:[%s0 + $0x3d8] sm:$0xff]
  %v152 = vld [vmem:[%s0 + $0x3e0] sm:$0xff]
  %v153 = vld [vmem:[%s0 + $0x3e8] sm:$0xff]
  %v154 = vld [vmem:[%s0 + $0x3f0] sm:$0xff]
  %v155 = vld [vmem:[%s0 + $0x3f8] sm:$0xff]
  %v156 = vld [vmem:[%s0 + $0x400] sm:$0xff]
  %v157 = vld [vmem:[%s0 + $0x408] sm:$0xff]
  %v158 = vld [vmem:[%s0 + $0x410] sm:$0xff]
  %v159 = vld [vmem:[%s0 + $0x418] sm:$0xff]
  %v160 = vld [vmem:[%s0 + $0x420] sm:$0xff]
  %v161 = vld [vmem:[%s0 + $0x428] sm:$0xff]
  %v162 = vld [vmem:[%s0 + $0x430] sm:$0xff]
  %v163 = vld [vmem:[%s0 + $0x438] sm:$0xff]
  %v164 = vld [vmem:[%s0 + $0x440] sm:$0xff]
  %v165 = vld [vmem:[%s0 + $0x448] sm:$0xff]
  %v166 = vld [vmem:[%s0 + $0x450] sm:$0xff]
  %v167 = vld [vmem:[%s0 + $0x458] sm:$0xff]
  %v168 = vld [vmem:[%s0 + $0x460] sm:$0xff]
  %v169 = vld [vmem:[%s0 + $0x468] sm:$0xff]
  %v170 = vld [vmem:[%s0 + $0x470] sm:$0xff]
  %v171 = vld [vmem:[%s0 + $0x478] sm:$0xff]
  %v172 = vld [vmem:[%s0 + $0x480] sm:$0xff]
  %v173 = vld [vmem:[%s0 + $0x488] sm:$0xff]
  %v174 = vld [vmem:[%s0 + $0x490] sm:$0xff]
  %v175 = vld [vmem:[%s0 + $0x498] sm:$0xff]
  %v176 = vld [vmem:[%s0 + $0x4a0] sm:$0xff]
  %v177 = vld [vmem:[%s0 + $0x4a8] sm:$0xff]
  %v178 = vld [vmem:[%s0 + $0x4b0] sm:$0xff]
  %v179 = vld [vmem:[%s0 + $0x4b8] sm:$0xff]
  %v180 = vld [vmem:[%s0 + $0x4c0] sm:$0xff]
  %v181 = vld [vmem:[%s0 + $0x4c8] sm:$0xff]
  %v182 = vld [vmem:[%s0 + $0x4d0] sm:$0xff]
  %v183 = vld [vmem:[%s0 + $0x4d8] sm:$0xff]
  %v184 = vld [vmem:[%s0 + $0x4e0] sm:$0xff]
  %v185 = vld [vmem:[%s0 + $0x4e8] sm:$0xff]
  %v186 = vld [vmem:[%s0 + $0x4f0] sm:$0xff]
  %v187 = vld [vmem:[%s0 + $0x4f8] sm:$0xff]
  %v188 = vld [vmem:[%s0 + $0x500] sm:$0xff]
  %v189 = vld [vmem:[%s0 + $0x508] sm:$0xff]
  %v190 = vld [vmem:[%s0 + $0x510] sm:$0xff]
  %v191 = vld [vmem:[%s0 + $0x518] sm:$0xff]
  %v192 = vld [vmem:[%s0 + $0x520] sm:$0xff]
  %v193 = vld [vmem:[%s0 + $0x528] sm:$0xff]
  %v194 = vld [vmem:[%s0 + $0x530] sm:$0xff]
  %v195 = vld [vmem:[%s0 + $0x538] sm:$0xff]
  %v196 = vld [vmem:[%s1] sm:$0xf]
  %v197 = vld [vmem:[%s1 + $0x4] sm:$0xf]
  %v198 = vld [vmem:[%s1 + $0x8] sm:$0xf]
  %v199 = vld [vmem:[%s1 + $0xc] sm:$0xf]
  %v200 = vld [vmem:[%s1 + $0x10] sm:$0xf]
  %v201 = vld [vmem:[%s1 + $0x14] sm:$0xf]
  %v202 = vld [vmem:[%s1 + $0x18] sm:$0xf]
  %v203 = vld [vmem:[%s1 + $0x1c] sm:$0xf]
  %v204 = vld [vmem:[%s1 + $0x20] sm:$0xf]
  %v205 = vld [vmem:[%s1 + $0x24] sm:$0xf]
  %v206 = vld [vmem:[%s1 + $0x28] sm:$0xf]
  %v207 = vld [vmem:[%s1 + $0x2c] sm:$0xf]
  %v208 = vld [vmem:[%s1 + $0x30] sm:$0xf]
  %v209 = vld [vmem:[%s1 + $0x34] sm:$0xf]
  %v210 = vld [vmem:[%s1 + $0x38] sm:$0xf]
  %v211 = vld [vmem:[%s1 + $0x3c] sm:$0xf]
  %v212 = vld [vmem:[%s1 + $0x40] sm:$0xf]
  %v213 = vld [vmem:[%s1 + $0x44] sm:$0xf]
  %v214 = vld [vmem:[%s1 + $0x48] sm:$0xf]
  %v215 = vld [vmem:[%s1 + $0x4c] sm:$0xf]
  %v216 = vld [vmem:[%s1 + $0x50] sm:$0xf]
  %v217 = vld [vmem:[%s1 + $0x54] sm:$0xf]
  %v218 = vld [vmem:[%s1 + $0x58] sm:$0xf]
  %v219 = vld [vmem:[%s1 + $0x5c] sm:$0xf]
  %v220 = vld [vmem:[%s1 + $0x60] sm:$0xf]
  %v221 = vld [vmem:[%s1 + $0x64] sm:$0xf]
  %v222 = vld [vmem:[%s1 + $0x68] sm:$0xf]
  %v223 = vld [vmem:[%s1 + $0x6c] sm:$0xf]
  %v224 = vld [vmem:[%s1 + $0x70] sm:$0xf]
  %v225 = vld [vmem:[%s1 + $0x74] sm:$0xf]
  %v226 = vld [vmem:[%s1 + $0x78] sm:$0xf]
  %v227 = vld [vmem:[%s1 + $0x7c] sm:$0xf]
  %v228 = vld [vmem:[%s1 + $0x80] sm:$0xf]
  %v229 = vld [vmem:[%s1 + $0x84] sm:$0xf]
  %v230 = vld [vmem:[%s1 + $0x88] sm:$0xf]
  %v231 = vld [vmem:[%s1 + $0x8c] sm:$0xf]
  %v232 = vld [vmem:[%s1 + $0x90] sm:$0xf]
  %v233 = vld [vmem:[%s1 + $0x94] sm:$0xf]
  %v234 = vld [vmem:[%s1 + $0x98] sm:$0xf]
  %v235 = vld [vmem:[%s1 + $0x9c] sm:$0xf]
  %v236 = vld [vmem:[%s1 + $0xa0] sm:$0xf]
  %v237 = vld [vmem:[%s1 + $0xa4] sm:$0xf]
  %v238 = vld [vmem:[%s1 + $0xa8] sm:$0xf]
  %v239 = vld [vmem:[%s1 + $0xac] sm:$0xf]
  %v240 = vld [vmem:[%s1 + $0xb0] sm:$0xf]
  %v241 = vld [vmem:[%s1 + $0xb4] sm:$0xf]
  %v242 = vld [vmem:[%s1 + $0xb8] sm:$0xf]
  %v243 = vld [vmem:[%s1 + $0xbc] sm:$0xf]
  %v244 = vld [vmem:[%s1 + $0xc0] sm:$0xf]
  %v245 = vld [vmem:[%s1 + $0xc4] sm:$0xf]
  %v246 = vld [vmem:[%s1 + $0xc8] sm:$0xf]
  %v247 = vld [vmem:[%s1 + $0xcc] sm:$0xf]
  %v248 = vld [vmem:[%s1 + $0xd0] sm:$0xf]
  %v249 = vld [vmem:[%s1 + $0xd4] sm:$0xf]
  %v250 = vld [vmem:[%s1 + $0xd8] sm:$0xf]
  %v251 = vld [vmem:[%s1 + $0xdc] sm:$0xf]
  %v252 = vld [vmem:[%s1 + $0xe0] sm:$0xf]
  %v253 = vld [vmem:[%s1 + $0xe4] sm:$0xf]
  %v254 = vld [vmem:[%s1 + $0xe8] sm:$0xf]
  %v255 = vld [vmem:[%s1 + $0xec] sm:$0xf]
  %v256 = vld [vmem:[%s1 + $0xf0] sm:$0xf]
  %v257 = vld [vmem:[%s1 + $0xf4] sm:$0xf]
  %v258 = vld [vmem:[%s1 + $0xf8] sm:$0xf]
  %v259 = vld [vmem:[%s1 + $0xfc] sm:$0xf]
  %v260 = vld [vmem:[%s1 + $0x100] sm:$0xf]
  %v261 = vld [vmem:[%s1 + $0x104] sm:$0xf]
  %v262 = vld [vmem:[%s1 + $0x108] sm:$0xf]
  %v263 = vld [vmem:[%s1 + $0x10c] sm:$0xf]
  %v264 = vld [vmem:[%s1 + $0x110] sm:$0xf]
  %v265 = vld [vmem:[%s1 + $0x114] sm:$0xf]
  %v266 = vld [vmem:[%s1 + $0x118] sm:$0xf]
  %v267 = vld [vmem:[%s1 + $0x11c] sm:$0xf]
  %v268 = vld [vmem:[%s1 + $0x120] sm:$0xf]
  %v269 = vld [vmem:[%s1 + $0x124] sm:$0xf]
  %v270 = vld [vmem:[%s1 + $0x128] sm:$0xf]
  %v271 = vld [vmem:[%s1 + $0x12c] sm:$0xf]
  %v272 = vld [vmem:[%s1 + $0x130] sm:$0xf]
  %v273 = vld [vmem:[%s1 + $0x134] sm:$0xf]
  %v274 = vld [vmem:[%s1 + $0x138] sm:$0xf]
  %v275 = vld [vmem:[%s1 + $0x13c] sm:$0xf]
  %v276 = vld [vmem:[%s1 + $0x140] sm:$0xf]
  %v277 = vld [vmem:[%s1 + $0x144] sm:$0xf]
  %v278 = vld [vmem:[%s1 + $0x148] sm:$0xf]
  %v279 = vld [vmem:[%s1 + $0x14c] sm:$0xf]
  %v280 = vld [vmem:[%s1 + $0x150] sm:$0xf]
  %v281 = vld [vmem:[%s1 + $0x154] sm:$0xf]
  %v282 = vld [vmem:[%s1 + $0x158] sm:$0xf]
  %v283 = vld [vmem:[%s1 + $0x15c] sm:$0xf]
  %v284 = vld [vmem:[%s1 + $0x160] sm:$0xf]
  %v285 = vld [vmem:[%s1 + $0x164] sm:$0xf]
  %v286 = vld [vmem:[%s1 + $0x168] sm:$0xf]
  %v287 = vld [vmem:[%s1 + $0x16c] sm:$0xf]
  %v288 = vld [vmem:[%s1 + $0x170] sm:$0xf]
  %v289 = vld [vmem:[%s1 + $0x174] sm:$0xf]
  %v290 = vld [vmem:[%s1 + $0x178] sm:$0xf]
  %v291 = vld [vmem:[%s1 + $0x17c] sm:$0xf]
  %v292 = vld [vmem:[%s1 + $0x180] sm:$0xf]
  %v293 = vld [vmem:[%s1 + $0x184] sm:$0xf]
  %v294 = vld [vmem:[%s1 + $0x188] sm:$0xf]
  %v295 = vld [vmem:[%s1 + $0x18c] sm:$0xf]
  %v296 = vld [vmem:[%s1 + $0x190] sm:$0xf]
  %v297 = vld [vmem:[%s1 + $0x194] sm:$0xf]
  %v298 = vld [vmem:[%s1 + $0x198] sm:$0xf]
  %v299 = vld [vmem:[%s1 + $0x19c] sm:$0xf]
  %v300 = vld [vmem:[%s1 + $0x1a0] sm:$0xf]
  %v301 = vld [vmem:[%s1 + $0x1a4] sm:$0xf]
  %v302 = vld [vmem:[%s1 + $0x1a8] sm:$0xf]
  %v303 = vld [vmem:[%s1 + $0x1ac] sm:$0xf]
  %v304 = vld [vmem:[%s1 + $0x1b0] sm:$0xf]
  %v305 = vld [vmem:[%s1 + $0x1b4] sm:$0xf]
  %v306 = vld [vmem:[%s1 + $0x1b8] sm:$0xf]
  %v307 = vld [vmem:[%s1 + $0x1bc] sm:$0xf]
  %v308 = vld [vmem:[%s1 + $0x1c0] sm:$0xf]
  %v309 = vld [vmem:[%s1 + $0x1c4] sm:$0xf]
  %v310 = vld [vmem:[%s1 + $0x1c8] sm:$0xf]
  %v311 = vld [vmem:[%s1 + $0x1cc] sm:$0xf]
  %v312 = vld [vmem:[%s1 + $0x1d0] sm:$0xf]
  %v313 = vld [vmem:[%s1 + $0x1d4] sm:$0xf]
  %v314 = vld [vmem:[%s1 + $0x1d8] sm:$0xf]
  %v315 = vld [vmem:[%s1 + $0x1dc] sm:$0xf]
  %v316 = vld [vmem:[%s1 + $0x1e0] sm:$0xf]
  %v317 = vld [vmem:[%s1 + $0x1e4] sm:$0xf]
  %v318 = vld [vmem:[%s1 + $0x1e8] sm:$0xf]
  %v319 = vld [vmem:[%s1 + $0x1ec] sm:$0xf]
  %v320 = vld [vmem:[%s1 + $0x1f0] sm:$0xf]
  %v321 = vld [vmem:[%s1 + $0x1f4] sm:$0xf]
  %v322 = vld [vmem:[%s1 + $0x1f8] sm:$0xf]
  %v323 = vld [vmem:[%s1 + $0x1fc] sm:$0xf]
  %v324 = vld [vmem:[%s1 + $0x200] sm:$0xf]
  %v325 = vld [vmem:[%s1 + $0x204] sm:$0xf]
  %v326 = vld [vmem:[%s1 + $0x208] sm:$0xf]
  %v327 = vld [vmem:[%s1 + $0x20c] sm:$0xf]
  %v328 = vld [vmem:[%s1 + $0x210] sm:$0xf]
  %v329 = vld [vmem:[%s1 + $0x214] sm:$0xf]
  %v330 = vld [vmem:[%s1 + $0x218] sm:$0xf]
  %v331 = vld [vmem:[%s1 + $0x21c] sm:$0xf]
  %v332 = vld [vmem:[%s1 + $0x220] sm:$0xf]
  %v333 = vld [vmem:[%s1 + $0x224] sm:$0xf]
  %v334 = vld [vmem:[%s1 + $0x228] sm:$0xf]
  %v335 = vld [vmem:[%s1 + $0x22c] sm:$0xf]
  %v336 = vld [vmem:[%s1 + $0x230] sm:$0xf]
  %v337 = vld [vmem:[%s1 + $0x234] sm:$0xf]
  %v338 = vld [vmem:[%s1 + $0x238] sm:$0xf]
  %v339 = vld [vmem:[%s1 + $0x23c] sm:$0xf]
  %v340 = vld [vmem:[%s1 + $0x240] sm:$0xf]
  %v341 = vld [vmem:[%s1 + $0x244] sm:$0xf]
  %v342 = vld [vmem:[%s1 + $0x248] sm:$0xf]
  %v343 = vld [vmem:[%s1 + $0x24c] sm:$0xf]
  %v344 = vld [vmem:[%s1 + $0x250] sm:$0xf]
  %v345 = vld [vmem:[%s1 + $0x254] sm:$0xf]
  %v346 = vld [vmem:[%s1 + $0x258] sm:$0xf]
  %v347 = vld [vmem:[%s1 + $0x25c] sm:$0xf]
  %v348 = vld [vmem:[%s1 + $0x260] sm:$0xf]
  %v349 = vld [vmem:[%s1 + $0x264] sm:$0xf]
  %v350 = vld [vmem:[%s1 + $0x268] sm:$0xf]
  %v351 = vld [vmem:[%s1 + $0x26c] sm:$0xf]
  %v352 = vld [vmem:[%s1 + $0x270] sm:$0xf]
  %v353 = vld [vmem:[%s1 + $0x274] sm:$0xf]
  %v354 = vld [vmem:[%s1 + $0x278] sm:$0xf]
  %v355 = vld [vmem:[%s1 + $0x27c] sm:$0xf]
  %v356 = vld [vmem:[%s1 + $0x280] sm:$0xf]
  %v357 = vld [vmem:[%s1 + $0x284] sm:$0xf]
  %v358 = vld [vmem:[%s1 + $0x288] sm:$0xf]
  %v359 = vld [vmem:[%s1 + $0x28c] sm:$0xf]
  %v360 = vld [vmem:[%s1 + $0x290] sm:$0xf]
  %v361 = vld [vmem:[%s1 + $0x294] sm:$0xf]
  %v362 = vld [vmem:[%s1 + $0x298] sm:$0xf]
  %v363 = vld [vmem:[%s1 + $0x29c] sm:$0xf]
  %v364 = vld [vmem:[%s1 + $0x2a0] sm:$0xf]
  %v365 = vld [vmem:[%s1 + $0x2a4] sm:$0xf]
  %v366 = vld [vmem:[%s1 + $0x2a8] sm:$0xf]
  %v367 = vld [vmem:[%s1 + $0x2ac] sm:$0xf]
  %v368 = vld [vmem:[%s1 + $0x2b0] sm:$0xf]
  %v369 = vld [vmem:[%s1 + $0x2b4] sm:$0xf]
  %v370 = vld [vmem:[%s1 + $0x2b8] sm:$0xf]
  %v371 = vld [vmem:[%s1 + $0x2bc] sm:$0xf]
  %v372 = vld [vmem:[%s1 + $0x2c0] sm:$0xf]
  %v373 = vld [vmem:[%s1 + $0x2c4] sm:$0xf]
  %v374 = vld [vmem:[%s1 + $0x2c8] sm:$0xf]
  %v375 = vld [vmem:[%s1 + $0x2cc] sm:$0xf]
  %v376 = vld [vmem:[%s1 + $0x2d0] sm:$0xf]
  %v377 = vld [vmem:[%s1 + $0x2d4] sm:$0xf]
  %v378 = vld [vmem:[%s1 + $0x2d8] sm:$0xf]
  %v379 = vld [vmem:[%s1 + $0x2dc] sm:$0xf]
  %v380 = vld [vmem:[%s1 + $0x2e0] sm:$0xf]
  %v381 = vld [vmem:[%s1 + $0x2e4] sm:$0xf]
  %v382 = vld [vmem:[%s1 + $0x2e8] sm:$0xf]
  %v383 = vld [vmem:[%s1 + $0x2ec] sm:$0xf]
  %v384 = vld [vmem:[%s1 + $0x2f0] sm:$0xf]
  %v385 = vld [vmem:[%s1 + $0x2f4] sm:$0xf]
  %v386 = vld [vmem:[%s1 + $0x2f8] sm:$0xf]
  %v387 = vld [vmem:[%s1 + $0x2fc] sm:$0xf]
  %v388 = vld [vmem:[%s1 + $0x300] sm:$0xf]
  %v389 = vld [vmem:[%s1 + $0x304] sm:$0xf]
  %v390 = vld [vmem:[%s1 + $0x308] sm:$0xf]
  %v391 = vld [vmem:[%s1 + $0x30c] sm:$0xf]
  %v392 = vld [vmem:[%s1 + $0x310] sm:$0xf]
  %v393 = vld [vmem:[%s1 + $0x314] sm:$0xf]
  %v394 = vld [vmem:[%s1 + $0x318] sm:$0xf]
  %v395 = vld [vmem:[%s1 + $0x31c] sm:$0xf]
  %v396 = vld [vmem:[%s1 + $0x320] sm:$0xf]
  %v397 = vld [vmem:[%s1 + $0x324] sm:$0xf]
  %v398 = vld [vmem:[%s1 + $0x328] sm:$0xf]
  %v399 = vld [vmem:[%s1 + $0x32c] sm:$0xf]
  %v400 = vld [vmem:[%s1 + $0x330] sm:$0xf]
  %v401 = vld [vmem:[%s1 + $0x334] sm:$0xf]
  %v402 = vld [vmem:[%s1 + $0x338] sm:$0xf]
  %v403 = vld [vmem:[%s1 + $0x33c] sm:$0xf]
  %v404 = vld [vmem:[%s1 + $0x340] sm:$0xf]
  %v405 = vld [vmem:[%s1 + $0x344] sm:$0xf]
  %v406 = vld [vmem:[%s1 + $0x348] sm:$0xf]
  %v407 = vld [vmem:[%s1 + $0x34c] sm:$0xf]
  %v408 = vld [vmem:[%s1 + $0x350] sm:$0xf]
  %v409 = vld [vmem:[%s1 + $0x354] sm:$0xf]
  %v410 = vld [vmem:[%s1 + $0x358] sm:$0xf]
  %v411 = vld [vmem:[%s1 + $0x35c] sm:$0xf]
  %v412 = vld [vmem:[%s1 + $0x360] sm:$0xf]
  %v413 = vld [vmem:[%s1 + $0x364] sm:$0xf]
  %v414 = vld [vmem:[%s1 + $0x368] sm:$0xf]
  %v415 = vld [vmem:[%s1 + $0x36c] sm:$0xf]
  %v416 = vld [vmem:[%s1 + $0x370] sm:$0xf]
  %v417 = vld [vmem:[%s1 + $0x374] sm:$0xf]
  %v418 = vld [vmem:[%s1 + $0x378] sm:$0xf]
  %v419 = vld [vmem:[%s1 + $0x37c] sm:$0xf]
  %v420 = vld [vmem:[%s1 + $0x380] sm:$0xf]
  %v421 = vld [vmem:[%s1 + $0x384] sm:$0xf]
  %v422 = vld [vmem:[%s1 + $0x388] sm:$0xf]
  %v423 = vld [vmem:[%s1 + $0x38c] sm:$0xf]
  %v424 = vld [vmem:[%s1 + $0x390] sm:$0xf]
  %v425 = vld [vmem:[%s1 + $0x394] sm:$0xf]
  %v426 = vld [vmem:[%s1 + $0x398] sm:$0xf]
  %v427 = vld [vmem:[%s1 + $0x39c] sm:$0xf]
  %v428 = vld [vmem:[%s1 + $0x3a0] sm:$0xf]
  %v429 = vld [vmem:[%s1 + $0x3a4] sm:$0xf]
  %v430 = vld [vmem:[%s1 + $0x3a8] sm:$0xf]
  %v431 = vld [vmem:[%s1 + $0x3ac] sm:$0xf]
  %v432 = vld [vmem:[%s1 + $0x3b0] sm:$0xf]
  %v433 = vld [vmem:[%s1 + $0x3b4] sm:$0xf]
  %v434 = vld [vmem:[%s1 + $0x3b8] sm:$0xf]
  %v435 = vld [vmem:[%s1 + $0x3bc] sm:$0xf]
  %v436 = vld [vmem:[%s1 + $0x3c0] sm:$0xf]
  %v437 = vld [vmem:[%s1 + $0x3c4] sm:$0xf]
  %v438 = vld [vmem:[%s1 + $0x3c8] sm:$0xf]
  %v439 = vld [vmem:[%s1 + $0x3cc] sm:$0xf]
  %v440 = vld [vmem:[%s1 + $0x3d0] sm:$0xf]
  %v441 = vld [vmem:[%s1 + $0x3d4] sm:$0xf]
  %v442 = vld [vmem:[%s1 + $0x3d8] sm:$0xf]
  %v443 = vld [vmem:[%s1 + $0x3dc] sm:$0xf]
  %v444 = vld [vmem:[%s1 + $0x3e0] sm:$0xf]
  %v445 = vld [vmem:[%s1 + $0x3e4] sm:$0xf]
  %v446 = vld [vmem:[%s1 + $0x3e8] sm:$0xf]
  %v447 = vld [vmem:[%s1 + $0x3ec] sm:$0xf]
  %v448 = vld [vmem:[%s1 + $0x3f0] sm:$0xf]
  %v449 = vld [vmem:[%s1 + $0x3f4] sm:$0xf]
  %v450 = vld [vmem:[%s1 + $0x3f8] sm:$0xf]
  %v451 = vld [vmem:[%s1 + $0x3fc] sm:$0xf]
  %v452 = vld [vmem:[%s1 + $0x400] sm:$0xf]
  %v453 = vld [vmem:[%s1 + $0x404] sm:$0xf]
  %v454 = vld [vmem:[%s1 + $0x408] sm:$0xf]
  %v455 = vld [vmem:[%s1 + $0x40c] sm:$0xf]
  %v456 = vld [vmem:[%s1 + $0x410] sm:$0xf]
  %v457 = vld [vmem:[%s1 + $0x414] sm:$0xf]
  %v458 = vld [vmem:[%s1 + $0x418] sm:$0xf]
  %v459 = vld [vmem:[%s1 + $0x41c] sm:$0xf]
  %v460 = vld [vmem:[%s1 + $0x420] sm:$0xf]
  %v461 = vld [vmem:[%s1 + $0x424] sm:$0xf]
  %v462 = vld [vmem:[%s1 + $0x428] sm:$0xf]
  %v463 = vld [vmem:[%s1 + $0x42c] sm:$0xf]
  %v464 = vld [vmem:[%s1 + $0x430] sm:$0xf]
  %v465 = vld [vmem:[%s1 + $0x434] sm:$0xf]
  %v466 = vld [vmem:[%s1 + $0x438] sm:$0xf]
  %v467 = vld [vmem:[%s1 + $0x43c] sm:$0xf]
  %v468 = vld [vmem:[%s1 + $0x440] sm:$0xf]
  %v469 = vld [vmem:[%s1 + $0x444] sm:$0xf]
  %v470 = vld [vmem:[%s1 + $0x448] sm:$0xf]
  %v471 = vld [vmem:[%s1 + $0x44c] sm:$0xf]
  %v472 = vld [vmem:[%s1 + $0x450] sm:$0xf]
  %v473 = vld [vmem:[%s1 + $0x454] sm:$0xf]
  %v474 = vld [vmem:[%s1 + $0x458] sm:$0xf]
  %v475 = vld [vmem:[%s1 + $0x45c] sm:$0xf]
  %v476 = vld [vmem:[%s1 + $0x460] sm:$0xf]
  %v477 = vld [vmem:[%s1 + $0x464] sm:$0xf]
  %v478 = vld [vmem:[%s1 + $0x468] sm:$0xf]
  %v479 = vld [vmem:[%s1 + $0x46c] sm:$0xf]
  %v480 = vld [vmem:[%s1 + $0x470] sm:$0xf]
  %v481 = vld [vmem:[%s1 + $0x474] sm:$0xf]
  %v482 = vld [vmem:[%s1 + $0x478] sm:$0xf]
  %v483 = vld [vmem:[%s1 + $0x47c] sm:$0xf]
  %v484 = vld [vmem:[%s1 + $0x480] sm:$0xf]
  %v485 = vld [vmem:[%s1 + $0x484] sm:$0xf]
  %v486 = vld [vmem:[%s1 + $0x488] sm:$0xf]
  %v487 = vld [vmem:[%s1 + $0x48c] sm:$0xf]
  %v488 = vld [vmem:[%s1 + $0x490] sm:$0xf]
  %v489 = vld [vmem:[%s1 + $0x494] sm:$0xf]
  %v490 = vld [vmem:[%s1 + $0x498] sm:$0xf]
  %v491 = vld [vmem:[%s1 + $0x49c] sm:$0xf]
  %v492 = vld [vmem:[%s1 + $0x4a0] sm:$0xf]
  %v493 = vld [vmem:[%s1 + $0x4a4] sm:$0xf]
  %v494 = vld [vmem:[%s1 + $0x4a8] sm:$0xf]
  %v495 = vld [vmem:[%s1 + $0x4ac] sm:$0xf]
  %v496 = vld [vmem:[%s1 + $0x4b0] sm:$0xf]
  %v497 = vld [vmem:[%s1 + $0x4b4] sm:$0xf]
  %v498 = vld [vmem:[%s1 + $0x4b8] sm:$0xf]
  %v499 = vld [vmem:[%s1 + $0x4bc] sm:$0xf]
  %v500 = vld [vmem:[%s1 + $0x4c0] sm:$0xf]
  %v501 = vld [vmem:[%s1 + $0x4c4] sm:$0xf]
  %v502 = vld [vmem:[%s1 + $0x4c8] sm:$0xf]
  %v503 = vld [vmem:[%s1 + $0x4cc] sm:$0xf]
  %v504 = vld [vmem:[%s1 + $0x4d0] sm:$0xf]
  %v505 = vld [vmem:[%s1 + $0x4d4] sm:$0xf]
  %v506 = vld [vmem:[%s1 + $0x4d8] sm:$0xf]
  %v507 = vld [vmem:[%s1 + $0x4dc] sm:$0xf]
  %v508 = vld [vmem:[%s1 + $0x4e0] sm:$0xf]
  %v509 = vld [vmem:[%s1 + $0x4e4] sm:$0xf]
  %v510 = vld [vmem:[%s1 + $0x4e8] sm:$0xf]
  %v511 = vld [vmem:[%s1 + $0x4ec] sm:$0xf]
  %v512 = vld [vmem:[%s1 + $0x4f0] sm:$0xf]
  %v513 = vld [vmem:[%s1 + $0x4f4] sm:$0xf]
  %v514 = vld [vmem:[%s1 + $0x4f8] sm:$0xf]
  %v515 = vld [vmem:[%s1 + $0x4fc] sm:$0xf]
  %v516 = vld [vmem:[%s1 + $0x500] sm:$0xf]
  %v517 = vld [vmem:[%s1 + $0x504] sm:$0xf]
  %v518 = vld [vmem:[%s1 + $0x508] sm:$0xf]
  %v519 = vld [vmem:[%s1 + $0x50c] sm:$0xf]
  %v520 = vld [vmem:[%s1 + $0x510] sm:$0xf]
  %v521 = vld [vmem:[%s1 + $0x514] sm:$0xf]
  %v522 = vld [vmem:[%s1 + $0x518] sm:$0xf]
  %v523 = vld [vmem:[%s1 + $0x51c] sm:$0xf]
  %v524 = vld [vmem:[%s1 + $0x520] sm:$0xf]
  %v525 = vld [vmem:[%s1 + $0x524] sm:$0xf]
  %v526 = vld [vmem:[%s1 + $0x528] sm:$0xf]
  %v527 = vld [vmem:[%s1 + $0x52c] sm:$0xf]
  %v528 = vld [vmem:[%s1 + $0x530] sm:$0xf]
  %v529 = vld [vmem:[%s1 + $0x534] sm:$0xf]
  %v530 = vld [vmem:[%s1 + $0x538] sm:$0xf]
  %v531 = vld [vmem:[%s1 + $0x53c] sm:$0xf]
  %v532 = vld [vmem:[%s1 + $0x540] sm:$0xf]
  %v533 = vld [vmem:[%s1 + $0x544] sm:$0xf]
  %v534 = vld [vmem:[%s1 + $0x548] sm:$0xf]
  %v535 = vld [vmem:[%s1 + $0x54c] sm:$0xf]
  %v536 = vld [vmem:[%s1 + $0x550] sm:$0xf]
  %v537 = vld [vmem:[%s1 + $0x554] sm:$0xf]
  %v538 = vld [vmem:[%s1 + $0x558] sm:$0xf]
  %v539 = vld [vmem:[%s1 + $0x55c] sm:$0xf]
  %v540 = vld [vmem:[%s1 + $0x560] sm:$0xf]
  %v541 = vld [vmem:[%s1 + $0x564] sm:$0xf]
  %v542 = vld [vmem:[%s1 + $0x568] sm:$0xf]
  %v543 = vld [vmem:[%s1 + $0x56c] sm:$0xf]
  %v544 = vld [vmem:[%s1 + $0x570] sm:$0xf]
  %v545 = vld [vmem:[%s1 + $0x574] sm:$0xf]
  %v546 = vld [vmem:[%s1 + $0x578] sm:$0xf]
  %v547 = vld [vmem:[%s1 + $0x57c] sm:$0xf]
  %v548 = vld [vmem:[%s1 + $0x580] sm:$0xf]
  %v549 = vld [vmem:[%s1 + $0x584] sm:$0xf]
  %v550 = vld [vmem:[%s1 + $0x588] sm:$0xf]
  %v551 = vld [vmem:[%s1 + $0x58c] sm:$0xf]
  %v552 = vld [vmem:[%s1 + $0x590] sm:$0xf]
  %v553 = vld [vmem:[%s1 + $0x594] sm:$0xf]
  %v554 = vld [vmem:[%s1 + $0x598] sm:$0xf]
  %v555 = vld [vmem:[%s1 + $0x59c] sm:$0xf]
  %v556 = vld [vmem:[%s1 + $0x5a0] sm:$0xf]
  %v557 = vld [vmem:[%s1 + $0x5a4] sm:$0xf]
  %v558 = vld [vmem:[%s1 + $0x5a8] sm:$0xf]
  %v559 = vld [vmem:[%s1 + $0x5ac] sm:$0xf]
  %v560 = vld [vmem:[%s1 + $0x5b0] sm:$0xf]
  %v561 = vld [vmem:[%s1 + $0x5b4] sm:$0xf]
  %v562 = vld [vmem:[%s1 + $0x5b8] sm:$0xf]
  %v563 = vld [vmem:[%s1 + $0x5bc] sm:$0xf]
  %v564 = vld [vmem:[%s1 + $0x5c0] sm:$0xf]
  %v565 = vld [vmem:[%s1 + $0x5c4] sm:$0xf]
  %v566 = vld [vmem:[%s1 + $0x5c8] sm:$0xf]
  %v567 = vld [vmem:[%s1 + $0x5cc] sm:$0xf]
  %v568 = vld [vmem:[%s1 + $0x5d0] sm:$0xf]
  %v569 = vld [vmem:[%s1 + $0x5d4] sm:$0xf]
  %v570 = vld [vmem:[%s1 + $0x5d8] sm:$0xf]
  %v571 = vld [vmem:[%s1 + $0x5dc] sm:$0xf]
  %v572 = vld [vmem:[%s1 + $0x5e0] sm:$0xf]
  %v573 = vld [vmem:[%s1 + $0x5e4] sm:$0xf]
  %v574 = vld [vmem:[%s1 + $0x5e8] sm:$0xf]
  %v575 = vld [vmem:[%s1 + $0x5ec] sm:$0xf]
  %v576 = vld [vmem:[%s1 + $0x5f0] sm:$0xf]
  %v577 = vld [vmem:[%s1 + $0x5f4] sm:$0xf]
  %v578 = vld [vmem:[%s1 + $0x5f8] sm:$0xf]
  %v579 = vld [vmem:[%s1 + $0x5fc] sm:$0xf]
  %v580 = vld [vmem:[%s2] sm:$0x1]
  %v582 = vperm.slane %v580, 0
  %v752 = vunpack.c.l.b16 %v28
  %v753 = vunpack.c.h.b16 %v28
  %v754 = vunpack.c.l.b16 %v29
  %v755 = vunpack.c.h.b16 %v29
  %v756 = vunpack.c.l.b16 %v30
  %v757 = vunpack.c.h.b16 %v30
  %v758 = vunpack.c.l.b16 %v31
  %v759 = vunpack.c.h.b16 %v31
  %v760 = vunpack.c.l.b16 %v32
  %v761 = vunpack.c.h.b16 %v32
  %v762 = vunpack.c.l.b16 %v33
  %v763 = vunpack.c.h.b16 %v33
  %v764 = vunpack.c.l.b16 %v34
  %v765 = vunpack.c.h.b16 %v34
  %v766 = vunpack.c.l.b16 %v35
  %v767 = vunpack.c.h.b16 %v35
  %v768 = vunpack.c.l.b16 %v36
  %v769 = vunpack.c.h.b16 %v36
  %v770 = vunpack.c.l.b16 %v37
  %v771 = vunpack.c.h.b16 %v37
  %v772 = vunpack.c.l.b16 %v38
  %v773 = vunpack.c.h.b16 %v38
  %v774 = vunpack.c.l.b16 %v39
  %v775 = vunpack.c.h.b16 %v39
  %v776 = vunpack.c.l.b16 %v40
  %v777 = vunpack.c.h.b16 %v40
  %v778 = vunpack.c.l.b16 %v41
  %v779 = vunpack.c.h.b16 %v41
  %v780 = vunpack.c.l.b16 %v42
  %v781 = vunpack.c.h.b16 %v42
  %v782 = vunpack.c.l.b16 %v43
  %v783 = vunpack.c.h.b16 %v43
  %v784 = vunpack.c.l.b16 %v44
  %v785 = vunpack.c.h.b16 %v44
  %v786 = vunpack.c.l.b16 %v45
  %v787 = vunpack.c.h.b16 %v45
  %v788 = vunpack.c.l.b16 %v46
  %v789 = vunpack.c.h.b16 %v46
  %v790 = vunpack.c.l.b16 %v47
  %v791 = vunpack.c.h.b16 %v47
  %v792 = vunpack.c.l.b16 %v48
  %v793 = vunpack.c.h.b16 %v48
  %v794 = vunpack.c.l.b16 %v49
  %v795 = vunpack.c.h.b16 %v49
  %v796 = vunpack.c.l.b16 %v50
  %v797 = vunpack.c.h.b16 %v50
  %v798 = vunpack.c.l.b16 %v51
  %v799 = vunpack.c.h.b16 %v51
  %v800 = vunpack.c.l.b16 %v52
  %v801 = vunpack.c.h.b16 %v52
  %v802 = vunpack.c.l.b16 %v53
  %v803 = vunpack.c.h.b16 %v53
  %v804 = vunpack.c.l.b16 %v54
  %v805 = vunpack.c.h.b16 %v54
  %v806 = vunpack.c.l.b16 %v55
  %v807 = vunpack.c.h.b16 %v55
  %v808 = vunpack.c.l.b16 %v56
  %v809 = vunpack.c.h.b16 %v56
  %v810 = vunpack.c.l.b16 %v57
  %v811 = vunpack.c.h.b16 %v57
  %v812 = vunpack.c.l.b16 %v58
  %v813 = vunpack.c.h.b16 %v58
  %v814 = vunpack.c.l.b16 %v59
  %v815 = vunpack.c.h.b16 %v59
  %v816 = vunpack.c.l.b16 %v60
  %v817 = vunpack.c.h.b16 %v60
  %v818 = vunpack.c.l.b16 %v61
  %v819 = vunpack.c.h.b16 %v61
  %v820 = vunpack.c.l.b16 %v62
  %v821 = vunpack.c.h.b16 %v62
  %v822 = vunpack.c.l.b16 %v63
  %v823 = vunpack.c.h.b16 %v63
  %v824 = vunpack.c.l.b16 %v64
  %v825 = vunpack.c.h.b16 %v64
  %v826 = vunpack.c.l.b16 %v65
  %v827 = vunpack.c.h.b16 %v65
  %v828 = vunpack.c.l.b16 %v66
  %v829 = vunpack.c.h.b16 %v66
  %v830 = vunpack.c.l.b16 %v67
  %v831 = vunpack.c.h.b16 %v67
  %v832 = vunpack.c.l.b16 %v68
  %v833 = vunpack.c.h.b16 %v68
  %v834 = vunpack.c.l.b16 %v69
  %v835 = vunpack.c.h.b16 %v69
  %v836 = vunpack.c.l.b16 %v70
  %v837 = vunpack.c.h.b16 %v70
  %v838 = vunpack.c.l.b16 %v71
  %v839 = vunpack.c.h.b16 %v71
  %v840 = vunpack.c.l.b16 %v72
  %v841 = vunpack.c.h.b16 %v72
  %v842 = vunpack.c.l.b16 %v73
  %v843 = vunpack.c.h.b16 %v73
  %v844 = vunpack.c.l.b16 %v74
  %v845 = vunpack.c.h.b16 %v74
  %v846 = vunpack.c.l.b16 %v75
  %v847 = vunpack.c.h.b16 %v75
  %v848 = vunpack.c.l.b16 %v76
  %v849 = vunpack.c.h.b16 %v76
  %v850 = vunpack.c.l.b16 %v77
  %v851 = vunpack.c.h.b16 %v77
  %v852 = vunpack.c.l.b16 %v78
  %v853 = vunpack.c.h.b16 %v78
  %v854 = vunpack.c.l.b16 %v79
  %v855 = vunpack.c.h.b16 %v79
  %v856 = vunpack.c.l.b16 %v80
  %v857 = vunpack.c.h.b16 %v80
  %v858 = vunpack.c.l.b16 %v81
  %v859 = vunpack.c.h.b16 %v81
  %v860 = vunpack.c.l.b16 %v82
  %v861 = vunpack.c.h.b16 %v82
  %v862 = vunpack.c.l.b16 %v83
  %v863 = vunpack.c.h.b16 %v83
  %v864 = vunpack.c.l.b16 %v84
  %v865 = vunpack.c.h.b16 %v84
  %v866 = vunpack.c.l.b16 %v85
  %v867 = vunpack.c.h.b16 %v85
  %v868 = vunpack.c.l.b16 %v86
  %v869 = vunpack.c.h.b16 %v86
  %v870 = vunpack.c.l.b16 %v87
  %v871 = vunpack.c.h.b16 %v87
  %v872 = vunpack.c.l.b16 %v88
  %v873 = vunpack.c.h.b16 %v88
  %v874 = vunpack.c.l.b16 %v89
  %v875 = vunpack.c.h.b16 %v89
  %v876 = vunpack.c.l.b16 %v90
  %v877 = vunpack.c.h.b16 %v90
  %v878 = vunpack.c.l.b16 %v91
  %v879 = vunpack.c.h.b16 %v91
  %v880 = vunpack.c.l.b16 %v92
  %v881 = vunpack.c.h.b16 %v92
  %v882 = vunpack.c.l.b16 %v93
  %v883 = vunpack.c.h.b16 %v93
  %v884 = vunpack.c.l.b16 %v94
  %v885 = vunpack.c.h.b16 %v94
  %v886 = vunpack.c.l.b16 %v95
  %v887 = vunpack.c.h.b16 %v95
  %v888 = vunpack.c.l.b16 %v96
  %v889 = vunpack.c.h.b16 %v96
  %v890 = vunpack.c.l.b16 %v97
  %v891 = vunpack.c.h.b16 %v97
  %v892 = vunpack.c.l.b16 %v98
  %v893 = vunpack.c.h.b16 %v98
  %v894 = vunpack.c.l.b16 %v99
  %v895 = vunpack.c.h.b16 %v99
  %v896 = vunpack.c.l.b16 %v100
  %v897 = vunpack.c.h.b16 %v100
  %v898 = vunpack.c.l.b16 %v101
  %v899 = vunpack.c.h.b16 %v101
  %v900 = vunpack.c.l.b16 %v102
  %v901 = vunpack.c.h.b16 %v102
  %v902 = vunpack.c.l.b16 %v103
  %v903 = vunpack.c.h.b16 %v103
  %v904 = vunpack.c.l.b16 %v104
  %v905 = vunpack.c.h.b16 %v104
  %v906 = vunpack.c.l.b16 %v105
  %v907 = vunpack.c.h.b16 %v105
  %v908 = vunpack.c.l.b16 %v106
  %v909 = vunpack.c.h.b16 %v106
  %v910 = vunpack.c.l.b16 %v107
  %v911 = vunpack.c.h.b16 %v107
  %v912 = vunpack.c.l.b16 %v108
  %v913 = vunpack.c.h.b16 %v108
  %v914 = vunpack.c.l.b16 %v109
  %v915 = vunpack.c.h.b16 %v109
  %v916 = vunpack.c.l.b16 %v110
  %v917 = vunpack.c.h.b16 %v110
  %v918 = vunpack.c.l.b16 %v111
  %v919 = vunpack.c.h.b16 %v111
  %v920 = vunpack.c.l.b16 %v112
  %v921 = vunpack.c.h.b16 %v112
  %v922 = vunpack.c.l.b16 %v113
  %v923 = vunpack.c.h.b16 %v113
  %v924 = vunpack.c.l.b16 %v114
  %v925 = vunpack.c.h.b16 %v114
  %v926 = vunpack.c.l.b16 %v115
  %v927 = vunpack.c.h.b16 %v115
  %v928 = vunpack.c.l.b16 %v116
  %v929 = vunpack.c.h.b16 %v116
  %v930 = vunpack.c.l.b16 %v117
  %v931 = vunpack.c.h.b16 %v117
  %v932 = vunpack.c.l.b16 %v118
  %v933 = vunpack.c.h.b16 %v118
  %v934 = vunpack.c.l.b16 %v119
  %v935 = vunpack.c.h.b16 %v119
  %v936 = vunpack.c.l.b16 %v120
  %v937 = vunpack.c.h.b16 %v120
  %v938 = vunpack.c.l.b16 %v121
  %v939 = vunpack.c.h.b16 %v121
  %v940 = vunpack.c.l.b16 %v122
  %v941 = vunpack.c.h.b16 %v122
  %v942 = vunpack.c.l.b16 %v123
  %v943 = vunpack.c.h.b16 %v123
  %v944 = vunpack.c.l.b16 %v124
  %v945 = vunpack.c.h.b16 %v124
  %v946 = vunpack.c.l.b16 %v125
  %v947 = vunpack.c.h.b16 %v125
  %v948 = vunpack.c.l.b16 %v126
  %v949 = vunpack.c.h.b16 %v126
  %v950 = vunpack.c.l.b16 %v127
  %v951 = vunpack.c.h.b16 %v127
  %v952 = vunpack.c.l.b16 %v128
  %v953 = vunpack.c.h.b16 %v128
  %v954 = vunpack.c.l.b16 %v129
  %v955 = vunpack.c.h.b16 %v129
  %v956 = vunpack.c.l.b16 %v130
  %v957 = vunpack.c.h.b16 %v130
  %v958 = vunpack.c.l.b16 %v131
  %v959 = vunpack.c.h.b16 %v131
  %v960 = vunpack.c.l.b16 %v132
  %v961 = vunpack.c.h.b16 %v132
  %v962 = vunpack.c.l.b16 %v133
  %v963 = vunpack.c.h.b16 %v133
  %v964 = vunpack.c.l.b16 %v134
  %v965 = vunpack.c.h.b16 %v134
  %v966 = vunpack.c.l.b16 %v135
  %v967 = vunpack.c.h.b16 %v135
  %v968 = vunpack.c.l.b16 %v136
  %v969 = vunpack.c.h.b16 %v136
  %v970 = vunpack.c.l.b16 %v137
  %v971 = vunpack.c.h.b16 %v137
  %v972 = vunpack.c.l.b16 %v138
  %v973 = vunpack.c.h.b16 %v138
  %v974 = vunpack.c.l.b16 %v139
  %v975 = vunpack.c.h.b16 %v139
  %v976 = vunpack.c.l.b16 %v140
  %v977 = vunpack.c.h.b16 %v140
  %v978 = vunpack.c.l.b16 %v141
  %v979 = vunpack.c.h.b16 %v141
  %v980 = vunpack.c.l.b16 %v142
  %v981 = vunpack.c.h.b16 %v142
  %v982 = vunpack.c.l.b16 %v143
  %v983 = vunpack.c.h.b16 %v143
  %v984 = vunpack.c.l.b16 %v144
  %v985 = vunpack.c.h.b16 %v144
  %v986 = vunpack.c.l.b16 %v145
  %v987 = vunpack.c.h.b16 %v145
  %v988 = vunpack.c.l.b16 %v146
  %v989 = vunpack.c.h.b16 %v146
  %v990 = vunpack.c.l.b16 %v147
  %v991 = vunpack.c.h.b16 %v147
  %v992 = vunpack.c.l.b16 %v148
  %v993 = vunpack.c.h.b16 %v148
  %v994 = vunpack.c.l.b16 %v149
  %v995 = vunpack.c.h.b16 %v149
  %v996 = vunpack.c.l.b16 %v150
  %v997 = vunpack.c.h.b16 %v150
  %v998 = vunpack.c.l.b16 %v151
  %v999 = vunpack.c.h.b16 %v151
  %v1000 = vunpack.c.l.b16 %v152
  %v1001 = vunpack.c.h.b16 %v152
  %v1002 = vunpack.c.l.b16 %v153
  %v1003 = vunpack.c.h.b16 %v153
  %v1004 = vunpack.c.l.b16 %v154
  %v1005 = vunpack.c.h.b16 %v154
  %v1006 = vunpack.c.l.b16 %v155
  %v1007 = vunpack.c.h.b16 %v155
  %v1008 = vunpack.c.l.b16 %v156
  %v1009 = vunpack.c.h.b16 %v156
  %v1010 = vunpack.c.l.b16 %v157
  %v1011 = vunpack.c.h.b16 %v157
  %v1012 = vunpack.c.l.b16 %v158
  %v1013 = vunpack.c.h.b16 %v158
  %v1014 = vunpack.c.l.b16 %v159
  %v1015 = vunpack.c.h.b16 %v159
  %v1016 = vunpack.c.l.b16 %v160
  %v1017 = vunpack.c.h.b16 %v160
  %v1018 = vunpack.c.l.b16 %v161
  %v1019 = vunpack.c.h.b16 %v161
  %v1020 = vunpack.c.l.b16 %v162
  %v1021 = vunpack.c.h.b16 %v162
  %v1022 = vunpack.c.l.b16 %v163
  %v1023 = vunpack.c.h.b16 %v163
  %v1024 = vunpack.c.l.b16 %v164
  %v1025 = vunpack.c.h.b16 %v164
  %v1026 = vunpack.c.l.b16 %v165
  %v1027 = vunpack.c.h.b16 %v165
  %v1028 = vunpack.c.l.b16 %v166
  %v1029 = vunpack.c.h.b16 %v166
  %v1030 = vunpack.c.l.b16 %v167
  %v1031 = vunpack.c.h.b16 %v167
  %v1032 = vunpack.c.l.b16 %v168
  %v1033 = vunpack.c.h.b16 %v168
  %v1034 = vunpack.c.l.b16 %v169
  %v1035 = vunpack.c.h.b16 %v169
  %v1036 = vunpack.c.l.b16 %v170
  %v1037 = vunpack.c.h.b16 %v170
  %v1038 = vunpack.c.l.b16 %v171
  %v1039 = vunpack.c.h.b16 %v171
  %v1040 = vunpack.c.l.b16 %v172
  %v1041 = vunpack.c.h.b16 %v172
  %v1042 = vunpack.c.l.b16 %v173
  %v1043 = vunpack.c.h.b16 %v173
  %v1044 = vunpack.c.l.b16 %v174
  %v1045 = vunpack.c.h.b16 %v174
  %v1046 = vunpack.c.l.b16 %v175
  %v1047 = vunpack.c.h.b16 %v175
  %v1048 = vunpack.c.l.b16 %v176
  %v1049 = vunpack.c.h.b16 %v176
  %v1050 = vunpack.c.l.b16 %v177
  %v1051 = vunpack.c.h.b16 %v177
  %v1052 = vunpack.c.l.b16 %v178
  %v1053 = vunpack.c.h.b16 %v178
  %v1054 = vunpack.c.l.b16 %v179
  %v1055 = vunpack.c.h.b16 %v179
  %v1056 = vunpack.c.l.b16 %v180
  %v1057 = vunpack.c.h.b16 %v180
  %v1058 = vunpack.c.l.b16 %v181
  %v1059 = vunpack.c.h.b16 %v181
  %v1060 = vunpack.c.l.b16 %v182
  %v1061 = vunpack.c.h.b16 %v182
  %v1062 = vunpack.c.l.b16 %v183
  %v1063 = vunpack.c.h.b16 %v183
  %v1064 = vunpack.c.l.b16 %v184
  %v1065 = vunpack.c.h.b16 %v184
  %v1066 = vunpack.c.l.b16 %v185
  %v1067 = vunpack.c.h.b16 %v185
  %v1068 = vunpack.c.l.b16 %v186
  %v1069 = vunpack.c.h.b16 %v186
  %v1070 = vunpack.c.l.b16 %v187
  %v1071 = vunpack.c.h.b16 %v187
  %v1072 = vunpack.c.l.b16 %v188
  %v1073 = vunpack.c.h.b16 %v188
  %v1074 = vunpack.c.l.b16 %v189
  %v1075 = vunpack.c.h.b16 %v189
  %v1076 = vunpack.c.l.b16 %v190
  %v1077 = vunpack.c.h.b16 %v190
  %v1078 = vunpack.c.l.b16 %v191
  %v1079 = vunpack.c.h.b16 %v191
  %v1080 = vunpack.c.l.b16 %v192
  %v1081 = vunpack.c.h.b16 %v192
  %v1082 = vunpack.c.l.b16 %v193
  %v1083 = vunpack.c.h.b16 %v193
  %v1084 = vunpack.c.l.b16 %v194
  %v1085 = vunpack.c.h.b16 %v194
  %v1086 = vunpack.c.l.b16 %v195
  %v1087 = vunpack.c.h.b16 %v195
  %v1088 = vpack.c.b16 %v776, %v752
  %v1089 = vpack.c.b16 %v777, %v753
  %v1090 = vpack.c.b16 %v778, %v754
  %v1091 = vpack.c.b16 %v779, %v755
  %v1092 = vpack.c.b16 %v780, %v756
  %v1093 = vpack.c.b16 %v781, %v757
  %v1094 = vpack.c.b16 %v782, %v758
  %v1095 = vpack.c.b16 %v783, %v759
  %v1096 = vpack.c.b16 %v784, %v760
  %v1097 = vpack.c.b16 %v785, %v761
  %v1098 = vpack.c.b16 %v786, %v762
  %v1099 = vpack.c.b16 %v787, %v763
  %v1100 = vpack.c.b16 %v788, %v764
  %v1101 = vpack.c.b16 %v789, %v765
  %v1102 = vpack.c.b16 %v790, %v766
  %v1103 = vpack.c.b16 %v791, %v767
  %v1104 = vpack.c.b16 %v792, %v768
  %v1105 = vpack.c.b16 %v793, %v769
  %v1106 = vpack.c.b16 %v794, %v770
  %v1107 = vpack.c.b16 %v795, %v771
  %v1108 = vpack.c.b16 %v796, %v772
  %v1109 = vpack.c.b16 %v797, %v773
  %v1110 = vpack.c.b16 %v798, %v774
  %v1111 = vpack.c.b16 %v799, %v775
  %v1112 = vpack.c.b16 %v824, %v800
  %v1113 = vpack.c.b16 %v825, %v801
  %v1114 = vpack.c.b16 %v826, %v802
  %v1115 = vpack.c.b16 %v827, %v803
  %v1116 = vpack.c.b16 %v828, %v804
  %v1117 = vpack.c.b16 %v829, %v805
  %v1118 = vpack.c.b16 %v830, %v806
  %v1119 = vpack.c.b16 %v831, %v807
  %v1120 = vpack.c.b16 %v832, %v808
  %v1121 = vpack.c.b16 %v833, %v809
  %v1122 = vpack.c.b16 %v834, %v810
  %v1123 = vpack.c.b16 %v835, %v811
  %v1124 = vpack.c.b16 %v836, %v812
  %v1125 = vpack.c.b16 %v837, %v813
  %v1126 = vpack.c.b16 %v838, %v814
  %v1127 = vpack.c.b16 %v839, %v815
  %v1128 = vpack.c.b16 %v840, %v816
  %v1129 = vpack.c.b16 %v841, %v817
  %v1130 = vpack.c.b16 %v842, %v818
  %v1131 = vpack.c.b16 %v843, %v819
  %v1132 = vpack.c.b16 %v844, %v820
  %v1133 = vpack.c.b16 %v845, %v821
  %v1134 = vpack.c.b16 %v846, %v822
  %v1135 = vpack.c.b16 %v847, %v823
  %v1136 = vpack.c.b16 %v872, %v848
  %v1137 = vpack.c.b16 %v873, %v849
  %v1138 = vpack.c.b16 %v874, %v850
  %v1139 = vpack.c.b16 %v875, %v851
  %v1140 = vpack.c.b16 %v876, %v852
  %v1141 = vpack.c.b16 %v877, %v853
  %v1142 = vpack.c.b16 %v878, %v854
  %v1143 = vpack.c.b16 %v879, %v855
  %v1144 = vpack.c.b16 %v880, %v856
  %v1145 = vpack.c.b16 %v881, %v857
  %v1146 = vpack.c.b16 %v882, %v858
  %v1147 = vpack.c.b16 %v883, %v859
  %v1148 = vpack.c.b16 %v884, %v860
  %v1149 = vpack.c.b16 %v885, %v861
  %v1150 = vpack.c.b16 %v886, %v862
  %v1151 = vpack.c.b16 %v887, %v863
  %v1152 = vpack.c.b16 %v888, %v864
  %v1153 = vpack.c.b16 %v889, %v865
  %v1154 = vpack.c.b16 %v890, %v866
  %v1155 = vpack.c.b16 %v891, %v867
  %v1156 = vpack.c.b16 %v892, %v868
  %v1157 = vpack.c.b16 %v893, %v869
  %v1158 = vpack.c.b16 %v894, %v870
  %v1159 = vpack.c.b16 %v895, %v871
  %v1160 = vpack.c.b16 %v920, %v896
  %v1161 = vpack.c.b16 %v921, %v897
  %v1162 = vpack.c.b16 %v922, %v898
  %v1163 = vpack.c.b16 %v923, %v899
  %v1164 = vpack.c.b16 %v924, %v900
  %v1165 = vpack.c.b16 %v925, %v901
  %v1166 = vpack.c.b16 %v926, %v902
  %v1167 = vpack.c.b16 %v927, %v903
  %v1168 = vpack.c.b16 %v928, %v904
  %v1169 = vpack.c.b16 %v929, %v905
  %v1170 = vpack.c.b16 %v930, %v906
  %v1171 = vpack.c.b16 %v931, %v907
  %v1172 = vpack.c.b16 %v932, %v908
  %v1173 = vpack.c.b16 %v933, %v909
  %v1174 = vpack.c.b16 %v934, %v910
  %v1175 = vpack.c.b16 %v935, %v911
  %v1176 = vpack.c.b16 %v936, %v912
  %v1177 = vpack.c.b16 %v937, %v913
  %v1178 = vpack.c.b16 %v938, %v914
  %v1179 = vpack.c.b16 %v939, %v915
  %v1180 = vpack.c.b16 %v940, %v916
  %v1181 = vpack.c.b16 %v941, %v917
  %v1182 = vpack.c.b16 %v942, %v918
  %v1183 = vpack.c.b16 %v943, %v919
  %v1184 = vpack.c.b16 %v968, %v944
  %v1185 = vpack.c.b16 %v969, %v945
  %v1186 = vpack.c.b16 %v970, %v946
  %v1187 = vpack.c.b16 %v971, %v947
  %v1188 = vpack.c.b16 %v972, %v948
  %v1189 = vpack.c.b16 %v973, %v949
  %v1190 = vpack.c.b16 %v974, %v950
  %v1191 = vpack.c.b16 %v975, %v951
  %v1192 = vpack.c.b16 %v976, %v952
  %v1193 = vpack.c.b16 %v977, %v953
  %v1194 = vpack.c.b16 %v978, %v954
  %v1195 = vpack.c.b16 %v979, %v955
  %v1196 = vpack.c.b16 %v980, %v956
  %v1197 = vpack.c.b16 %v981, %v957
  %v1198 = vpack.c.b16 %v982, %v958
  %v1199 = vpack.c.b16 %v983, %v959
  %v1200 = vpack.c.b16 %v984, %v960
  %v1201 = vpack.c.b16 %v985, %v961
  %v1202 = vpack.c.b16 %v986, %v962
  %v1203 = vpack.c.b16 %v987, %v963
  %v1204 = vpack.c.b16 %v988, %v964
  %v1205 = vpack.c.b16 %v989, %v965
  %v1206 = vpack.c.b16 %v990, %v966
  %v1207 = vpack.c.b16 %v991, %v967
  %v1208 = vpack.c.b16 %v1016, %v992
  %v1209 = vpack.c.b16 %v1017, %v993
  %v1210 = vpack.c.b16 %v1018, %v994
  %v1211 = vpack.c.b16 %v1019, %v995
  %v1212 = vpack.c.b16 %v1020, %v996
  %v1213 = vpack.c.b16 %v1021, %v997
  %v1214 = vpack.c.b16 %v1022, %v998
  %v1215 = vpack.c.b16 %v1023, %v999
  %v1216 = vpack.c.b16 %v1024, %v1000
  %v1217 = vpack.c.b16 %v1025, %v1001
  %v1218 = vpack.c.b16 %v1026, %v1002
  %v1219 = vpack.c.b16 %v1027, %v1003
  %v1220 = vpack.c.b16 %v1028, %v1004
  %v1221 = vpack.c.b16 %v1029, %v1005
  %v1222 = vpack.c.b16 %v1030, %v1006
  %v1223 = vpack.c.b16 %v1031, %v1007
  %v1224 = vpack.c.b16 %v1032, %v1008
  %v1225 = vpack.c.b16 %v1033, %v1009
  %v1226 = vpack.c.b16 %v1034, %v1010
  %v1227 = vpack.c.b16 %v1035, %v1011
  %v1228 = vpack.c.b16 %v1036, %v1012
  %v1229 = vpack.c.b16 %v1037, %v1013
  %v1230 = vpack.c.b16 %v1038, %v1014
  %v1231 = vpack.c.b16 %v1039, %v1015
  %v1232 = vpack.c.b16 %v1064, %v1040
  %v1233 = vpack.c.b16 %v1065, %v1041
  %v1234 = vpack.c.b16 %v1066, %v1042
  %v1235 = vpack.c.b16 %v1067, %v1043
  %v1236 = vpack.c.b16 %v1068, %v1044
  %v1237 = vpack.c.b16 %v1069, %v1045
  %v1238 = vpack.c.b16 %v1070, %v1046
  %v1239 = vpack.c.b16 %v1071, %v1047
  %v1240 = vpack.c.b16 %v1072, %v1048
  %v1241 = vpack.c.b16 %v1073, %v1049
  %v1242 = vpack.c.b16 %v1074, %v1050
  %v1243 = vpack.c.b16 %v1075, %v1051
  %v1244 = vpack.c.b16 %v1076, %v1052
  %v1245 = vpack.c.b16 %v1077, %v1053
  %v1246 = vpack.c.b16 %v1078, %v1054
  %v1247 = vpack.c.b16 %v1079, %v1055
  %v1248 = vpack.c.b16 %v1080, %v1056
  %v1249 = vpack.c.b16 %v1081, %v1057
  %v1250 = vpack.c.b16 %v1082, %v1058
  %v1251 = vpack.c.b16 %v1083, %v1059
  %v1252 = vpack.c.b16 %v1084, %v1060
  %v1253 = vpack.c.b16 %v1085, %v1061
  %v1254 = vpack.c.b16 %v1086, %v1062
  %v1255 = vpack.c.b16 %v1087, %v1063
  %v1808 = vunpack.c.l.b16 %v196
  %v1809 = vunpack.c.l.b16 %v197
  %v1810 = vunpack.c.l.b16 %v198
  %v1811 = vunpack.c.l.b16 %v199
  %v1812 = vunpack.c.l.b16 %v200
  %v1813 = vunpack.c.l.b16 %v201
  %v1814 = vunpack.c.l.b16 %v202
  %v1815 = vunpack.c.l.b16 %v203
  %v1816 = vunpack.c.l.b16 %v204
  %v1817 = vunpack.c.l.b16 %v205
  %v1818 = vunpack.c.l.b16 %v206
  %v1819 = vunpack.c.l.b16 %v207
  %v1820 = vunpack.c.l.b16 %v208
  %v1821 = vunpack.c.l.b16 %v209
  %v1822 = vunpack.c.l.b16 %v210
  %v1823 = vunpack.c.l.b16 %v211
  %v1824 = vunpack.c.l.b16 %v212
  %v1825 = vunpack.c.l.b16 %v213
  %v1826 = vunpack.c.l.b16 %v214
  %v1827 = vunpack.c.l.b16 %v215
  %v1828 = vunpack.c.l.b16 %v216
  %v1829 = vunpack.c.l.b16 %v217
  %v1830 = vunpack.c.l.b16 %v218
  %v1831 = vunpack.c.l.b16 %v219
  %v1832 = vunpack.c.l.b16 %v220
  %v1833 = vunpack.c.l.b16 %v221
  %v1834 = vunpack.c.l.b16 %v222
  %v1835 = vunpack.c.l.b16 %v223
  %v1836 = vunpack.c.l.b16 %v224
  %v1837 = vunpack.c.l.b16 %v225
  %v1838 = vunpack.c.l.b16 %v226
  %v1839 = vunpack.c.l.b16 %v227
  %v1840 = vunpack.c.l.b16 %v228
  %v1841 = vunpack.c.l.b16 %v229
  %v1842 = vunpack.c.l.b16 %v230
  %v1843 = vunpack.c.l.b16 %v231
  %v1844 = vunpack.c.l.b16 %v232
  %v1845 = vunpack.c.l.b16 %v233
  %v1846 = vunpack.c.l.b16 %v234
  %v1847 = vunpack.c.l.b16 %v235
  %v1848 = vunpack.c.l.b16 %v236
  %v1849 = vunpack.c.l.b16 %v237
  %v1850 = vunpack.c.l.b16 %v238
  %v1851 = vunpack.c.l.b16 %v239
  %v1852 = vunpack.c.l.b16 %v240
  %v1853 = vunpack.c.l.b16 %v241
  %v1854 = vunpack.c.l.b16 %v242
  %v1855 = vunpack.c.l.b16 %v243
  %v1856 = vunpack.c.l.b16 %v244
  %v1857 = vunpack.c.l.b16 %v245
  %v1858 = vunpack.c.l.b16 %v246
  %v1859 = vunpack.c.l.b16 %v247
  %v1860 = vunpack.c.l.b16 %v248
  %v1861 = vunpack.c.l.b16 %v249
  %v1862 = vunpack.c.l.b16 %v250
  %v1863 = vunpack.c.l.b16 %v251
  %v1864 = vunpack.c.l.b16 %v252
  %v1865 = vunpack.c.l.b16 %v253
  %v1866 = vunpack.c.l.b16 %v254
  %v1867 = vunpack.c.l.b16 %v255
  %v1868 = vunpack.c.l.b16 %v256
  %v1869 = vunpack.c.l.b16 %v257
  %v1870 = vunpack.c.l.b16 %v258
  %v1871 = vunpack.c.l.b16 %v259
  %v1872 = vunpack.c.l.b16 %v260
  %v1873 = vunpack.c.l.b16 %v261
  %v1874 = vunpack.c.l.b16 %v262
  %v1875 = vunpack.c.l.b16 %v263
  %v1876 = vunpack.c.l.b16 %v264
  %v1877 = vunpack.c.l.b16 %v265
  %v1878 = vunpack.c.l.b16 %v266
  %v1879 = vunpack.c.l.b16 %v267
  %v1880 = vunpack.c.l.b16 %v268
  %v1881 = vunpack.c.l.b16 %v269
  %v1882 = vunpack.c.l.b16 %v270
  %v1883 = vunpack.c.l.b16 %v271
  %v1884 = vunpack.c.l.b16 %v272
  %v1885 = vunpack.c.l.b16 %v273
  %v1886 = vunpack.c.l.b16 %v274
  %v1887 = vunpack.c.l.b16 %v275
  %v1888 = vunpack.c.l.b16 %v276
  %v1889 = vunpack.c.l.b16 %v277
  %v1890 = vunpack.c.l.b16 %v278
  %v1891 = vunpack.c.l.b16 %v279
  %v1892 = vunpack.c.l.b16 %v280
  %v1893 = vunpack.c.l.b16 %v281
  %v1894 = vunpack.c.l.b16 %v282
  %v1895 = vunpack.c.l.b16 %v283
  %v1896 = vunpack.c.l.b16 %v284
  %v1897 = vunpack.c.l.b16 %v285
  %v1898 = vunpack.c.l.b16 %v286
  %v1899 = vunpack.c.l.b16 %v287
  %v1900 = vunpack.c.l.b16 %v288
  %v1901 = vunpack.c.l.b16 %v289
  %v1902 = vunpack.c.l.b16 %v290
  %v1903 = vunpack.c.l.b16 %v291
  %v1904 = vunpack.c.l.b16 %v292
  %v1905 = vunpack.c.l.b16 %v293
  %v1906 = vunpack.c.l.b16 %v294
  %v1907 = vunpack.c.l.b16 %v295
  %v1908 = vunpack.c.l.b16 %v296
  %v1909 = vunpack.c.l.b16 %v297
  %v1910 = vunpack.c.l.b16 %v298
  %v1911 = vunpack.c.l.b16 %v299
  %v1912 = vunpack.c.l.b16 %v300
  %v1913 = vunpack.c.l.b16 %v301
  %v1914 = vunpack.c.l.b16 %v302
  %v1915 = vunpack.c.l.b16 %v303
  %v1916 = vunpack.c.l.b16 %v304
  %v1917 = vunpack.c.l.b16 %v305
  %v1918 = vunpack.c.l.b16 %v306
  %v1919 = vunpack.c.l.b16 %v307
  %v1920 = vunpack.c.l.b16 %v308
  %v1921 = vunpack.c.l.b16 %v309
  %v1922 = vunpack.c.l.b16 %v310
  %v1923 = vunpack.c.l.b16 %v311
  %v1924 = vunpack.c.l.b16 %v312
  %v1925 = vunpack.c.l.b16 %v313
  %v1926 = vunpack.c.l.b16 %v314
  %v1927 = vunpack.c.l.b16 %v315
  %v1928 = vunpack.c.l.b16 %v316
  %v1929 = vunpack.c.l.b16 %v317
  %v1930 = vunpack.c.l.b16 %v318
  %v1931 = vunpack.c.l.b16 %v319
  %v1932 = vunpack.c.l.b16 %v320
  %v1933 = vunpack.c.l.b16 %v321
  %v1934 = vunpack.c.l.b16 %v322
  %v1935 = vunpack.c.l.b16 %v323
  %v1936 = vunpack.c.l.b16 %v324
  %v1937 = vunpack.c.l.b16 %v325
  %v1938 = vunpack.c.l.b16 %v326
  %v1939 = vunpack.c.l.b16 %v327
  %v1940 = vunpack.c.l.b16 %v328
  %v1941 = vunpack.c.l.b16 %v329
  %v1942 = vunpack.c.l.b16 %v330
  %v1943 = vunpack.c.l.b16 %v331
  %v1944 = vunpack.c.l.b16 %v332
  %v1945 = vunpack.c.l.b16 %v333
  %v1946 = vunpack.c.l.b16 %v334
  %v1947 = vunpack.c.l.b16 %v335
  %v1948 = vunpack.c.l.b16 %v336
  %v1949 = vunpack.c.l.b16 %v337
  %v1950 = vunpack.c.l.b16 %v338
  %v1951 = vunpack.c.l.b16 %v339
  %v1952 = vunpack.c.l.b16 %v340
  %v1953 = vunpack.c.l.b16 %v341
  %v1954 = vunpack.c.l.b16 %v342
  %v1955 = vunpack.c.l.b16 %v343
  %v1956 = vunpack.c.l.b16 %v344
  %v1957 = vunpack.c.l.b16 %v345
  %v1958 = vunpack.c.l.b16 %v346
  %v1959 = vunpack.c.l.b16 %v347
  %v1960 = vunpack.c.l.b16 %v348
  %v1961 = vunpack.c.l.b16 %v349
  %v1962 = vunpack.c.l.b16 %v350
  %v1963 = vunpack.c.l.b16 %v351
  %v1964 = vunpack.c.l.b16 %v352
  %v1965 = vunpack.c.l.b16 %v353
  %v1966 = vunpack.c.l.b16 %v354
  %v1967 = vunpack.c.l.b16 %v355
  %v1968 = vunpack.c.l.b16 %v356
  %v1969 = vunpack.c.l.b16 %v357
  %v1970 = vunpack.c.l.b16 %v358
  %v1971 = vunpack.c.l.b16 %v359
  %v1972 = vunpack.c.l.b16 %v360
  %v1973 = vunpack.c.l.b16 %v361
  %v1974 = vunpack.c.l.b16 %v362
  %v1975 = vunpack.c.l.b16 %v363
  %v1976 = vunpack.c.l.b16 %v364
  %v1977 = vunpack.c.l.b16 %v365
  %v1978 = vunpack.c.l.b16 %v366
  %v1979 = vunpack.c.l.b16 %v367
  %v1980 = vunpack.c.l.b16 %v368
  %v1981 = vunpack.c.l.b16 %v369
  %v1982 = vunpack.c.l.b16 %v370
  %v1983 = vunpack.c.l.b16 %v371
  %v1984 = vunpack.c.l.b16 %v372
  %v1985 = vunpack.c.l.b16 %v373
  %v1986 = vunpack.c.l.b16 %v374
  %v1987 = vunpack.c.l.b16 %v375
  %v1988 = vunpack.c.l.b16 %v376
  %v1989 = vunpack.c.l.b16 %v377
  %v1990 = vunpack.c.l.b16 %v378
  %v1991 = vunpack.c.l.b16 %v379
  %v1992 = vunpack.c.l.b16 %v380
  %v1993 = vunpack.c.l.b16 %v381
  %v1994 = vunpack.c.l.b16 %v382
  %v1995 = vunpack.c.l.b16 %v383
  %v1996 = vunpack.c.l.b16 %v384
  %v1997 = vunpack.c.l.b16 %v385
  %v1998 = vunpack.c.l.b16 %v386
  %v1999 = vunpack.c.l.b16 %v387
  %v2000 = vunpack.c.l.b16 %v388
  %v2001 = vunpack.c.l.b16 %v389
  %v2002 = vunpack.c.l.b16 %v390
  %v2003 = vunpack.c.l.b16 %v391
  %v2004 = vunpack.c.l.b16 %v392
  %v2005 = vunpack.c.l.b16 %v393
  %v2006 = vunpack.c.l.b16 %v394
  %v2007 = vunpack.c.l.b16 %v395
  %v2008 = vunpack.c.l.b16 %v396
  %v2009 = vunpack.c.l.b16 %v397
  %v2010 = vunpack.c.l.b16 %v398
  %v2011 = vunpack.c.l.b16 %v399
  %v2012 = vunpack.c.l.b16 %v400
  %v2013 = vunpack.c.l.b16 %v401
  %v2014 = vunpack.c.l.b16 %v402
  %v2015 = vunpack.c.l.b16 %v403
  %v2016 = vunpack.c.l.b16 %v404
  %v2017 = vunpack.c.l.b16 %v405
  %v2018 = vunpack.c.l.b16 %v406
  %v2019 = vunpack.c.l.b16 %v407
  %v2020 = vunpack.c.l.b16 %v408
  %v2021 = vunpack.c.l.b16 %v409
  %v2022 = vunpack.c.l.b16 %v410
  %v2023 = vunpack.c.l.b16 %v411
  %v2024 = vunpack.c.l.b16 %v412
  %v2025 = vunpack.c.l.b16 %v413
  %v2026 = vunpack.c.l.b16 %v414
  %v2027 = vunpack.c.l.b16 %v415
  %v2028 = vunpack.c.l.b16 %v416
  %v2029 = vunpack.c.l.b16 %v417
  %v2030 = vunpack.c.l.b16 %v418
  %v2031 = vunpack.c.l.b16 %v419
  %v2032 = vunpack.c.l.b16 %v420
  %v2033 = vunpack.c.l.b16 %v421
  %v2034 = vunpack.c.l.b16 %v422
  %v2035 = vunpack.c.l.b16 %v423
  %v2036 = vunpack.c.l.b16 %v424
  %v2037 = vunpack.c.l.b16 %v425
  %v2038 = vunpack.c.l.b16 %v426
  %v2039 = vunpack.c.l.b16 %v427
  %v2040 = vunpack.c.l.b16 %v428
  %v2041 = vunpack.c.l.b16 %v429
  %v2042 = vunpack.c.l.b16 %v430
  %v2043 = vunpack.c.l.b16 %v431
  %v2044 = vunpack.c.l.b16 %v432
  %v2045 = vunpack.c.l.b16 %v433
  %v2046 = vunpack.c.l.b16 %v434
  %v2047 = vunpack.c.l.b16 %v435
  %v2048 = vunpack.c.l.b16 %v436
  %v2049 = vunpack.c.l.b16 %v437
  %v2050 = vunpack.c.l.b16 %v438
  %v2051 = vunpack.c.l.b16 %v439
  %v2052 = vunpack.c.l.b16 %v440
  %v2053 = vunpack.c.l.b16 %v441
  %v2054 = vunpack.c.l.b16 %v442
  %v2055 = vunpack.c.l.b16 %v443
  %v2056 = vunpack.c.l.b16 %v444
  %v2057 = vunpack.c.l.b16 %v445
  %v2058 = vunpack.c.l.b16 %v446
  %v2059 = vunpack.c.l.b16 %v447
  %v2060 = vunpack.c.l.b16 %v448
  %v2061 = vunpack.c.l.b16 %v449
  %v2062 = vunpack.c.l.b16 %v450
  %v2063 = vunpack.c.l.b16 %v451
  %v2064 = vunpack.c.l.b16 %v452
  %v2065 = vunpack.c.l.b16 %v453
  %v2066 = vunpack.c.l.b16 %v454
  %v2067 = vunpack.c.l.b16 %v455
  %v2068 = vunpack.c.l.b16 %v456
  %v2069 = vunpack.c.l.b16 %v457
  %v2070 = vunpack.c.l.b16 %v458
  %v2071 = vunpack.c.l.b16 %v459
  %v2072 = vunpack.c.l.b16 %v460
  %v2073 = vunpack.c.l.b16 %v461
  %v2074 = vunpack.c.l.b16 %v462
  %v2075 = vunpack.c.l.b16 %v463
  %v2076 = vunpack.c.l.b16 %v464
  %v2077 = vunpack.c.l.b16 %v465
  %v2078 = vunpack.c.l.b16 %v466
  %v2079 = vunpack.c.l.b16 %v467
  %v2080 = vunpack.c.l.b16 %v468
  %v2081 = vunpack.c.l.b16 %v469
  %v2082 = vunpack.c.l.b16 %v470
  %v2083 = vunpack.c.l.b16 %v471
  %v2084 = vunpack.c.l.b16 %v472
  %v2085 = vunpack.c.l.b16 %v473
  %v2086 = vunpack.c.l.b16 %v474
  %v2087 = vunpack.c.l.b16 %v475
  %v2088 = vunpack.c.l.b16 %v476
  %v2089 = vunpack.c.l.b16 %v477
  %v2090 = vunpack.c.l.b16 %v478
  %v2091 = vunpack.c.l.b16 %v479
  %v2092 = vunpack.c.l.b16 %v480
  %v2093 = vunpack.c.l.b16 %v481
  %v2094 = vunpack.c.l.b16 %v482
  %v2095 = vunpack.c.l.b16 %v483
  %v2096 = vunpack.c.l.b16 %v484
  %v2097 = vunpack.c.l.b16 %v485
  %v2098 = vunpack.c.l.b16 %v486
  %v2099 = vunpack.c.l.b16 %v487
  %v2100 = vunpack.c.l.b16 %v488
  %v2101 = vunpack.c.l.b16 %v489
  %v2102 = vunpack.c.l.b16 %v490
  %v2103 = vunpack.c.l.b16 %v491
  %v2104 = vunpack.c.l.b16 %v492
  %v2105 = vunpack.c.l.b16 %v493
  %v2106 = vunpack.c.l.b16 %v494
  %v2107 = vunpack.c.l.b16 %v495
  %v2108 = vunpack.c.l.b16 %v496
  %v2109 = vunpack.c.l.b16 %v497
  %v2110 = vunpack.c.l.b16 %v498
  %v2111 = vunpack.c.l.b16 %v499
  %v2112 = vunpack.c.l.b16 %v500
  %v2113 = vunpack.c.l.b16 %v501
  %v2114 = vunpack.c.l.b16 %v502
  %v2115 = vunpack.c.l.b16 %v503
  %v2116 = vunpack.c.l.b16 %v504
  %v2117 = vunpack.c.l.b16 %v505
  %v2118 = vunpack.c.l.b16 %v506
  %v2119 = vunpack.c.l.b16 %v507
  %v2120 = vunpack.c.l.b16 %v508
  %v2121 = vunpack.c.l.b16 %v509
  %v2122 = vunpack.c.l.b16 %v510
  %v2123 = vunpack.c.l.b16 %v511
  %v2124 = vunpack.c.l.b16 %v512
  %v2125 = vunpack.c.l.b16 %v513
  %v2126 = vunpack.c.l.b16 %v514
  %v2127 = vunpack.c.l.b16 %v515
  %v2128 = vunpack.c.l.b16 %v516
  %v2129 = vunpack.c.l.b16 %v517
  %v2130 = vunpack.c.l.b16 %v518
  %v2131 = vunpack.c.l.b16 %v519
  %v2132 = vunpack.c.l.b16 %v520
  %v2133 = vunpack.c.l.b16 %v521
  %v2134 = vunpack.c.l.b16 %v522
  %v2135 = vunpack.c.l.b16 %v523
  %v2136 = vunpack.c.l.b16 %v524
  %v2137 = vunpack.c.l.b16 %v525
  %v2138 = vunpack.c.l.b16 %v526
  %v2139 = vunpack.c.l.b16 %v527
  %v2140 = vunpack.c.l.b16 %v528
  %v2141 = vunpack.c.l.b16 %v529
  %v2142 = vunpack.c.l.b16 %v530
  %v2143 = vunpack.c.l.b16 %v531
  %v2144 = vunpack.c.l.b16 %v532
  %v2145 = vunpack.c.l.b16 %v533
  %v2146 = vunpack.c.l.b16 %v534
  %v2147 = vunpack.c.l.b16 %v535
  %v2148 = vunpack.c.l.b16 %v536
  %v2149 = vunpack.c.l.b16 %v537
  %v2150 = vunpack.c.l.b16 %v538
  %v2151 = vunpack.c.l.b16 %v539
  %v2152 = vunpack.c.l.b16 %v540
  %v2153 = vunpack.c.l.b16 %v541
  %v2154 = vunpack.c.l.b16 %v542
  %v2155 = vunpack.c.l.b16 %v543
  %v2156 = vunpack.c.l.b16 %v544
  %v2157 = vunpack.c.l.b16 %v545
  %v2158 = vunpack.c.l.b16 %v546
  %v2159 = vunpack.c.l.b16 %v547
  %v2160 = vunpack.c.l.b16 %v548
  %v2161 = vunpack.c.l.b16 %v549
  %v2162 = vunpack.c.l.b16 %v550
  %v2163 = vunpack.c.l.b16 %v551
  %v2164 = vunpack.c.l.b16 %v552
  %v2165 = vunpack.c.l.b16 %v553
  %v2166 = vunpack.c.l.b16 %v554
  %v2167 = vunpack.c.l.b16 %v555
  %v2168 = vunpack.c.l.b16 %v556
  %v2169 = vunpack.c.l.b16 %v557
  %v2170 = vunpack.c.l.b16 %v558
  %v2171 = vunpack.c.l.b16 %v559
  %v2172 = vunpack.c.l.b16 %v560
  %v2173 = vunpack.c.l.b16 %v561
  %v2174 = vunpack.c.l.b16 %v562
  %v2175 = vunpack.c.l.b16 %v563
  %v2176 = vunpack.c.l.b16 %v564
  %v2177 = vunpack.c.l.b16 %v565
  %v2178 = vunpack.c.l.b16 %v566
  %v2179 = vunpack.c.l.b16 %v567
  %v2180 = vunpack.c.l.b16 %v568
  %v2181 = vunpack.c.l.b16 %v569
  %v2182 = vunpack.c.l.b16 %v570
  %v2183 = vunpack.c.l.b16 %v571
  %v2184 = vunpack.c.l.b16 %v572
  %v2185 = vunpack.c.l.b16 %v573
  %v2186 = vunpack.c.l.b16 %v574
  %v2187 = vunpack.c.l.b16 %v575
  %v2188 = vunpack.c.l.b16 %v576
  %v2189 = vunpack.c.l.b16 %v577
  %v2190 = vunpack.c.l.b16 %v578
  %v2191 = vunpack.c.l.b16 %v579
  %v2192 = vpack.c.b16 %v1809, %v1808
  %v2193 = vpack.c.b16 %v1811, %v1810
  %v2194 = vpack.c.b16 %v1813, %v1812
  %v2195 = vpack.c.b16 %v1815, %v1814
  %v2196 = vpack.c.b16 %v1817, %v1816
  %v2197 = vpack.c.b16 %v1819, %v1818
  %v2198 = vpack.c.b16 %v1821, %v1820
  %v2199 = vpack.c.b16 %v1823, %v1822
  %v2200 = vpack.c.b16 %v1825, %v1824
  %v2201 = vpack.c.b16 %v1827, %v1826
  %v2202 = vpack.c.b16 %v1829, %v1828
  %v2203 = vpack.c.b16 %v1831, %v1830
  %v2204 = vpack.c.b16 %v1833, %v1832
  %v2205 = vpack.c.b16 %v1835, %v1834
  %v2206 = vpack.c.b16 %v1837, %v1836
  %v2207 = vpack.c.b16 %v1839, %v1838
  %v2208 = vpack.c.b16 %v1841, %v1840
  %v2209 = vpack.c.b16 %v1843, %v1842
  %v2210 = vpack.c.b16 %v1845, %v1844
  %v2211 = vpack.c.b16 %v1847, %v1846
  %v2212 = vpack.c.b16 %v1849, %v1848
  %v2213 = vpack.c.b16 %v1851, %v1850
  %v2214 = vpack.c.b16 %v1853, %v1852
  %v2215 = vpack.c.b16 %v1855, %v1854
  %v2216 = vpack.c.b16 %v1857, %v1856
  %v2217 = vpack.c.b16 %v1859, %v1858
  %v2218 = vpack.c.b16 %v1861, %v1860
  %v2219 = vpack.c.b16 %v1863, %v1862
  %v2220 = vpack.c.b16 %v1865, %v1864
  %v2221 = vpack.c.b16 %v1867, %v1866
  %v2222 = vpack.c.b16 %v1869, %v1868
  %v2223 = vpack.c.b16 %v1871, %v1870
  %v2224 = vpack.c.b16 %v1873, %v1872
  %v2225 = vpack.c.b16 %v1875, %v1874
  %v2226 = vpack.c.b16 %v1877, %v1876
  %v2227 = vpack.c.b16 %v1879, %v1878
  %v2228 = vpack.c.b16 %v1881, %v1880
  %v2229 = vpack.c.b16 %v1883, %v1882
  %v2230 = vpack.c.b16 %v1885, %v1884
  %v2231 = vpack.c.b16 %v1887, %v1886
  %v2232 = vpack.c.b16 %v1889, %v1888
  %v2233 = vpack.c.b16 %v1891, %v1890
  %v2234 = vpack.c.b16 %v1893, %v1892
  %v2235 = vpack.c.b16 %v1895, %v1894
  %v2236 = vpack.c.b16 %v1897, %v1896
  %v2237 = vpack.c.b16 %v1899, %v1898
  %v2238 = vpack.c.b16 %v1901, %v1900
  %v2239 = vpack.c.b16 %v1903, %v1902
  %v2240 = vpack.c.b16 %v1905, %v1904
  %v2241 = vpack.c.b16 %v1907, %v1906
  %v2242 = vpack.c.b16 %v1909, %v1908
  %v2243 = vpack.c.b16 %v1911, %v1910
  %v2244 = vpack.c.b16 %v1913, %v1912
  %v2245 = vpack.c.b16 %v1915, %v1914
  %v2246 = vpack.c.b16 %v1917, %v1916
  %v2247 = vpack.c.b16 %v1919, %v1918
  %v2248 = vpack.c.b16 %v1921, %v1920
  %v2249 = vpack.c.b16 %v1923, %v1922
  %v2250 = vpack.c.b16 %v1925, %v1924
  %v2251 = vpack.c.b16 %v1927, %v1926
  %v2252 = vpack.c.b16 %v1929, %v1928
  %v2253 = vpack.c.b16 %v1931, %v1930
  %v2254 = vpack.c.b16 %v1933, %v1932
  %v2255 = vpack.c.b16 %v1935, %v1934
  %v2256 = vpack.c.b16 %v1937, %v1936
  %v2257 = vpack.c.b16 %v1939, %v1938
  %v2258 = vpack.c.b16 %v1941, %v1940
  %v2259 = vpack.c.b16 %v1943, %v1942
  %v2260 = vpack.c.b16 %v1945, %v1944
  %v2261 = vpack.c.b16 %v1947, %v1946
  %v2262 = vpack.c.b16 %v1949, %v1948
  %v2263 = vpack.c.b16 %v1951, %v1950
  %v2264 = vpack.c.b16 %v1953, %v1952
  %v2265 = vpack.c.b16 %v1955, %v1954
  %v2266 = vpack.c.b16 %v1957, %v1956
  %v2267 = vpack.c.b16 %v1959, %v1958
  %v2268 = vpack.c.b16 %v1961, %v1960
  %v2269 = vpack.c.b16 %v1963, %v1962
  %v2270 = vpack.c.b16 %v1965, %v1964
  %v2271 = vpack.c.b16 %v1967, %v1966
  %v2272 = vpack.c.b16 %v1969, %v1968
  %v2273 = vpack.c.b16 %v1971, %v1970
  %v2274 = vpack.c.b16 %v1973, %v1972
  %v2275 = vpack.c.b16 %v1975, %v1974
  %v2276 = vpack.c.b16 %v1977, %v1976
  %v2277 = vpack.c.b16 %v1979, %v1978
  %v2278 = vpack.c.b16 %v1981, %v1980
  %v2279 = vpack.c.b16 %v1983, %v1982
  %v2280 = vpack.c.b16 %v1985, %v1984
  %v2281 = vpack.c.b16 %v1987, %v1986
  %v2282 = vpack.c.b16 %v1989, %v1988
  %v2283 = vpack.c.b16 %v1991, %v1990
  %v2284 = vpack.c.b16 %v1993, %v1992
  %v2285 = vpack.c.b16 %v1995, %v1994
  %v2286 = vpack.c.b16 %v1997, %v1996
  %v2287 = vpack.c.b16 %v1999, %v1998
  %v2288 = vpack.c.b16 %v2001, %v2000
  %v2289 = vpack.c.b16 %v2003, %v2002
  %v2290 = vpack.c.b16 %v2005, %v2004
  %v2291 = vpack.c.b16 %v2007, %v2006
  %v2292 = vpack.c.b16 %v2009, %v2008
  %v2293 = vpack.c.b16 %v2011, %v2010
  %v2294 = vpack.c.b16 %v2013, %v2012
  %v2295 = vpack.c.b16 %v2015, %v2014
  %v2296 = vpack.c.b16 %v2017, %v2016
  %v2297 = vpack.c.b16 %v2019, %v2018
  %v2298 = vpack.c.b16 %v2021, %v2020
  %v2299 = vpack.c.b16 %v2023, %v2022
  %v2300 = vpack.c.b16 %v2025, %v2024
  %v2301 = vpack.c.b16 %v2027, %v2026
  %v2302 = vpack.c.b16 %v2029, %v2028
  %v2303 = vpack.c.b16 %v2031, %v2030
  %v2304 = vpack.c.b16 %v2033, %v2032
  %v2305 = vpack.c.b16 %v2035, %v2034
  %v2306 = vpack.c.b16 %v2037, %v2036
  %v2307 = vpack.c.b16 %v2039, %v2038
  %v2308 = vpack.c.b16 %v2041, %v2040
  %v2309 = vpack.c.b16 %v2043, %v2042
  %v2310 = vpack.c.b16 %v2045, %v2044
  %v2311 = vpack.c.b16 %v2047, %v2046
  %v2312 = vpack.c.b16 %v2049, %v2048
  %v2313 = vpack.c.b16 %v2051, %v2050
  %v2314 = vpack.c.b16 %v2053, %v2052
  %v2315 = vpack.c.b16 %v2055, %v2054
  %v2316 = vpack.c.b16 %v2057, %v2056
  %v2317 = vpack.c.b16 %v2059, %v2058
  %v2318 = vpack.c.b16 %v2061, %v2060
  %v2319 = vpack.c.b16 %v2063, %v2062
  %v2320 = vpack.c.b16 %v2065, %v2064
  %v2321 = vpack.c.b16 %v2067, %v2066
  %v2322 = vpack.c.b16 %v2069, %v2068
  %v2323 = vpack.c.b16 %v2071, %v2070
  %v2324 = vpack.c.b16 %v2073, %v2072
  %v2325 = vpack.c.b16 %v2075, %v2074
  %v2326 = vpack.c.b16 %v2077, %v2076
  %v2327 = vpack.c.b16 %v2079, %v2078
  %v2328 = vpack.c.b16 %v2081, %v2080
  %v2329 = vpack.c.b16 %v2083, %v2082
  %v2330 = vpack.c.b16 %v2085, %v2084
  %v2331 = vpack.c.b16 %v2087, %v2086
  %v2332 = vpack.c.b16 %v2089, %v2088
  %v2333 = vpack.c.b16 %v2091, %v2090
  %v2334 = vpack.c.b16 %v2093, %v2092
  %v2335 = vpack.c.b16 %v2095, %v2094
  %v2336 = vpack.c.b16 %v2097, %v2096
  %v2337 = vpack.c.b16 %v2099, %v2098
  %v2338 = vpack.c.b16 %v2101, %v2100
  %v2339 = vpack.c.b16 %v2103, %v2102
  %v2340 = vpack.c.b16 %v2105, %v2104
  %v2341 = vpack.c.b16 %v2107, %v2106
  %v2342 = vpack.c.b16 %v2109, %v2108
  %v2343 = vpack.c.b16 %v2111, %v2110
  %v2344 = vpack.c.b16 %v2113, %v2112
  %v2345 = vpack.c.b16 %v2115, %v2114
  %v2346 = vpack.c.b16 %v2117, %v2116
  %v2347 = vpack.c.b16 %v2119, %v2118
  %v2348 = vpack.c.b16 %v2121, %v2120
  %v2349 = vpack.c.b16 %v2123, %v2122
  %v2350 = vpack.c.b16 %v2125, %v2124
  %v2351 = vpack.c.b16 %v2127, %v2126
  %v2352 = vpack.c.b16 %v2129, %v2128
  %v2353 = vpack.c.b16 %v2131, %v2130
  %v2354 = vpack.c.b16 %v2133, %v2132
  %v2355 = vpack.c.b16 %v2135, %v2134
  %v2356 = vpack.c.b16 %v2137, %v2136
  %v2357 = vpack.c.b16 %v2139, %v2138
  %v2358 = vpack.c.b16 %v2141, %v2140
  %v2359 = vpack.c.b16 %v2143, %v2142
  %v2360 = vpack.c.b16 %v2145, %v2144
  %v2361 = vpack.c.b16 %v2147, %v2146
  %v2362 = vpack.c.b16 %v2149, %v2148
  %v2363 = vpack.c.b16 %v2151, %v2150
  %v2364 = vpack.c.b16 %v2153, %v2152
  %v2365 = vpack.c.b16 %v2155, %v2154
  %v2366 = vpack.c.b16 %v2157, %v2156
  %v2367 = vpack.c.b16 %v2159, %v2158
  %v2368 = vpack.c.b16 %v2161, %v2160
  %v2369 = vpack.c.b16 %v2163, %v2162
  %v2370 = vpack.c.b16 %v2165, %v2164
  %v2371 = vpack.c.b16 %v2167, %v2166
  %v2372 = vpack.c.b16 %v2169, %v2168
  %v2373 = vpack.c.b16 %v2171, %v2170
  %v2374 = vpack.c.b16 %v2173, %v2172
  %v2375 = vpack.c.b16 %v2175, %v2174
  %v2376 = vpack.c.b16 %v2177, %v2176
  %v2377 = vpack.c.b16 %v2179, %v2178
  %v2378 = vpack.c.b16 %v2181, %v2180
  %v2379 = vpack.c.b16 %v2183, %v2182
  %v2380 = vpack.c.b16 %v2185, %v2184
  %v2381 = vpack.c.b16 %v2187, %v2186
  %v2382 = vpack.c.b16 %v2189, %v2188
  %v2383 = vpack.c.b16 %v2191, %v2190
  %2576 = vmatpush.bf16.msra.mxu0 %v2199
  %2577 = vmatpush.bf16.msra.mxu0 %v2198
  %2578 = vmatpush.bf16.msra.mxu0 %v2197
  %2579 = vmatpush.bf16.msra.mxu0 %v2196
  %2580 = vmatpush.bf16.msra.mxu0 %v2195
  %2581 = vmatpush.bf16.msra.mxu0 %v2194
  %2582 = vmatpush.bf16.msra.mxu0 %v2193
  %2583 = vmatpush.bf16.msra.mxu0 %v2192
  %2584 = vmatmul.bf16.gmra.mxu0 %v1088
  %v2585 = vpop.f32.mrf.mxu0
  %v2586 = vadd.f32 %v582, %v2585
  %v2587 = vpop.f32.mrf.mxu0
  %v2588 = vadd.f32 %v582, %v2587
  %2589 = vmatmul.bf16.gmra.mxu0 %v1112
  %v2590 = vpop.f32.mrf.mxu0
  %v2591 = vadd.f32 %v582, %v2590
  %v2592 = vpop.f32.mrf.mxu0
  %v2593 = vadd.f32 %v582, %v2592
  %2594 = vmatmul.bf16.gmra.mxu0 %v1136
  %v2595 = vpop.f32.mrf.mxu0
  %v2596 = vadd.f32 %v582, %v2595
  %v2597 = vpop.f32.mrf.mxu0
  %v2598 = vadd.f32 %v582, %v2597
  %2599 = vmatmul.bf16.gmra.mxu0 %v1160
  %v2600 = vpop.f32.mrf.mxu0
  %v2601 = vadd.f32 %v582, %v2600
  %v2602 = vpop.f32.mrf.mxu0
  %v2603 = vadd.f32 %v582, %v2602
  %2604 = vmatmul.bf16.gmra.mxu0 %v1184
  %v2605 = vpop.f32.mrf.mxu0
  %v2606 = vadd.f32 %v582, %v2605
  %v2607 = vpop.f32.mrf.mxu0
  %v2608 = vadd.f32 %v582, %v2607
  %2609 = vmatmul.bf16.gmra.mxu0 %v1208
  %v2610 = vpop.f32.mrf.mxu0
  %v2611 = vadd.f32 %v582, %v2610
  %v2612 = vpop.f32.mrf.mxu0
  %v2613 = vadd.f32 %v582, %v2612
  %2614 = vmatmul.bf16.gmra.mxu0 %v1232
  %v2615 = vpop.f32.mrf.mxu0
  %v2616 = vadd.f32 %v582, %v2615
  %v2617 = vpop.f32.mrf.mxu0
  %v2618 = vadd.f32 %v582, %v2617
  %2619 = vdwg.mxu0
  %2620 = vmatpush.bf16.msra.mxu0 %v2207
  %2621 = vmatpush.bf16.msra.mxu0 %v2206
  %2622 = vmatpush.bf16.msra.mxu0 %v2205
  %2623 = vmatpush.bf16.msra.mxu0 %v2204
  %2624 = vmatpush.bf16.msra.mxu0 %v2203
  %2625 = vmatpush.bf16.msra.mxu0 %v2202
  %2626 = vmatpush.bf16.msra.mxu0 %v2201
  %2627 = vmatpush.bf16.msra.mxu0 %v2200
  %2628 = vmatmul.bf16.gmra.mxu0 %v1089
  %v2629 = vpop.f32.mrf.mxu0
  %v2630 = vadd.f32 %v2586, %v2629
  %v2631 = vpop.f32.mrf.mxu0
  %v2632 = vadd.f32 %v2588, %v2631
  %2633 = vmatmul.bf16.gmra.mxu0 %v1113
  %v2634 = vpop.f32.mrf.mxu0
  %v2635 = vadd.f32 %v2591, %v2634
  %v2636 = vpop.f32.mrf.mxu0
  %v2637 = vadd.f32 %v2593, %v2636
  %2638 = vmatmul.bf16.gmra.mxu0 %v1137
  %v2639 = vpop.f32.mrf.mxu0
  %v2640 = vadd.f32 %v2596, %v2639
  %v2641 = vpop.f32.mrf.mxu0
  %v2642 = vadd.f32 %v2598, %v2641
  %2643 = vmatmul.bf16.gmra.mxu0 %v1161
  %v2644 = vpop.f32.mrf.mxu0
  %v2645 = vadd.f32 %v2601, %v2644
  %v2646 = vpop.f32.mrf.mxu0
  %v2647 = vadd.f32 %v2603, %v2646
  %2648 = vmatmul.bf16.gmra.mxu0 %v1185
  %v2649 = vpop.f32.mrf.mxu0
  %v2650 = vadd.f32 %v2606, %v2649
  %v2651 = vpop.f32.mrf.mxu0
  %v2652 = vadd.f32 %v2608, %v2651
  %2653 = vmatmul.bf16.gmra.mxu0 %v1209
  %v2654 = vpop.f32.mrf.mxu0
  %v2655 = vadd.f32 %v2611, %v2654
  %v2656 = vpop.f32.mrf.mxu0
  %v2657 = vadd.f32 %v2613, %v2656
  %2658 = vmatmul.bf16.gmra.mxu0 %v1233
  %v2659 = vpop.f32.mrf.mxu0
  %v2660 = vadd.f32 %v2616, %v2659
  %v2661 = vpop.f32.mrf.mxu0
  %v2662 = vadd.f32 %v2618, %v2661
  %2663 = vdwg.mxu0
  %2664 = vmatpush.bf16.msra.mxu0 %v2215
  %2665 = vmatpush.bf16.msra.mxu0 %v2214
  %2666 = vmatpush.bf16.msra.mxu0 %v2213
  %2667 = vmatpush.bf16.msra.mxu0 %v2212
  %2668 = vmatpush.bf16.msra.mxu0 %v2211
  %2669 = vmatpush.bf16.msra.mxu0 %v2210
  %2670 = vmatpush.bf16.msra.mxu0 %v2209
  %2671 = vmatpush.bf16.msra.mxu0 %v2208
  %2672 = vmatmul.bf16.gmra.mxu0 %v1090
  %v2673 = vpop.f32.mrf.mxu0
  %v2674 = vadd.f32 %v2630, %v2673
  %v2675 = vpop.f32.mrf.mxu0
  %v2676 = vadd.f32 %v2632, %v2675
  %2677 = vmatmul.bf16.gmra.mxu0 %v1114
  %v2678 = vpop.f32.mrf.mxu0
  %v2679 = vadd.f32 %v2635, %v2678
  %v2680 = vpop.f32.mrf.mxu0
  %v2681 = vadd.f32 %v2637, %v2680
  %2682 = vmatmul.bf16.gmra.mxu0 %v1138
  %v2683 = vpop.f32.mrf.mxu0
  %v2684 = vadd.f32 %v2640, %v2683
  %v2685 = vpop.f32.mrf.mxu0
  %v2686 = vadd.f32 %v2642, %v2685
  %2687 = vmatmul.bf16.gmra.mxu0 %v1162
  %v2688 = vpop.f32.mrf.mxu0
  %v2689 = vadd.f32 %v2645, %v2688
  %v2690 = vpop.f32.mrf.mxu0
  %v2691 = vadd.f32 %v2647, %v2690
  %2692 = vmatmul.bf16.gmra.mxu0 %v1186
  %v2693 = vpop.f32.mrf.mxu0
  %v2694 = vadd.f32 %v2650, %v2693
  %v2695 = vpop.f32.mrf.mxu0
  %v2696 = vadd.f32 %v2652, %v2695
  %2697 = vmatmul.bf16.gmra.mxu0 %v1210
  %v2698 = vpop.f32.mrf.mxu0
  %v2699 = vadd.f32 %v2655, %v2698
  %v2700 = vpop.f32.mrf.mxu0
  %v2701 = vadd.f32 %v2657, %v2700
  %2702 = vmatmul.bf16.gmra.mxu0 %v1234
  %v2703 = vpop.f32.mrf.mxu0
  %v2704 = vadd.f32 %v2660, %v2703
  %v2705 = vpop.f32.mrf.mxu0
  %v2706 = vadd.f32 %v2662, %v2705
  %2707 = vdwg.mxu0
  %2708 = vmatpush.bf16.msra.mxu0 %v2223
  %2709 = vmatpush.bf16.msra.mxu0 %v2222
  %2710 = vmatpush.bf16.msra.mxu0 %v2221
  %2711 = vmatpush.bf16.msra.mxu0 %v2220
  %2712 = vmatpush.bf16.msra.mxu0 %v2219
  %2713 = vmatpush.bf16.msra.mxu0 %v2218
  %2714 = vmatpush.bf16.msra.mxu0 %v2217
  %2715 = vmatpush.bf16.msra.mxu0 %v2216
  %2716 = vmatmul.bf16.gmra.mxu0 %v1091
  %v2717 = vpop.f32.mrf.mxu0
  %v2718 = vadd.f32 %v2674, %v2717
  %v2719 = vpop.f32.mrf.mxu0
  %v2720 = vadd.f32 %v2676, %v2719
  %2721 = vmatmul.bf16.gmra.mxu0 %v1115
  %v2722 = vpop.f32.mrf.mxu0
  %v2723 = vadd.f32 %v2679, %v2722
  %v2724 = vpop.f32.mrf.mxu0
  %v2725 = vadd.f32 %v2681, %v2724
  %2726 = vmatmul.bf16.gmra.mxu0 %v1139
  %v2727 = vpop.f32.mrf.mxu0
  %v2728 = vadd.f32 %v2684, %v2727
  %v2729 = vpop.f32.mrf.mxu0
  %v2730 = vadd.f32 %v2686, %v2729
  %2731 = vmatmul.bf16.gmra.mxu0 %v1163
  %v2732 = vpop.f32.mrf.mxu0
  %v2733 = vadd.f32 %v2689, %v2732
  %v2734 = vpop.f32.mrf.mxu0
  %v2735 = vadd.f32 %v2691, %v2734
  %2736 = vmatmul.bf16.gmra.mxu0 %v1187
  %v2737 = vpop.f32.mrf.mxu0
  %v2738 = vadd.f32 %v2694, %v2737
  %v2739 = vpop.f32.mrf.mxu0
  %v2740 = vadd.f32 %v2696, %v2739
  %2741 = vmatmul.bf16.gmra.mxu0 %v1211
  %v2742 = vpop.f32.mrf.mxu0
  %v2743 = vadd.f32 %v2699, %v2742
  %v2744 = vpop.f32.mrf.mxu0
  %v2745 = vadd.f32 %v2701, %v2744
  %2746 = vmatmul.bf16.gmra.mxu0 %v1235
  %v2747 = vpop.f32.mrf.mxu0
  %v2748 = vadd.f32 %v2704, %v2747
  %v2749 = vpop.f32.mrf.mxu0
  %v2750 = vadd.f32 %v2706, %v2749
  %2751 = vdwg.mxu0
  %2752 = vmatpush.bf16.msra.mxu0 %v2231
  %2753 = vmatpush.bf16.msra.mxu0 %v2230
  %2754 = vmatpush.bf16.msra.mxu0 %v2229
  %2755 = vmatpush.bf16.msra.mxu0 %v2228
  %2756 = vmatpush.bf16.msra.mxu0 %v2227
  %2757 = vmatpush.bf16.msra.mxu0 %v2226
  %2758 = vmatpush.bf16.msra.mxu0 %v2225
  %2759 = vmatpush.bf16.msra.mxu0 %v2224
  %2760 = vmatmul.bf16.gmra.mxu0 %v1092
  %v2761 = vpop.f32.mrf.mxu0
  %v2762 = vadd.f32 %v2718, %v2761
  %v2763 = vpop.f32.mrf.mxu0
  %v2764 = vadd.f32 %v2720, %v2763
  %2765 = vmatmul.bf16.gmra.mxu0 %v1116
  %v2766 = vpop.f32.mrf.mxu0
  %v2767 = vadd.f32 %v2723, %v2766
  %v2768 = vpop.f32.mrf.mxu0
  %v2769 = vadd.f32 %v2725, %v2768
  %2770 = vmatmul.bf16.gmra.mxu0 %v1140
  %v2771 = vpop.f32.mrf.mxu0
  %v2772 = vadd.f32 %v2728, %v2771
  %v2773 = vpop.f32.mrf.mxu0
  %v2774 = vadd.f32 %v2730, %v2773
  %2775 = vmatmul.bf16.gmra.mxu0 %v1164
  %v2776 = vpop.f32.mrf.mxu0
  %v2777 = vadd.f32 %v2733, %v2776
  %v2778 = vpop.f32.mrf.mxu0
  %v2779 = vadd.f32 %v2735, %v2778
  %2780 = vmatmul.bf16.gmra.mxu0 %v1188
  %v2781 = vpop.f32.mrf.mxu0
  %v2782 = vadd.f32 %v2738, %v2781
  %v2783 = vpop.f32.mrf.mxu0
  %v2784 = vadd.f32 %v2740, %v2783
  %2785 = vmatmul.bf16.gmra.mxu0 %v1212
  %v2786 = vpop.f32.mrf.mxu0
  %v2787 = vadd.f32 %v2743, %v2786
  %v2788 = vpop.f32.mrf.mxu0
  %v2789 = vadd.f32 %v2745, %v2788
  %2790 = vmatmul.bf16.gmra.mxu0 %v1236
  %v2791 = vpop.f32.mrf.mxu0
  %v2792 = vadd.f32 %v2748, %v2791
  %v2793 = vpop.f32.mrf.mxu0
  %v2794 = vadd.f32 %v2750, %v2793
  %2795 = vdwg.mxu0
  %2796 = vmatpush.bf16.msra.mxu0 %v2239
  %2797 = vmatpush.bf16.msra.mxu0 %v2238
  %2798 = vmatpush.bf16.msra.mxu0 %v2237
  %2799 = vmatpush.bf16.msra.mxu0 %v2236
  %2800 = vmatpush.bf16.msra.mxu0 %v2235
  %2801 = vmatpush.bf16.msra.mxu0 %v2234
  %2802 = vmatpush.bf16.msra.mxu0 %v2233
  %2803 = vmatpush.bf16.msra.mxu0 %v2232
  %2804 = vmatmul.bf16.gmra.mxu0 %v1093
  %v2805 = vpop.f32.mrf.mxu0
  %v2806 = vadd.f32 %v2762, %v2805
  %v2807 = vpop.f32.mrf.mxu0
  %v2808 = vadd.f32 %v2764, %v2807
  %2809 = vmatmul.bf16.gmra.mxu0 %v1117
  %v2810 = vpop.f32.mrf.mxu0
  %v2811 = vadd.f32 %v2767, %v2810
  %v2812 = vpop.f32.mrf.mxu0
  %v2813 = vadd.f32 %v2769, %v2812
  %2814 = vmatmul.bf16.gmra.mxu0 %v1141
  %v2815 = vpop.f32.mrf.mxu0
  %v2816 = vadd.f32 %v2772, %v2815
  %v2817 = vpop.f32.mrf.mxu0
  %v2818 = vadd.f32 %v2774, %v2817
  %2819 = vmatmul.bf16.gmra.mxu0 %v1165
  %v2820 = vpop.f32.mrf.mxu0
  %v2821 = vadd.f32 %v2777, %v2820
  %v2822 = vpop.f32.mrf.mxu0
  %v2823 = vadd.f32 %v2779, %v2822
  %2824 = vmatmul.bf16.gmra.mxu0 %v1189
  %v2825 = vpop.f32.mrf.mxu0
  %v2826 = vadd.f32 %v2782, %v2825
  %v2827 = vpop.f32.mrf.mxu0
  %v2828 = vadd.f32 %v2784, %v2827
  %2829 = vmatmul.bf16.gmra.mxu0 %v1213
  %v2830 = vpop.f32.mrf.mxu0
  %v2831 = vadd.f32 %v2787, %v2830
  %v2832 = vpop.f32.mrf.mxu0
  %v2833 = vadd.f32 %v2789, %v2832
  %2834 = vmatmul.bf16.gmra.mxu0 %v1237
  %v2835 = vpop.f32.mrf.mxu0
  %v2836 = vadd.f32 %v2792, %v2835
  %v2837 = vpop.f32.mrf.mxu0
  %v2838 = vadd.f32 %v2794, %v2837
  %2839 = vdwg.mxu0
  %2840 = vmatpush.bf16.msra.mxu0 %v2247
  %2841 = vmatpush.bf16.msra.mxu0 %v2246
  %2842 = vmatpush.bf16.msra.mxu0 %v2245
  %2843 = vmatpush.bf16.msra.mxu0 %v2244
  %2844 = vmatpush.bf16.msra.mxu0 %v2243
  %2845 = vmatpush.bf16.msra.mxu0 %v2242
  %2846 = vmatpush.bf16.msra.mxu0 %v2241
  %2847 = vmatpush.bf16.msra.mxu0 %v2240
  %2848 = vmatmul.bf16.gmra.mxu0 %v1094
  %v2849 = vpop.f32.mrf.mxu0
  %v2850 = vadd.f32 %v2806, %v2849
  %v2851 = vpop.f32.mrf.mxu0
  %v2852 = vadd.f32 %v2808, %v2851
  %2853 = vmatmul.bf16.gmra.mxu0 %v1118
  %v2854 = vpop.f32.mrf.mxu0
  %v2855 = vadd.f32 %v2811, %v2854
  %v2856 = vpop.f32.mrf.mxu0
  %v2857 = vadd.f32 %v2813, %v2856
  %2858 = vmatmul.bf16.gmra.mxu0 %v1142
  %v2859 = vpop.f32.mrf.mxu0
  %v2860 = vadd.f32 %v2816, %v2859
  %v2861 = vpop.f32.mrf.mxu0
  %v2862 = vadd.f32 %v2818, %v2861
  %2863 = vmatmul.bf16.gmra.mxu0 %v1166
  %v2864 = vpop.f32.mrf.mxu0
  %v2865 = vadd.f32 %v2821, %v2864
  %v2866 = vpop.f32.mrf.mxu0
  %v2867 = vadd.f32 %v2823, %v2866
  %2868 = vmatmul.bf16.gmra.mxu0 %v1190
  %v2869 = vpop.f32.mrf.mxu0
  %v2870 = vadd.f32 %v2826, %v2869
  %v2871 = vpop.f32.mrf.mxu0
  %v2872 = vadd.f32 %v2828, %v2871
  %2873 = vmatmul.bf16.gmra.mxu0 %v1214
  %v2874 = vpop.f32.mrf.mxu0
  %v2875 = vadd.f32 %v2831, %v2874
  %v2876 = vpop.f32.mrf.mxu0
  %v2877 = vadd.f32 %v2833, %v2876
  %2878 = vmatmul.bf16.gmra.mxu0 %v1238
  %v2879 = vpop.f32.mrf.mxu0
  %v2880 = vadd.f32 %v2836, %v2879
  %v2881 = vpop.f32.mrf.mxu0
  %v2882 = vadd.f32 %v2838, %v2881
  %2883 = vdwg.mxu0
  %2884 = vmatpush.bf16.msra.mxu0 %v2255
  %2885 = vmatpush.bf16.msra.mxu0 %v2254
  %2886 = vmatpush.bf16.msra.mxu0 %v2253
  %2887 = vmatpush.bf16.msra.mxu0 %v2252
  %2888 = vmatpush.bf16.msra.mxu0 %v2251
  %2889 = vmatpush.bf16.msra.mxu0 %v2250
  %2890 = vmatpush.bf16.msra.mxu0 %v2249
  %2891 = vmatpush.bf16.msra.mxu0 %v2248
  %2892 = vmatmul.bf16.gmra.mxu0 %v1095
  %v2893 = vpop.f32.mrf.mxu0
  %v2894 = vadd.f32 %v2850, %v2893
  %v2895 = vpop.f32.mrf.mxu0
  %v2896 = vadd.f32 %v2852, %v2895
  %2897 = vmatmul.bf16.gmra.mxu0 %v1119
  %v2898 = vpop.f32.mrf.mxu0
  %v2899 = vadd.f32 %v2855, %v2898
  %v2900 = vpop.f32.mrf.mxu0
  %v2901 = vadd.f32 %v2857, %v2900
  %2902 = vmatmul.bf16.gmra.mxu0 %v1143
  %v2903 = vpop.f32.mrf.mxu0
  %v2904 = vadd.f32 %v2860, %v2903
  %v2905 = vpop.f32.mrf.mxu0
  %v2906 = vadd.f32 %v2862, %v2905
  %2907 = vmatmul.bf16.gmra.mxu0 %v1167
  %v2908 = vpop.f32.mrf.mxu0
  %v2909 = vadd.f32 %v2865, %v2908
  %v2910 = vpop.f32.mrf.mxu0
  %v2911 = vadd.f32 %v2867, %v2910
  %2912 = vmatmul.bf16.gmra.mxu0 %v1191
  %v2913 = vpop.f32.mrf.mxu0
  %v2914 = vadd.f32 %v2870, %v2913
  %v2915 = vpop.f32.mrf.mxu0
  %v2916 = vadd.f32 %v2872, %v2915
  %2917 = vmatmul.bf16.gmra.mxu0 %v1215
  %v2918 = vpop.f32.mrf.mxu0
  %v2919 = vadd.f32 %v2875, %v2918
  %v2920 = vpop.f32.mrf.mxu0
  %v2921 = vadd.f32 %v2877, %v2920
  %2922 = vmatmul.bf16.gmra.mxu0 %v1239
  %v2923 = vpop.f32.mrf.mxu0
  %v2924 = vadd.f32 %v2880, %v2923
  %v2925 = vpop.f32.mrf.mxu0
  %v2926 = vadd.f32 %v2882, %v2925
  %2927 = vdwg.mxu0
  %2928 = vmatpush.bf16.msra.mxu0 %v2263
  %2929 = vmatpush.bf16.msra.mxu0 %v2262
  %2930 = vmatpush.bf16.msra.mxu0 %v2261
  %2931 = vmatpush.bf16.msra.mxu0 %v2260
  %2932 = vmatpush.bf16.msra.mxu0 %v2259
  %2933 = vmatpush.bf16.msra.mxu0 %v2258
  %2934 = vmatpush.bf16.msra.mxu0 %v2257
  %2935 = vmatpush.bf16.msra.mxu0 %v2256
  %2936 = vmatmul.bf16.gmra.mxu0 %v1096
  %v2937 = vpop.f32.mrf.mxu0
  %v2938 = vadd.f32 %v2894, %v2937
  %v2939 = vpop.f32.mrf.mxu0
  %v2940 = vadd.f32 %v2896, %v2939
  %2941 = vmatmul.bf16.gmra.mxu0 %v1120
  %v2942 = vpop.f32.mrf.mxu0
  %v2943 = vadd.f32 %v2899, %v2942
  %v2944 = vpop.f32.mrf.mxu0
  %v2945 = vadd.f32 %v2901, %v2944
  %2946 = vmatmul.bf16.gmra.mxu0 %v1144
  %v2947 = vpop.f32.mrf.mxu0
  %v2948 = vadd.f32 %v2904, %v2947
  %v2949 = vpop.f32.mrf.mxu0
  %v2950 = vadd.f32 %v2906, %v2949
  %2951 = vmatmul.bf16.gmra.mxu0 %v1168
  %v2952 = vpop.f32.mrf.mxu0
  %v2953 = vadd.f32 %v2909, %v2952
  %v2954 = vpop.f32.mrf.mxu0
  %v2955 = vadd.f32 %v2911, %v2954
  %2956 = vmatmul.bf16.gmra.mxu0 %v1192
  %v2957 = vpop.f32.mrf.mxu0
  %v2958 = vadd.f32 %v2914, %v2957
  %v2959 = vpop.f32.mrf.mxu0
  %v2960 = vadd.f32 %v2916, %v2959
  %2961 = vmatmul.bf16.gmra.mxu0 %v1216
  %v2962 = vpop.f32.mrf.mxu0
  %v2963 = vadd.f32 %v2919, %v2962
  %v2964 = vpop.f32.mrf.mxu0
  %v2965 = vadd.f32 %v2921, %v2964
  %2966 = vmatmul.bf16.gmra.mxu0 %v1240
  %v2967 = vpop.f32.mrf.mxu0
  %v2968 = vadd.f32 %v2924, %v2967
  %v2969 = vpop.f32.mrf.mxu0
  %v2970 = vadd.f32 %v2926, %v2969
  %2971 = vdwg.mxu0
  %2972 = vmatpush.bf16.msra.mxu0 %v2271
  %2973 = vmatpush.bf16.msra.mxu0 %v2270
  %2974 = vmatpush.bf16.msra.mxu0 %v2269
  %2975 = vmatpush.bf16.msra.mxu0 %v2268
  %2976 = vmatpush.bf16.msra.mxu0 %v2267
  %2977 = vmatpush.bf16.msra.mxu0 %v2266
  %2978 = vmatpush.bf16.msra.mxu0 %v2265
  %2979 = vmatpush.bf16.msra.mxu0 %v2264
  %2980 = vmatmul.bf16.gmra.mxu0 %v1097
  %v2981 = vpop.f32.mrf.mxu0
  %v2982 = vadd.f32 %v2938, %v2981
  %v2983 = vpop.f32.mrf.mxu0
  %v2984 = vadd.f32 %v2940, %v2983
  %2985 = vmatmul.bf16.gmra.mxu0 %v1121
  %v2986 = vpop.f32.mrf.mxu0
  %v2987 = vadd.f32 %v2943, %v2986
  %v2988 = vpop.f32.mrf.mxu0
  %v2989 = vadd.f32 %v2945, %v2988
  %2990 = vmatmul.bf16.gmra.mxu0 %v1145
  %v2991 = vpop.f32.mrf.mxu0
  %v2992 = vadd.f32 %v2948, %v2991
  %v2993 = vpop.f32.mrf.mxu0
  %v2994 = vadd.f32 %v2950, %v2993
  %2995 = vmatmul.bf16.gmra.mxu0 %v1169
  %v2996 = vpop.f32.mrf.mxu0
  %v2997 = vadd.f32 %v2953, %v2996
  %v2998 = vpop.f32.mrf.mxu0
  %v2999 = vadd.f32 %v2955, %v2998
  %3000 = vmatmul.bf16.gmra.mxu0 %v1193
  %v3001 = vpop.f32.mrf.mxu0
  %v3002 = vadd.f32 %v2958, %v3001
  %v3003 = vpop.f32.mrf.mxu0
  %v3004 = vadd.f32 %v2960, %v3003
  %3005 = vmatmul.bf16.gmra.mxu0 %v1217
  %v3006 = vpop.f32.mrf.mxu0
  %v3007 = vadd.f32 %v2963, %v3006
  %v3008 = vpop.f32.mrf.mxu0
  %v3009 = vadd.f32 %v2965, %v3008
  %3010 = vmatmul.bf16.gmra.mxu0 %v1241
  %v3011 = vpop.f32.mrf.mxu0
  %v3012 = vadd.f32 %v2968, %v3011
  %v3013 = vpop.f32.mrf.mxu0
  %v3014 = vadd.f32 %v2970, %v3013
  %3015 = vdwg.mxu0
  %3016 = vmatpush.bf16.msra.mxu0 %v2279
  %3017 = vmatpush.bf16.msra.mxu0 %v2278
  %3018 = vmatpush.bf16.msra.mxu0 %v2277
  %3019 = vmatpush.bf16.msra.mxu0 %v2276
  %3020 = vmatpush.bf16.msra.mxu0 %v2275
  %3021 = vmatpush.bf16.msra.mxu0 %v2274
  %3022 = vmatpush.bf16.msra.mxu0 %v2273
  %3023 = vmatpush.bf16.msra.mxu0 %v2272
  %3024 = vmatmul.bf16.gmra.mxu0 %v1098
  %v3025 = vpop.f32.mrf.mxu0
  %v3026 = vadd.f32 %v2982, %v3025
  %v3027 = vpop.f32.mrf.mxu0
  %v3028 = vadd.f32 %v2984, %v3027
  %3029 = vmatmul.bf16.gmra.mxu0 %v1122
  %v3030 = vpop.f32.mrf.mxu0
  %v3031 = vadd.f32 %v2987, %v3030
  %v3032 = vpop.f32.mrf.mxu0
  %v3033 = vadd.f32 %v2989, %v3032
  %3034 = vmatmul.bf16.gmra.mxu0 %v1146
  %v3035 = vpop.f32.mrf.mxu0
  %v3036 = vadd.f32 %v2992, %v3035
  %v3037 = vpop.f32.mrf.mxu0
  %v3038 = vadd.f32 %v2994, %v3037
  %3039 = vmatmul.bf16.gmra.mxu0 %v1170
  %v3040 = vpop.f32.mrf.mxu0
  %v3041 = vadd.f32 %v2997, %v3040
  %v3042 = vpop.f32.mrf.mxu0
  %v3043 = vadd.f32 %v2999, %v3042
  %3044 = vmatmul.bf16.gmra.mxu0 %v1194
  %v3045 = vpop.f32.mrf.mxu0
  %v3046 = vadd.f32 %v3002, %v3045
  %v3047 = vpop.f32.mrf.mxu0
  %v3048 = vadd.f32 %v3004, %v3047
  %3049 = vmatmul.bf16.gmra.mxu0 %v1218
  %v3050 = vpop.f32.mrf.mxu0
  %v3051 = vadd.f32 %v3007, %v3050
  %v3052 = vpop.f32.mrf.mxu0
  %v3053 = vadd.f32 %v3009, %v3052
  %3054 = vmatmul.bf16.gmra.mxu0 %v1242
  %v3055 = vpop.f32.mrf.mxu0
  %v3056 = vadd.f32 %v3012, %v3055
  %v3057 = vpop.f32.mrf.mxu0
  %v3058 = vadd.f32 %v3014, %v3057
  %3059 = vdwg.mxu0
  %3060 = vmatpush.bf16.msra.mxu0 %v2287
  %3061 = vmatpush.bf16.msra.mxu0 %v2286
  %3062 = vmatpush.bf16.msra.mxu0 %v2285
  %3063 = vmatpush.bf16.msra.mxu0 %v2284
  %3064 = vmatpush.bf16.msra.mxu0 %v2283
  %3065 = vmatpush.bf16.msra.mxu0 %v2282
  %3066 = vmatpush.bf16.msra.mxu0 %v2281
  %3067 = vmatpush.bf16.msra.mxu0 %v2280
  %3068 = vmatmul.bf16.gmra.mxu0 %v1099
  %v3069 = vpop.f32.mrf.mxu0
  %v3070 = vadd.f32 %v3026, %v3069
  %v3071 = vpop.f32.mrf.mxu0
  %v3072 = vadd.f32 %v3028, %v3071
  %3073 = vmatmul.bf16.gmra.mxu0 %v1123
  %v3074 = vpop.f32.mrf.mxu0
  %v3075 = vadd.f32 %v3031, %v3074
  %v3076 = vpop.f32.mrf.mxu0
  %v3077 = vadd.f32 %v3033, %v3076
  %3078 = vmatmul.bf16.gmra.mxu0 %v1147
  %v3079 = vpop.f32.mrf.mxu0
  %v3080 = vadd.f32 %v3036, %v3079
  %v3081 = vpop.f32.mrf.mxu0
  %v3082 = vadd.f32 %v3038, %v3081
  %3083 = vmatmul.bf16.gmra.mxu0 %v1171
  %v3084 = vpop.f32.mrf.mxu0
  %v3085 = vadd.f32 %v3041, %v3084
  %v3086 = vpop.f32.mrf.mxu0
  %v3087 = vadd.f32 %v3043, %v3086
  %3088 = vmatmul.bf16.gmra.mxu0 %v1195
  %v3089 = vpop.f32.mrf.mxu0
  %v3090 = vadd.f32 %v3046, %v3089
  %v3091 = vpop.f32.mrf.mxu0
  %v3092 = vadd.f32 %v3048, %v3091
  %3093 = vmatmul.bf16.gmra.mxu0 %v1219
  %v3094 = vpop.f32.mrf.mxu0
  %v3095 = vadd.f32 %v3051, %v3094
  %v3096 = vpop.f32.mrf.mxu0
  %v3097 = vadd.f32 %v3053, %v3096
  %3098 = vmatmul.bf16.gmra.mxu0 %v1243
  %v3099 = vpop.f32.mrf.mxu0
  %v3100 = vadd.f32 %v3056, %v3099
  %v3101 = vpop.f32.mrf.mxu0
  %v3102 = vadd.f32 %v3058, %v3101
  %3103 = vdwg.mxu0
  %3104 = vmatpush.bf16.msra.mxu0 %v2295
  %3105 = vmatpush.bf16.msra.mxu0 %v2294
  %3106 = vmatpush.bf16.msra.mxu0 %v2293
  %3107 = vmatpush.bf16.msra.mxu0 %v2292
  %3108 = vmatpush.bf16.msra.mxu0 %v2291
  %3109 = vmatpush.bf16.msra.mxu0 %v2290
  %3110 = vmatpush.bf16.msra.mxu0 %v2289
  %3111 = vmatpush.bf16.msra.mxu0 %v2288
  %3112 = vmatmul.bf16.gmra.mxu0 %v1100
  %v3113 = vpop.f32.mrf.mxu0
  %v3114 = vadd.f32 %v3070, %v3113
  %v3115 = vpop.f32.mrf.mxu0
  %v3116 = vadd.f32 %v3072, %v3115
  %3117 = vmatmul.bf16.gmra.mxu0 %v1124
  %v3118 = vpop.f32.mrf.mxu0
  %v3119 = vadd.f32 %v3075, %v3118
  %v3120 = vpop.f32.mrf.mxu0
  %v3121 = vadd.f32 %v3077, %v3120
  %3122 = vmatmul.bf16.gmra.mxu0 %v1148
  %v3123 = vpop.f32.mrf.mxu0
  %v3124 = vadd.f32 %v3080, %v3123
  %v3125 = vpop.f32.mrf.mxu0
  %v3126 = vadd.f32 %v3082, %v3125
  %3127 = vmatmul.bf16.gmra.mxu0 %v1172
  %v3128 = vpop.f32.mrf.mxu0
  %v3129 = vadd.f32 %v3085, %v3128
  %v3130 = vpop.f32.mrf.mxu0
  %v3131 = vadd.f32 %v3087, %v3130
  %3132 = vmatmul.bf16.gmra.mxu0 %v1196
  %v3133 = vpop.f32.mrf.mxu0
  %v3134 = vadd.f32 %v3090, %v3133
  %v3135 = vpop.f32.mrf.mxu0
  %v3136 = vadd.f32 %v3092, %v3135
  %3137 = vmatmul.bf16.gmra.mxu0 %v1220
  %v3138 = vpop.f32.mrf.mxu0
  %v3139 = vadd.f32 %v3095, %v3138
  %v3140 = vpop.f32.mrf.mxu0
  %v3141 = vadd.f32 %v3097, %v3140
  %3142 = vmatmul.bf16.gmra.mxu0 %v1244
  %v3143 = vpop.f32.mrf.mxu0
  %v3144 = vadd.f32 %v3100, %v3143
  %v3145 = vpop.f32.mrf.mxu0
  %v3146 = vadd.f32 %v3102, %v3145
  %3147 = vdwg.mxu0
  %3148 = vmatpush.bf16.msra.mxu0 %v2303
  %3149 = vmatpush.bf16.msra.mxu0 %v2302
  %3150 = vmatpush.bf16.msra.mxu0 %v2301
  %3151 = vmatpush.bf16.msra.mxu0 %v2300
  %3152 = vmatpush.bf16.msra.mxu0 %v2299
  %3153 = vmatpush.bf16.msra.mxu0 %v2298
  %3154 = vmatpush.bf16.msra.mxu0 %v2297
  %3155 = vmatpush.bf16.msra.mxu0 %v2296
  %3156 = vmatmul.bf16.gmra.mxu0 %v1101
  %v3157 = vpop.f32.mrf.mxu0
  %v3158 = vadd.f32 %v3114, %v3157
  %v3159 = vpop.f32.mrf.mxu0
  %v3160 = vadd.f32 %v3116, %v3159
  %3161 = vmatmul.bf16.gmra.mxu0 %v1125
  %v3162 = vpop.f32.mrf.mxu0
  %v3163 = vadd.f32 %v3119, %v3162
  %v3164 = vpop.f32.mrf.mxu0
  %v3165 = vadd.f32 %v3121, %v3164
  %3166 = vmatmul.bf16.gmra.mxu0 %v1149
  %v3167 = vpop.f32.mrf.mxu0
  %v3168 = vadd.f32 %v3124, %v3167
  %v3169 = vpop.f32.mrf.mxu0
  %v3170 = vadd.f32 %v3126, %v3169
  %3171 = vmatmul.bf16.gmra.mxu0 %v1173
  %v3172 = vpop.f32.mrf.mxu0
  %v3173 = vadd.f32 %v3129, %v3172
  %v3174 = vpop.f32.mrf.mxu0
  %v3175 = vadd.f32 %v3131, %v3174
  %3176 = vmatmul.bf16.gmra.mxu0 %v1197
  %v3177 = vpop.f32.mrf.mxu0
  %v3178 = vadd.f32 %v3134, %v3177
  %v3179 = vpop.f32.mrf.mxu0
  %v3180 = vadd.f32 %v3136, %v3179
  %3181 = vmatmul.bf16.gmra.mxu0 %v1221
  %v3182 = vpop.f32.mrf.mxu0
  %v3183 = vadd.f32 %v3139, %v3182
  %v3184 = vpop.f32.mrf.mxu0
  %v3185 = vadd.f32 %v3141, %v3184
  %3186 = vmatmul.bf16.gmra.mxu0 %v1245
  %v3187 = vpop.f32.mrf.mxu0
  %v3188 = vadd.f32 %v3144, %v3187
  %v3189 = vpop.f32.mrf.mxu0
  %v3190 = vadd.f32 %v3146, %v3189
  %3191 = vdwg.mxu0
  %3192 = vmatpush.bf16.msra.mxu0 %v2311
  %3193 = vmatpush.bf16.msra.mxu0 %v2310
  %3194 = vmatpush.bf16.msra.mxu0 %v2309
  %3195 = vmatpush.bf16.msra.mxu0 %v2308
  %3196 = vmatpush.bf16.msra.mxu0 %v2307
  %3197 = vmatpush.bf16.msra.mxu0 %v2306
  %3198 = vmatpush.bf16.msra.mxu0 %v2305
  %3199 = vmatpush.bf16.msra.mxu0 %v2304
  %3200 = vmatmul.bf16.gmra.mxu0 %v1102
  %v3201 = vpop.f32.mrf.mxu0
  %v3202 = vadd.f32 %v3158, %v3201
  %v3203 = vpop.f32.mrf.mxu0
  %v3204 = vadd.f32 %v3160, %v3203
  %3205 = vmatmul.bf16.gmra.mxu0 %v1126
  %v3206 = vpop.f32.mrf.mxu0
  %v3207 = vadd.f32 %v3163, %v3206
  %v3208 = vpop.f32.mrf.mxu0
  %v3209 = vadd.f32 %v3165, %v3208
  %3210 = vmatmul.bf16.gmra.mxu0 %v1150
  %v3211 = vpop.f32.mrf.mxu0
  %v3212 = vadd.f32 %v3168, %v3211
  %v3213 = vpop.f32.mrf.mxu0
  %v3214 = vadd.f32 %v3170, %v3213
  %3215 = vmatmul.bf16.gmra.mxu0 %v1174
  %v3216 = vpop.f32.mrf.mxu0
  %v3217 = vadd.f32 %v3173, %v3216
  %v3218 = vpop.f32.mrf.mxu0
  %v3219 = vadd.f32 %v3175, %v3218
  %3220 = vmatmul.bf16.gmra.mxu0 %v1198
  %v3221 = vpop.f32.mrf.mxu0
  %v3222 = vadd.f32 %v3178, %v3221
  %v3223 = vpop.f32.mrf.mxu0
  %v3224 = vadd.f32 %v3180, %v3223
  %3225 = vmatmul.bf16.gmra.mxu0 %v1222
  %v3226 = vpop.f32.mrf.mxu0
  %v3227 = vadd.f32 %v3183, %v3226
  %v3228 = vpop.f32.mrf.mxu0
  %v3229 = vadd.f32 %v3185, %v3228
  %3230 = vmatmul.bf16.gmra.mxu0 %v1246
  %v3231 = vpop.f32.mrf.mxu0
  %v3232 = vadd.f32 %v3188, %v3231
  %v3233 = vpop.f32.mrf.mxu0
  %v3234 = vadd.f32 %v3190, %v3233
  %3235 = vdwg.mxu0
  %3236 = vmatpush.bf16.msra.mxu0 %v2319
  %3237 = vmatpush.bf16.msra.mxu0 %v2318
  %3238 = vmatpush.bf16.msra.mxu0 %v2317
  %3239 = vmatpush.bf16.msra.mxu0 %v2316
  %3240 = vmatpush.bf16.msra.mxu0 %v2315
  %3241 = vmatpush.bf16.msra.mxu0 %v2314
  %3242 = vmatpush.bf16.msra.mxu0 %v2313
  %3243 = vmatpush.bf16.msra.mxu0 %v2312
  %3244 = vmatmul.bf16.gmra.mxu0 %v1103
  %v3245 = vpop.f32.mrf.mxu0
  %v3246 = vadd.f32 %v3202, %v3245
  %v3247 = vpop.f32.mrf.mxu0
  %v3248 = vadd.f32 %v3204, %v3247
  %3249 = vmatmul.bf16.gmra.mxu0 %v1127
  %v3250 = vpop.f32.mrf.mxu0
  %v3251 = vadd.f32 %v3207, %v3250
  %v3252 = vpop.f32.mrf.mxu0
  %v3253 = vadd.f32 %v3209, %v3252
  %3254 = vmatmul.bf16.gmra.mxu0 %v1151
  %v3255 = vpop.f32.mrf.mxu0
  %v3256 = vadd.f32 %v3212, %v3255
  %v3257 = vpop.f32.mrf.mxu0
  %v3258 = vadd.f32 %v3214, %v3257
  %3259 = vmatmul.bf16.gmra.mxu0 %v1175
  %v3260 = vpop.f32.mrf.mxu0
  %v3261 = vadd.f32 %v3217, %v3260
  %v3262 = vpop.f32.mrf.mxu0
  %v3263 = vadd.f32 %v3219, %v3262
  %3264 = vmatmul.bf16.gmra.mxu0 %v1199
  %v3265 = vpop.f32.mrf.mxu0
  %v3266 = vadd.f32 %v3222, %v3265
  %v3267 = vpop.f32.mrf.mxu0
  %v3268 = vadd.f32 %v3224, %v3267
  %3269 = vmatmul.bf16.gmra.mxu0 %v1223
  %v3270 = vpop.f32.mrf.mxu0
  %v3271 = vadd.f32 %v3227, %v3270
  %v3272 = vpop.f32.mrf.mxu0
  %v3273 = vadd.f32 %v3229, %v3272
  %3274 = vmatmul.bf16.gmra.mxu0 %v1247
  %v3275 = vpop.f32.mrf.mxu0
  %v3276 = vadd.f32 %v3232, %v3275
  %v3277 = vpop.f32.mrf.mxu0
  %v3278 = vadd.f32 %v3234, %v3277
  %3279 = vdwg.mxu0
  %3280 = vmatpush.bf16.msra.mxu0 %v2327
  %3281 = vmatpush.bf16.msra.mxu0 %v2326
  %3282 = vmatpush.bf16.msra.mxu0 %v2325
  %3283 = vmatpush.bf16.msra.mxu0 %v2324
  %3284 = vmatpush.bf16.msra.mxu0 %v2323
  %3285 = vmatpush.bf16.msra.mxu0 %v2322
  %3286 = vmatpush.bf16.msra.mxu0 %v2321
  %3287 = vmatpush.bf16.msra.mxu0 %v2320
  %3288 = vmatmul.bf16.gmra.mxu0 %v1104
  %v3289 = vpop.f32.mrf.mxu0
  %v3290 = vadd.f32 %v3246, %v3289
  %v3291 = vpop.f32.mrf.mxu0
  %v3292 = vadd.f32 %v3248, %v3291
  %3293 = vmatmul.bf16.gmra.mxu0 %v1128
  %v3294 = vpop.f32.mrf.mxu0
  %v3295 = vadd.f32 %v3251, %v3294
  %v3296 = vpop.f32.mrf.mxu0
  %v3297 = vadd.f32 %v3253, %v3296
  %3298 = vmatmul.bf16.gmra.mxu0 %v1152
  %v3299 = vpop.f32.mrf.mxu0
  %v3300 = vadd.f32 %v3256, %v3299
  %v3301 = vpop.f32.mrf.mxu0
  %v3302 = vadd.f32 %v3258, %v3301
  %3303 = vmatmul.bf16.gmra.mxu0 %v1176
  %v3304 = vpop.f32.mrf.mxu0
  %v3305 = vadd.f32 %v3261, %v3304
  %v3306 = vpop.f32.mrf.mxu0
  %v3307 = vadd.f32 %v3263, %v3306
  %3308 = vmatmul.bf16.gmra.mxu0 %v1200
  %v3309 = vpop.f32.mrf.mxu0
  %v3310 = vadd.f32 %v3266, %v3309
  %v3311 = vpop.f32.mrf.mxu0
  %v3312 = vadd.f32 %v3268, %v3311
  %3313 = vmatmul.bf16.gmra.mxu0 %v1224
  %v3314 = vpop.f32.mrf.mxu0
  %v3315 = vadd.f32 %v3271, %v3314
  %v3316 = vpop.f32.mrf.mxu0
  %v3317 = vadd.f32 %v3273, %v3316
  %3318 = vmatmul.bf16.gmra.mxu0 %v1248
  %v3319 = vpop.f32.mrf.mxu0
  %v3320 = vadd.f32 %v3276, %v3319
  %v3321 = vpop.f32.mrf.mxu0
  %v3322 = vadd.f32 %v3278, %v3321
  %3323 = vdwg.mxu0
  %3324 = vmatpush.bf16.msra.mxu0 %v2335
  %3325 = vmatpush.bf16.msra.mxu0 %v2334
  %3326 = vmatpush.bf16.msra.mxu0 %v2333
  %3327 = vmatpush.bf16.msra.mxu0 %v2332
  %3328 = vmatpush.bf16.msra.mxu0 %v2331
  %3329 = vmatpush.bf16.msra.mxu0 %v2330
  %3330 = vmatpush.bf16.msra.mxu0 %v2329
  %3331 = vmatpush.bf16.msra.mxu0 %v2328
  %3332 = vmatmul.bf16.gmra.mxu0 %v1105
  %v3333 = vpop.f32.mrf.mxu0
  %v3334 = vadd.f32 %v3290, %v3333
  %v3335 = vpop.f32.mrf.mxu0
  %v3336 = vadd.f32 %v3292, %v3335
  %3337 = vmatmul.bf16.gmra.mxu0 %v1129
  %v3338 = vpop.f32.mrf.mxu0
  %v3339 = vadd.f32 %v3295, %v3338
  %v3340 = vpop.f32.mrf.mxu0
  %v3341 = vadd.f32 %v3297, %v3340
  %3342 = vmatmul.bf16.gmra.mxu0 %v1153
  %v3343 = vpop.f32.mrf.mxu0
  %v3344 = vadd.f32 %v3300, %v3343
  %v3345 = vpop.f32.mrf.mxu0
  %v3346 = vadd.f32 %v3302, %v3345
  %3347 = vmatmul.bf16.gmra.mxu0 %v1177
  %v3348 = vpop.f32.mrf.mxu0
  %v3349 = vadd.f32 %v3305, %v3348
  %v3350 = vpop.f32.mrf.mxu0
  %v3351 = vadd.f32 %v3307, %v3350
  %3352 = vmatmul.bf16.gmra.mxu0 %v1201
  %v3353 = vpop.f32.mrf.mxu0
  %v3354 = vadd.f32 %v3310, %v3353
  %v3355 = vpop.f32.mrf.mxu0
  %v3356 = vadd.f32 %v3312, %v3355
  %3357 = vmatmul.bf16.gmra.mxu0 %v1225
  %v3358 = vpop.f32.mrf.mxu0
  %v3359 = vadd.f32 %v3315, %v3358
  %v3360 = vpop.f32.mrf.mxu0
  %v3361 = vadd.f32 %v3317, %v3360
  %3362 = vmatmul.bf16.gmra.mxu0 %v1249
  %v3363 = vpop.f32.mrf.mxu0
  %v3364 = vadd.f32 %v3320, %v3363
  %v3365 = vpop.f32.mrf.mxu0
  %v3366 = vadd.f32 %v3322, %v3365
  %3367 = vdwg.mxu0
  %3368 = vmatpush.bf16.msra.mxu0 %v2343
  %3369 = vmatpush.bf16.msra.mxu0 %v2342
  %3370 = vmatpush.bf16.msra.mxu0 %v2341
  %3371 = vmatpush.bf16.msra.mxu0 %v2340
  %3372 = vmatpush.bf16.msra.mxu0 %v2339
  %3373 = vmatpush.bf16.msra.mxu0 %v2338
  %3374 = vmatpush.bf16.msra.mxu0 %v2337
  %3375 = vmatpush.bf16.msra.mxu0 %v2336
  %3376 = vmatmul.bf16.gmra.mxu0 %v1106
  %v3377 = vpop.f32.mrf.mxu0
  %v3378 = vadd.f32 %v3334, %v3377
  %v3379 = vpop.f32.mrf.mxu0
  %v3380 = vadd.f32 %v3336, %v3379
  %3381 = vmatmul.bf16.gmra.mxu0 %v1130
  %v3382 = vpop.f32.mrf.mxu0
  %v3383 = vadd.f32 %v3339, %v3382
  %v3384 = vpop.f32.mrf.mxu0
  %v3385 = vadd.f32 %v3341, %v3384
  %3386 = vmatmul.bf16.gmra.mxu0 %v1154
  %v3387 = vpop.f32.mrf.mxu0
  %v3388 = vadd.f32 %v3344, %v3387
  %v3389 = vpop.f32.mrf.mxu0
  %v3390 = vadd.f32 %v3346, %v3389
  %3391 = vmatmul.bf16.gmra.mxu0 %v1178
  %v3392 = vpop.f32.mrf.mxu0
  %v3393 = vadd.f32 %v3349, %v3392
  %v3394 = vpop.f32.mrf.mxu0
  %v3395 = vadd.f32 %v3351, %v3394
  %3396 = vmatmul.bf16.gmra.mxu0 %v1202
  %v3397 = vpop.f32.mrf.mxu0
  %v3398 = vadd.f32 %v3354, %v3397
  %v3399 = vpop.f32.mrf.mxu0
  %v3400 = vadd.f32 %v3356, %v3399
  %3401 = vmatmul.bf16.gmra.mxu0 %v1226
  %v3402 = vpop.f32.mrf.mxu0
  %v3403 = vadd.f32 %v3359, %v3402
  %v3404 = vpop.f32.mrf.mxu0
  %v3405 = vadd.f32 %v3361, %v3404
  %3406 = vmatmul.bf16.gmra.mxu0 %v1250
  %v3407 = vpop.f32.mrf.mxu0
  %v3408 = vadd.f32 %v3364, %v3407
  %v3409 = vpop.f32.mrf.mxu0
  %v3410 = vadd.f32 %v3366, %v3409
  %3411 = vdwg.mxu0
  %3412 = vmatpush.bf16.msra.mxu0 %v2351
  %3413 = vmatpush.bf16.msra.mxu0 %v2350
  %3414 = vmatpush.bf16.msra.mxu0 %v2349
  %3415 = vmatpush.bf16.msra.mxu0 %v2348
  %3416 = vmatpush.bf16.msra.mxu0 %v2347
  %3417 = vmatpush.bf16.msra.mxu0 %v2346
  %3418 = vmatpush.bf16.msra.mxu0 %v2345
  %3419 = vmatpush.bf16.msra.mxu0 %v2344
  %3420 = vmatmul.bf16.gmra.mxu0 %v1107
  %v3421 = vpop.f32.mrf.mxu0
  %v3422 = vadd.f32 %v3378, %v3421
  %v3423 = vpop.f32.mrf.mxu0
  %v3424 = vadd.f32 %v3380, %v3423
  %3425 = vmatmul.bf16.gmra.mxu0 %v1131
  %v3426 = vpop.f32.mrf.mxu0
  %v3427 = vadd.f32 %v3383, %v3426
  %v3428 = vpop.f32.mrf.mxu0
  %v3429 = vadd.f32 %v3385, %v3428
  %3430 = vmatmul.bf16.gmra.mxu0 %v1155
  %v3431 = vpop.f32.mrf.mxu0
  %v3432 = vadd.f32 %v3388, %v3431
  %v3433 = vpop.f32.mrf.mxu0
  %v3434 = vadd.f32 %v3390, %v3433
  %3435 = vmatmul.bf16.gmra.mxu0 %v1179
  %v3436 = vpop.f32.mrf.mxu0
  %v3437 = vadd.f32 %v3393, %v3436
  %v3438 = vpop.f32.mrf.mxu0
  %v3439 = vadd.f32 %v3395, %v3438
  %3440 = vmatmul.bf16.gmra.mxu0 %v1203
  %v3441 = vpop.f32.mrf.mxu0
  %v3442 = vadd.f32 %v3398, %v3441
  %v3443 = vpop.f32.mrf.mxu0
  %v3444 = vadd.f32 %v3400, %v3443
  %3445 = vmatmul.bf16.gmra.mxu0 %v1227
  %v3446 = vpop.f32.mrf.mxu0
  %v3447 = vadd.f32 %v3403, %v3446
  %v3448 = vpop.f32.mrf.mxu0
  %v3449 = vadd.f32 %v3405, %v3448
  %3450 = vmatmul.bf16.gmra.mxu0 %v1251
  %v3451 = vpop.f32.mrf.mxu0
  %v3452 = vadd.f32 %v3408, %v3451
  %v3453 = vpop.f32.mrf.mxu0
  %v3454 = vadd.f32 %v3410, %v3453
  %3455 = vdwg.mxu0
  %3456 = vmatpush.bf16.msra.mxu0 %v2359
  %3457 = vmatpush.bf16.msra.mxu0 %v2358
  %3458 = vmatpush.bf16.msra.mxu0 %v2357
  %3459 = vmatpush.bf16.msra.mxu0 %v2356
  %3460 = vmatpush.bf16.msra.mxu0 %v2355
  %3461 = vmatpush.bf16.msra.mxu0 %v2354
  %3462 = vmatpush.bf16.msra.mxu0 %v2353
  %3463 = vmatpush.bf16.msra.mxu0 %v2352
  %3464 = vmatmul.bf16.gmra.mxu0 %v1108
  %v3465 = vpop.f32.mrf.mxu0
  %v3466 = vadd.f32 %v3422, %v3465
  %v3467 = vpop.f32.mrf.mxu0
  %v3468 = vadd.f32 %v3424, %v3467
  %3469 = vmatmul.bf16.gmra.mxu0 %v1132
  %v3470 = vpop.f32.mrf.mxu0
  %v3471 = vadd.f32 %v3427, %v3470
  %v3472 = vpop.f32.mrf.mxu0
  %v3473 = vadd.f32 %v3429, %v3472
  %3474 = vmatmul.bf16.gmra.mxu0 %v1156
  %v3475 = vpop.f32.mrf.mxu0
  %v3476 = vadd.f32 %v3432, %v3475
  %v3477 = vpop.f32.mrf.mxu0
  %v3478 = vadd.f32 %v3434, %v3477
  %3479 = vmatmul.bf16.gmra.mxu0 %v1180
  %v3480 = vpop.f32.mrf.mxu0
  %v3481 = vadd.f32 %v3437, %v3480
  %v3482 = vpop.f32.mrf.mxu0
  %v3483 = vadd.f32 %v3439, %v3482
  %3484 = vmatmul.bf16.gmra.mxu0 %v1204
  %v3485 = vpop.f32.mrf.mxu0
  %v3486 = vadd.f32 %v3442, %v3485
  %v3487 = vpop.f32.mrf.mxu0
  %v3488 = vadd.f32 %v3444, %v3487
  %3489 = vmatmul.bf16.gmra.mxu0 %v1228
  %v3490 = vpop.f32.mrf.mxu0
  %v3491 = vadd.f32 %v3447, %v3490
  %v3492 = vpop.f32.mrf.mxu0
  %v3493 = vadd.f32 %v3449, %v3492
  %3494 = vmatmul.bf16.gmra.mxu0 %v1252
  %v3495 = vpop.f32.mrf.mxu0
  %v3496 = vadd.f32 %v3452, %v3495
  %v3497 = vpop.f32.mrf.mxu0
  %v3498 = vadd.f32 %v3454, %v3497
  %3499 = vdwg.mxu0
  %3500 = vmatpush.bf16.msra.mxu0 %v2367
  %3501 = vmatpush.bf16.msra.mxu0 %v2366
  %3502 = vmatpush.bf16.msra.mxu0 %v2365
  %3503 = vmatpush.bf16.msra.mxu0 %v2364
  %3504 = vmatpush.bf16.msra.mxu0 %v2363
  %3505 = vmatpush.bf16.msra.mxu0 %v2362
  %3506 = vmatpush.bf16.msra.mxu0 %v2361
  %3507 = vmatpush.bf16.msra.mxu0 %v2360
  %3508 = vmatmul.bf16.gmra.mxu0 %v1109
  %v3509 = vpop.f32.mrf.mxu0
  %v3510 = vadd.f32 %v3466, %v3509
  %v3511 = vpop.f32.mrf.mxu0
  %v3512 = vadd.f32 %v3468, %v3511
  %3513 = vmatmul.bf16.gmra.mxu0 %v1133
  %v3514 = vpop.f32.mrf.mxu0
  %v3515 = vadd.f32 %v3471, %v3514
  %v3516 = vpop.f32.mrf.mxu0
  %v3517 = vadd.f32 %v3473, %v3516
  %3518 = vmatmul.bf16.gmra.mxu0 %v1157
  %v3519 = vpop.f32.mrf.mxu0
  %v3520 = vadd.f32 %v3476, %v3519
  %v3521 = vpop.f32.mrf.mxu0
  %v3522 = vadd.f32 %v3478, %v3521
  %3523 = vmatmul.bf16.gmra.mxu0 %v1181
  %v3524 = vpop.f32.mrf.mxu0
  %v3525 = vadd.f32 %v3481, %v3524
  %v3526 = vpop.f32.mrf.mxu0
  %v3527 = vadd.f32 %v3483, %v3526
  %3528 = vmatmul.bf16.gmra.mxu0 %v1205
  %v3529 = vpop.f32.mrf.mxu0
  %v3530 = vadd.f32 %v3486, %v3529
  %v3531 = vpop.f32.mrf.mxu0
  %v3532 = vadd.f32 %v3488, %v3531
  %3533 = vmatmul.bf16.gmra.mxu0 %v1229
  %v3534 = vpop.f32.mrf.mxu0
  %v3535 = vadd.f32 %v3491, %v3534
  %v3536 = vpop.f32.mrf.mxu0
  %v3537 = vadd.f32 %v3493, %v3536
  %3538 = vmatmul.bf16.gmra.mxu0 %v1253
  %v3539 = vpop.f32.mrf.mxu0
  %v3540 = vadd.f32 %v3496, %v3539
  %v3541 = vpop.f32.mrf.mxu0
  %v3542 = vadd.f32 %v3498, %v3541
  %3543 = vdwg.mxu0
  %3544 = vmatpush.bf16.msra.mxu0 %v2375
  %3545 = vmatpush.bf16.msra.mxu0 %v2374
  %3546 = vmatpush.bf16.msra.mxu0 %v2373
  %3547 = vmatpush.bf16.msra.mxu0 %v2372
  %3548 = vmatpush.bf16.msra.mxu0 %v2371
  %3549 = vmatpush.bf16.msra.mxu0 %v2370
  %3550 = vmatpush.bf16.msra.mxu0 %v2369
  %3551 = vmatpush.bf16.msra.mxu0 %v2368
  %3552 = vmatmul.bf16.gmra.mxu0 %v1110
  %v3553 = vpop.f32.mrf.mxu0
  %v3554 = vadd.f32 %v3510, %v3553
  %v3555 = vpop.f32.mrf.mxu0
  %v3556 = vadd.f32 %v3512, %v3555
  %3557 = vmatmul.bf16.gmra.mxu0 %v1134
  %v3558 = vpop.f32.mrf.mxu0
  %v3559 = vadd.f32 %v3515, %v3558
  %v3560 = vpop.f32.mrf.mxu0
  %v3561 = vadd.f32 %v3517, %v3560
  %3562 = vmatmul.bf16.gmra.mxu0 %v1158
  %v3563 = vpop.f32.mrf.mxu0
  %v3564 = vadd.f32 %v3520, %v3563
  %v3565 = vpop.f32.mrf.mxu0
  %v3566 = vadd.f32 %v3522, %v3565
  %3567 = vmatmul.bf16.gmra.mxu0 %v1182
  %v3568 = vpop.f32.mrf.mxu0
  %v3569 = vadd.f32 %v3525, %v3568
  %v3570 = vpop.f32.mrf.mxu0
  %v3571 = vadd.f32 %v3527, %v3570
  %3572 = vmatmul.bf16.gmra.mxu0 %v1206
  %v3573 = vpop.f32.mrf.mxu0
  %v3574 = vadd.f32 %v3530, %v3573
  %v3575 = vpop.f32.mrf.mxu0
  %v3576 = vadd.f32 %v3532, %v3575
  %3577 = vmatmul.bf16.gmra.mxu0 %v1230
  %v3578 = vpop.f32.mrf.mxu0
  %v3579 = vadd.f32 %v3535, %v3578
  %v3580 = vpop.f32.mrf.mxu0
  %v3581 = vadd.f32 %v3537, %v3580
  %3582 = vmatmul.bf16.gmra.mxu0 %v1254
  %v3583 = vpop.f32.mrf.mxu0
  %v3584 = vadd.f32 %v3540, %v3583
  %v3585 = vpop.f32.mrf.mxu0
  %v3586 = vadd.f32 %v3542, %v3585
  %3587 = vdwg.mxu0
  %3588 = vmatpush.bf16.msra.mxu0 %v2383
  %3589 = vmatpush.bf16.msra.mxu0 %v2382
  %3590 = vmatpush.bf16.msra.mxu0 %v2381
  %3591 = vmatpush.bf16.msra.mxu0 %v2380
  %3592 = vmatpush.bf16.msra.mxu0 %v2379
  %3593 = vmatpush.bf16.msra.mxu0 %v2378
  %3594 = vmatpush.bf16.msra.mxu0 %v2377
  %3595 = vmatpush.bf16.msra.mxu0 %v2376
  %3596 = vmatmul.bf16.gmra.mxu0 %v1111
  %v3597 = vpop.f32.mrf.mxu0
  %v3598 = vadd.f32 %v3554, %v3597
  %v3599 = vpop.f32.mrf.mxu0
  %v3600 = vadd.f32 %v3556, %v3599
  %3601 = vmatmul.bf16.gmra.mxu0 %v1135
  %v3602 = vpop.f32.mrf.mxu0
  %v3603 = vadd.f32 %v3559, %v3602
  %v3604 = vpop.f32.mrf.mxu0
  %v3605 = vadd.f32 %v3561, %v3604
  %3606 = vmatmul.bf16.gmra.mxu0 %v1159
  %v3607 = vpop.f32.mrf.mxu0
  %v3608 = vadd.f32 %v3564, %v3607
  %v3609 = vpop.f32.mrf.mxu0
  %v3610 = vadd.f32 %v3566, %v3609
  %3611 = vmatmul.bf16.gmra.mxu0 %v1183
  %v3612 = vpop.f32.mrf.mxu0
  %v3613 = vadd.f32 %v3569, %v3612
  %v3614 = vpop.f32.mrf.mxu0
  %v3615 = vadd.f32 %v3571, %v3614
  %3616 = vmatmul.bf16.gmra.mxu0 %v1207
  %v3617 = vpop.f32.mrf.mxu0
  %v3618 = vadd.f32 %v3574, %v3617
  %v3619 = vpop.f32.mrf.mxu0
  %v3620 = vadd.f32 %v3576, %v3619
  %3621 = vmatmul.bf16.gmra.mxu0 %v1231
  %v3622 = vpop.f32.mrf.mxu0
  %v3623 = vadd.f32 %v3579, %v3622
  %v3624 = vpop.f32.mrf.mxu0
  %v3625 = vadd.f32 %v3581, %v3624
  %3626 = vmatmul.bf16.gmra.mxu0 %v1255
  %v3627 = vpop.f32.mrf.mxu0
  %v3628 = vadd.f32 %v3584, %v3627
  %v3629 = vpop.f32.mrf.mxu0
  %v3630 = vadd.f32 %v3586, %v3629
  %3631 = vdwg.mxu0
  %vm3632 = vcmp.gt.f32.partialorder %v3598, 0.0
  %vm3633 = vcmp.gt.f32.partialorder %v3600, 0.0
  %vm3634 = vcmp.gt.f32.partialorder %v3603, 0.0
  %vm3635 = vcmp.gt.f32.partialorder %v3605, 0.0
  %vm3636 = vcmp.gt.f32.partialorder %v3608, 0.0
  %vm3637 = vcmp.gt.f32.partialorder %v3610, 0.0
  %vm3638 = vcmp.gt.f32.partialorder %v3613, 0.0
  %vm3639 = vcmp.gt.f32.partialorder %v3615, 0.0
  %vm3640 = vcmp.gt.f32.partialorder %v3618, 0.0
  %vm3641 = vcmp.gt.f32.partialorder %v3620, 0.0
  %vm3642 = vcmp.gt.f32.partialorder %v3623, 0.0
  %vm3643 = vcmp.gt.f32.partialorder %v3625, 0.0
  %vm3644 = vcmp.gt.f32.partialorder %v3628, 0.0
  %vm3645 = vcmp.gt.f32.partialorder %v3630, 0.0
  %v3646 = vmul.f32 %v3598, 0.01
  %v3647 = vmul.f32 %v3600, 0.01
  %v3648 = vmul.f32 %v3603, 0.01
  %v3649 = vmul.f32 %v3605, 0.01
  %v3650 = vmul.f32 %v3608, 0.01
  %v3651 = vmul.f32 %v3610, 0.01
  %v3652 = vmul.f32 %v3613, 0.01
  %v3653 = vmul.f32 %v3615, 0.01
  %v3654 = vmul.f32 %v3618, 0.01
  %v3655 = vmul.f32 %v3620, 0.01
  %v3656 = vmul.f32 %v3623, 0.01
  %v3657 = vmul.f32 %v3625, 0.01
  %v3658 = vmul.f32 %v3628, 0.01
  %v3659 = vmul.f32 %v3630, 0.01
  %v3660 = vsel %vm3632, %v3598, %v3646
  %v3661 = vsel %vm3633, %v3600, %v3647
  %v3662 = vsel %vm3634, %v3603, %v3648
  %v3663 = vsel %vm3635, %v3605, %v3649
  %v3664 = vsel %vm3636, %v3608, %v3650
  %v3665 = vsel %vm3637, %v3610, %v3651
  %v3666 = vsel %vm3638, %v3613, %v3652
  %v3667 = vsel %vm3639, %v3615, %v3653
  %v3668 = vsel %vm3640, %v3618, %v3654
  %v3669 = vsel %vm3641, %v3620, %v3655
  %v3670 = vsel %vm3642, %v3623, %v3656
  %v3671 = vsel %vm3643, %v3625, %v3657
  %v3672 = vsel %vm3644, %v3628, %v3658
  %v3673 = vsel %vm3645, %v3630, %v3659
  %v3674 = vpack.c.bf16 %v3661, %v3660
  %v3675 = vpack.c.bf16 %v3663, %v3662
  %v3676 = vpack.c.bf16 %v3665, %v3664
  %v3677 = vpack.c.bf16 %v3667, %v3666
  %v3678 = vpack.c.bf16 %v3669, %v3668
  %v3679 = vpack.c.bf16 %v3671, %v3670
  %v3680 = vpack.c.bf16 %v3673, %v3672
  %v3681 = vld [vmem:[%s3] sm:$0xf]
  %v3682 = vld [vmem:[%s3 + $0x4] sm:$0xf]
  %v3683 = vld [vmem:[%s3 + $0x8] sm:$0xf]
  %v3684 = vld [vmem:[%s3 + $0xc] sm:$0xf]
  %v3685 = vld [vmem:[%s3 + $0x10] sm:$0xf]
  %v3686 = vld [vmem:[%s3 + $0x14] sm:$0xf]
  %v3687 = vld [vmem:[%s3 + $0x18] sm:$0xf]
  %v3688 = vld [vmem:[%s3 + $0x1c] sm:$0xf]
  %v3689 = vld [vmem:[%s3 + $0x20] sm:$0xf]
  %v3690 = vld [vmem:[%s3 + $0x24] sm:$0xf]
  %v3691 = vld [vmem:[%s3 + $0x28] sm:$0xf]
  %v3692 = vld [vmem:[%s3 + $0x2c] sm:$0xf]
  %v3693 = vld [vmem:[%s3 + $0x30] sm:$0xf]
  %v3694 = vld [vmem:[%s3 + $0x34] sm:$0xf]
  %v3695 = vld [vmem:[%s3 + $0x38] sm:$0xf]
  %v3696 = vld [vmem:[%s3 + $0x3c] sm:$0xf]
  %v3697 = vld [vmem:[%s4] sm:$0x1]
  %v3699 = vperm.slane %v3697, 0
  %v3717 = vunpack.c.l.b16 %v3681
  %v3718 = vunpack.c.l.b16 %v3682
  %v3719 = vunpack.c.l.b16 %v3683
  %v3720 = vunpack.c.l.b16 %v3684
  %v3721 = vunpack.c.l.b16 %v3685
  %v3722 = vunpack.c.l.b16 %v3686
  %v3723 = vunpack.c.l.b16 %v3687
  %v3724 = vunpack.c.l.b16 %v3688
  %v3725 = vunpack.c.l.b16 %v3689
  %v3726 = vunpack.c.l.b16 %v3690
  %v3727 = vunpack.c.l.b16 %v3691
  %v3728 = vunpack.c.l.b16 %v3692
  %v3729 = vunpack.c.l.b16 %v3693
  %v3730 = vunpack.c.l.b16 %v3694
  %v3731 = vunpack.c.l.b16 %v3695
  %v3732 = vunpack.c.l.b16 %v3696
  %v3733 = vpack.c.b16 %v3718, %v3717
  %v3734 = vpack.c.b16 %v3720, %v3719
  %v3735 = vpack.c.b16 %v3722, %v3721
  %v3736 = vpack.c.b16 %v3724, %v3723
  %v3737 = vpack.c.b16 %v3726, %v3725
  %v3738 = vpack.c.b16 %v3728, %v3727
  %v3739 = vpack.c.b16 %v3730, %v3729
  %v3740 = vpack.c.b16 %v3732, %v3731
  %3749 = vmatpush.bf16.msra.mxu0 %v3740
  %3750 = vmatpush.bf16.msra.mxu0 %v3739
  %3751 = vmatpush.bf16.msra.mxu0 %v3738
  %3752 = vmatpush.bf16.msra.mxu0 %v3737
  %3753 = vmatpush.bf16.msra.mxu0 %v3736
  %3754 = vmatpush.bf16.msra.mxu0 %v3735
  %3755 = vmatpush.bf16.msra.mxu0 %v3734
  %3756 = vmatpush.bf16.msra.mxu0 %v3733
  %3757 = vmatmul.bf16.gmra.mxu0 %v3674
  %v3758 = vpop.f32.mrf.mxu0
  %v3759 = vadd.f32 %v3699, %v3758
  %v3760 = vpop.f32.mrf.mxu0
  %v3761 = vadd.f32 %v3699, %v3760
  %3762 = vmatmul.bf16.gmra.mxu0 %v3675
  %v3763 = vpop.f32.mrf.mxu0
  %v3764 = vadd.f32 %v3699, %v3763
  %v3765 = vpop.f32.mrf.mxu0
  %v3766 = vadd.f32 %v3699, %v3765
  %3767 = vmatmul.bf16.gmra.mxu0 %v3676
  %v3768 = vpop.f32.mrf.mxu0
  %v3769 = vadd.f32 %v3699, %v3768
  %v3770 = vpop.f32.mrf.mxu0
  %v3771 = vadd.f32 %v3699, %v3770
  %3772 = vmatmul.bf16.gmra.mxu0 %v3677
  %v3773 = vpop.f32.mrf.mxu0
  %v3774 = vadd.f32 %v3699, %v3773
  %v3775 = vpop.f32.mrf.mxu0
  %v3776 = vadd.f32 %v3699, %v3775
  %3777 = vmatmul.bf16.gmra.mxu0 %v3678
  %v3778 = vpop.f32.mrf.mxu0
  %v3779 = vadd.f32 %v3699, %v3778
  %v3780 = vpop.f32.mrf.mxu0
  %v3781 = vadd.f32 %v3699, %v3780
  %3782 = vmatmul.bf16.gmra.mxu0 %v3679
  %v3783 = vpop.f32.mrf.mxu0
  %v3784 = vadd.f32 %v3699, %v3783
  %v3785 = vpop.f32.mrf.mxu0
  %v3786 = vadd.f32 %v3699, %v3785
  %3787 = vmatmul.bf16.gmra.mxu0 %v3680
  %v3788 = vpop.f32.mrf.mxu0
  %v3789 = vadd.f32 %v3699, %v3788
  %v3790 = vpop.f32.mrf.mxu0
  %v3791 = vadd.f32 %v3699, %v3790
  %3792 = vdwg.mxu0
  %3793 = vst [vmem:[%s7] sm:$0xff] %v3759
  %3794 = vst [vmem:[%s7 + $0x8] sm:$0xff] %v3761
  %3795 = vst [vmem:[%s7 + $0x10] sm:$0xff] %v3764
  %3796 = vst [vmem:[%s7 + $0x18] sm:$0xff] %v3766
  %3797 = vst [vmem:[%s7 + $0x20] sm:$0xff] %v3769
  %3798 = vst [vmem:[%s7 + $0x28] sm:$0xff] %v3771
  %3799 = vst [vmem:[%s7 + $0x30] sm:$0xff] %v3774
  %3800 = vst [vmem:[%s7 + $0x38] sm:$0xff] %v3776
  %3801 = vst [vmem:[%s7 + $0x40] sm:$0xff] %v3779
  %3802 = vst [vmem:[%s7 + $0x48] sm:$0xff] %v3781
  %3803 = vst [vmem:[%s7 + $0x50] sm:$0xff] %v3784
  %3804 = vst [vmem:[%s7 + $0x58] sm:$0xff] %v3786
  %3805 = vst [vmem:[%s7 + $0x60] sm:$0xff] %v3789
  %3806 = vst [vmem:[%s7 + $0x68] sm:$0xff] %v3791
  %v3807 = vld [vmem:[%s5] sm:$0xff]
  %v3808 = vld [vmem:[%s5 + $0x8] sm:$0xff]
  %v3809 = vld [vmem:[%s5 + $0x10] sm:$0xff]
  %v3810 = vld [vmem:[%s5 + $0x18] sm:$0xff]
  %s3811 = scalar_lea.vmem %s5, 32
  %v3812 = vld [vmem:[%s3811] sm:$0xff]
  %v3813 = vld [vmem:[%s3811 + $0x8] sm:$0xff]
  %v3814 = vld [vmem:[%s3811 + $0x10] sm:$0xff]
  %v3815 = vld [vmem:[%s3811 + $0x18] sm:$0xff]
  %s3816 = scalar_lea.vmem %s5, 64
  %v3817 = vld [vmem:[%s3816] sm:$0xff]
  %v3818 = vld [vmem:[%s3816 + $0x8] sm:$0xff]
  %v3819 = vld [vmem:[%s3816 + $0x10] sm:$0xff]
  %v3820 = vld [vmem:[%s3816 + $0x18] sm:$0xff]
  %s3821 = scalar_lea.vmem %s5, 96
  %v3822 = vld [vmem:[%s3821] sm:$0xff]
  %v3823 = vld [vmem:[%s3821 + $0x8] sm:$0xff]
  %v3824 = vld [vmem:[%s3821 + $0x10] sm:$0xff]
  %v3825 = vld [vmem:[%s3821 + $0x18] sm:$0xff]
  %v3826 = vld [vmem:[%s6] sm:$0xff]
  %3828 = vset.pattern.permute.xlu0 0
  %3829 = vperm.xlu0 %3828, %v3826
  %v3830 = vpop.permute.xlu0 %3829
  %v3832 = vmax.f32 %v3807, %v3830
  %v3833 = vmax.f32 %v3808, %v3830
  %v3834 = vmax.f32 %v3809, %v3830
  %v3835 = vmax.f32 %v3810, %v3830
  %3836 = vset.pattern.permute.xlu0 1
  %3837 = vperm.xlu0 %3836, %v3826
  %v3838 = vpop.permute.xlu0 %3837
  %v3840 = vmax.f32 %v3812, %v3838
  %v3841 = vmax.f32 %v3813, %v3838
  %v3842 = vmax.f32 %v3814, %v3838
  %v3843 = vmax.f32 %v3815, %v3838
  %3844 = vset.pattern.permute.xlu0 2
  %3845 = vperm.xlu0 %3844, %v3826
  %v3846 = vpop.permute.xlu0 %3845
  %v3848 = vmin.f32 %v3817, %v3846
  %v3849 = vmin.f32 %v3818, %v3846
  %v3850 = vmin.f32 %v3819, %v3846
  %v3851 = vmin.f32 %v3820, %v3846
  %3852 = vset.pattern.permute.xlu0 3
  %3853 = vperm.xlu0 %3852, %v3826
  %v3854 = vpop.permute.xlu0 %3853
  %v3856 = vmin.f32 %v3822, %v3854
  %v3857 = vmin.f32 %v3823, %v3854
  %v3858 = vmin.f32 %v3824, %v3854
  %v3859 = vmin.f32 %v3825, %v3854
  %v3860 = vsub.f32 %v3848, %v3832
  %v3861 = vsub.f32 %v3849, %v3833
  %v3862 = vsub.f32 %v3850, %v3834
  %v3863 = vsub.f32 %v3851, %v3835
  %v3864 = vmax.f32 %v3860, 0.0
  %v3865 = vmax.f32 %v3861, 0.0
  %v3866 = vmax.f32 %v3862, 0.0
  %v3867 = vmax.f32 %v3863, 0.0
  %v3868 = vsub.f32 %v3856, %v3840
  %v3869 = vsub.f32 %v3857, %v3841
  %v3870 = vsub.f32 %v3858, %v3842
  %v3871 = vsub.f32 %v3859, %v3843
  %v3872 = vmax.f32 %v3868, 0.0
  %v3873 = vmax.f32 %v3869, 0.0
  %v3874 = vmax.f32 %v3870, 0.0
  %v3875 = vmax.f32 %v3871, 0.0
  %v3876 = vmul.f32 %v3864, %v3872
  %v3877 = vmul.f32 %v3865, %v3873
  %v3878 = vmul.f32 %v3866, %v3874
  %v3879 = vmul.f32 %v3867, %v3875
  %v3880 = vsub.f32 %v3817, %v3807
  %v3881 = vsub.f32 %v3818, %v3808
  %v3882 = vsub.f32 %v3819, %v3809
  %v3883 = vsub.f32 %v3820, %v3810
  %v3884 = vsub.f32 %v3822, %v3812
  %v3885 = vsub.f32 %v3823, %v3813
  %v3886 = vsub.f32 %v3824, %v3814
  %v3887 = vsub.f32 %v3825, %v3815
  %v3888 = vmul.f32 %v3880, %v3884
  %v3889 = vmul.f32 %v3881, %v3885
  %v3890 = vmul.f32 %v3882, %v3886
  %v3891 = vmul.f32 %v3883, %v3887
  %3892 = vrot.lane.b32.xlu0 %v3826, 2
  %v3893 = vpop.permute.xlu0 %3892
  %v3895 = vsub.f32 %v3826, %v3893
  %3897 = vrot.lane.b32.xlu0 %v3895, 127
  %v3898 = vpop.permute.xlu0 %3897
  %v3900 = vmul.f32 %v3895, %v3898
  %3902 = vset.pattern.permute.xlu0 2
  %3903 = vperm.xlu0 %3902, %v3900
  %v3904 = vpop.permute.xlu0 %3903
  %v3906 = vadd.f32 %v3888, %v3904
  %v3907 = vadd.f32 %v3889, %v3904
  %v3908 = vadd.f32 %v3890, %v3904
  %v3909 = vadd.f32 %v3891, %v3904
  %v3910 = vsub.f32 %v3906, %v3876
  %v3911 = vsub.f32 %v3907, %v3877
  %v3912 = vsub.f32 %v3908, %v3878
  %v3913 = vsub.f32 %v3909, %v3879
  %v3914 = vadd.f32 %v3910, 1e-08
  %v3915 = vadd.f32 %v3911, 1e-08
  %v3916 = vadd.f32 %v3912, 1e-08
  %v3917 = vadd.f32 %v3913, 1e-08
  %v3918 = vrcp.pop %v3914
  %v3919 = vmul.f32 %v3914, %v3918
  %v3920 = vsub.f32 1.0, %v3919
  %v3921 = vmul.f32 %v3918, %v3920
  %v3922 = vadd.f32 %v3918, %v3921
  %vm3923 = vweird.f32 %v3914
  %vm3924 = vweird.f32 %v3918
  %vm3925 = vmor %vm3923, %vm3924
  %v3926 = vsel %vm3925, %v3918, %v3922
  %v3927 = vand.u32 2147483647, %v3914
  %vm3928 = vcmp.eq.f32.partialorder %v3927, 8.507059e+37
  %v3929 = vand.u32 %v3914, 2147483648
  %v3930 = vor.u32 1.1754944e-38, %v3929
  %v3931 = vsel %vm3928, %v3930, %v3926
  %v3932 = vmul.f32 %v3876, %v3931
  %v3933 = vrcp.pop %v3915
  %v3934 = vmul.f32 %v3915, %v3933
  %v3935 = vsub.f32 1.0, %v3934
  %v3936 = vmul.f32 %v3933, %v3935
  %v3937 = vadd.f32 %v3933, %v3936
  %vm3938 = vweird.f32 %v3915
  %vm3939 = vweird.f32 %v3933
  %vm3940 = vmor %vm3938, %vm3939
  %v3941 = vsel %vm3940, %v3933, %v3937
  %v3942 = vand.u32 2147483647, %v3915
  %vm3943 = vcmp.eq.f32.partialorder %v3942, 8.507059e+37
  %v3944 = vand.u32 %v3915, 2147483648
  %v3945 = vor.u32 1.1754944e-38, %v3944
  %v3946 = vsel %vm3943, %v3945, %v3941
  %v3947 = vmul.f32 %v3877, %v3946
  %v3948 = vrcp.pop %v3916
  %v3949 = vmul.f32 %v3916, %v3948
  %v3950 = vsub.f32 1.0, %v3949
  %v3951 = vmul.f32 %v3948, %v3950
  %v3952 = vadd.f32 %v3948, %v3951
  %vm3953 = vweird.f32 %v3916
  %vm3954 = vweird.f32 %v3948
  %vm3955 = vmor %vm3953, %vm3954
  %v3956 = vsel %vm3955, %v3948, %v3952
  %v3957 = vand.u32 2147483647, %v3916
  %vm3958 = vcmp.eq.f32.partialorder %v3957, 8.507059e+37
  %v3959 = vand.u32 %v3916, 2147483648
  %v3960 = vor.u32 1.1754944e-38, %v3959
  %v3961 = vsel %vm3958, %v3960, %v3956
  %v3962 = vmul.f32 %v3878, %v3961
  %v3963 = vrcp.pop %v3917
  %v3964 = vmul.f32 %v3917, %v3963
  %v3965 = vsub.f32 1.0, %v3964
  %v3966 = vmul.f32 %v3963, %v3965
  %v3967 = vadd.f32 %v3963, %v3966
  %vm3968 = vweird.f32 %v3917
  %vm3969 = vweird.f32 %v3963
  %vm3970 = vmor %vm3968, %vm3969
  %v3971 = vsel %vm3970, %v3963, %v3967
  %v3972 = vand.u32 2147483647, %v3917
  %vm3973 = vcmp.eq.f32.partialorder %v3972, 8.507059e+37
  %v3974 = vand.u32 %v3917, 2147483648
  %v3975 = vor.u32 1.1754944e-38, %v3974
  %v3976 = vsel %vm3973, %v3975, %v3971
  %v3977 = vmul.f32 %v3879, %v3976
  %3978 = vst [vmem:[%s8] sm:$0xff] %v3932
  %3979 = vst [vmem:[%s8 + $0x8] sm:$0xff] %v3947
  %3980 = vst [vmem:[%s8 + $0x10] sm:$0xff] %v3962
  %3981 = vst [vmem:[%s8 + $0x18] sm:$0xff] %v3977
  // Predicated region
  $region30: #{single_stage_detector_forward.1} parent=0 // pred_check
    _
  $region31: #{single_stage_detector_forward.1} parent=0 // pred_check_branch
    %3983 = sbr.rel (0) target = $region33
  $region32: #{single_stage_detector_forward.1} parent=0 // pred_region
    _
  $region33: #{single_stage_detector_forward.1} parent=0 // pred_fallthru
    _
  // Predicated region
  $region34: #{single_stage_detector_forward.1} parent=0 // pred_check
    _
  $region35: #{single_stage_detector_forward.1} parent=0 // pred_check_branch
    %3985 = sbr.rel (0) target = $region37
  $region36: #{single_stage_detector_forward.1} parent=0 // pred_region
    _
  $region37: #{single_stage_detector_forward.1} parent=0 // pred_fallthru
    _
  // Predicated region
  $region38: #{single_stage_detector_forward.1} parent=0 // pred_check
    _
  $region39: #{single_stage_detector_forward.1} parent=0 // pred_check_branch
    %3987 = sbr.rel (0) target = $region41
  $region40: #{single_stage_detector_forward.1} parent=0 // pred_region
    _
  $region41: #{single_stage_detector_forward.1} parent=0 // pred_fallthru
    _
  // Predicated region
  $region42: #{single_stage_detector_forward.1} parent=0 // pred_check
    _
  $region43: #{single_stage_detector_forward.1} parent=0 // pred_check_branch
    %3989 = sbr.rel (0) target = $region45
  $region44: #{single_stage_detector_forward.1} parent=0 // pred_region
    _
  $region45: #{single_stage_detector_forward.1} parent=0 // pred_fallthru
    _

</llo_original>
